<compile_context>
chip_gen: v5e
topology: v5e:2x2
jax: 0.10.0
libtpu: 0.0.40
codegen_flags: <defaults>
</compile_context>

<pallas_src>
import math

import jax
import jax.numpy as jnp
from jax import lax
from jax.experimental import pallas as pl
from jax.experimental.pallas import tpu as pltpu


def _round_up(x, m):
    return ((x + m - 1) // m) * m


# ----------------------------- Pallas kernel --------------------------------
def make_fused_convnet_kernel(layer_cfgs):
    """Kernel computing the whole Conv2d+ReLU stack for one batch element.

    layer_cfgs: list of dicts with static ints KH, KW, Cin, Cout, Wg, L_out.
    The activation is a flattened 2-D (row = y*Wg + x, col = channel) array;
    per-tap shifted row slices implement im2col with no reshape/concat.
    """
    n_layers = len(layer_cfgs)

    def kernel(*refs):
        # refs = (x_ref, w0_ref, b0_ref, w1_ref, b1_ref, ..., o_ref)
        x_ref = refs[0]
        o_ref = refs[1 + 2 * n_layers]

        a = x_ref[...]                                   # (H*W, Cin0), compute dtype
        for l, cfg in enumerate(layer_cfgs):
            w_ref = refs[1 + 2 * l]                      # (KH*KW, Cin, NPAD), zero-padded cols
            b_ref = refs[2 + 2 * l]                      # (1, NPAD), zero-padded
            KH, KW, Cin = cfg["KH"], cfg["KW"], cfg["Cin"]
            Wg, L = cfg["Wg"], cfg["L_out"]
            npad = b_ref.shape[-1]

            # conv-as-matmul: accumulate KH*KW per-tap MXU dots in f32.
            acc = jnp.zeros((L, npad), jnp.float32)
            for t in range(KH * KW):
                i, j = t // KW, t % KW
                start = i * Wg + j                       # static row offset
                lhs = a[start:start + L, :Cin].astype(w_ref.dtype)
                acc = acc + jnp.dot(lhs, w_ref[t],
                                    preferred_element_type=jnp.float32)
            acc = jnp.maximum(acc + b_ref[...], 0.0)     # bias + ReLU in f32

            if l + 1 < n_layers:
                a = acc                                  # stays in VMEM / vregs
            else:
                o_ref[...] = acc.astype(o_ref.dtype)     # lane-dense (L, 128) store

    return kernel


# ------------------------- one-time parameter prep ---------------------------
def prepare_pallas_params(params, compute_dtype=jnp.float32):
    """Hoisted weight prep: (Cout,Cin,KH,KW) -> per-tap (KH*KW, Cin, NPAD) slabs
    with the output-channel axis zero-padded to a lane-dense multiple of 128,
    plus (1, NPAD) zero-padded bias.  Returns (prepped_list, npad)."""
    npad = max(128, _round_up(max(int(w.shape[0]) for w, _ in params), 128))
    prepped = []
    for w, b in params:
        Cout, Cin, KH, KW = w.shape
        # (Cout, Cin, KH, KW) -> (KH, KW, Cin, Cout) -> (KH*KW, Cin, Cout);
        # tap index t = i*KW + j matches the in-kernel loop ordering.
        w_taps = jnp.transpose(w, (2, 3, 1, 0)).reshape(KH * KW, Cin, Cout)
        w_pad = jnp.zeros((KH * KW, Cin, npad), compute_dtype)
        w_pad = w_pad.at[:, :, :Cout].set(w_taps.astype(compute_dtype))
        b_pad = jnp.zeros((1, npad), jnp.float32)
        b_pad = b_pad.at[:, :Cout].set(b.reshape(1, Cout).astype(jnp.float32))
        prepped.append((w_pad, b_pad, (KH, KW, Cin, Cout)))
    return prepped, npad


# --------------------------- ConvNet2d forward -------------------------------
def convnet2d_forward(x_nchw, prepped, npad, compute_dtype=jnp.float32):
    """Fused forward of the Conv2d+ReLU stack.  x_nchw: (B, Cin, H, W) -> NCHW out."""
    B, Cin0, H, W = x_nchw.shape
    # NCHW -> NHWC -> flattened rows (y*W + x, C): channels on the lane axis.
    x = jnp.transpose(x_nchw, (0, 2, 3, 1)).reshape(B, H * W, Cin0)
    x = x.astype(compute_dtype)

    # Static per-layer bookkeeping on the fixed-width (Wg = W) row-major grid.
    layer_cfgs = []
    h, w_, c, L_in = H, W, Cin0, H * W
    for (_, _, (KH, KW, Cin, Cout)) in prepped:
        assert Cin == c, "channel mismatch between activation and conv weight"
        Ho, Wo = h - KH + 1, w_ - KW + 1
        assert Ho > 0 and Wo > 0, "kernel larger than input"
        L_out = (Ho - 1) * W + Wo            # rows actually needed downstream
        layer_cfgs.append(dict(KH=KH, KW=KW, Cin=Cin, Cout=Cout,
                               Wg=W, L_in=L_in, L_out=L_out))
        h, w_, c, L_in = Ho, Wo, Cout, L_out
    Ho_last, Wo_last, Cout_last, L_last = h, w_, c, L_in

    kernel = make_fused_convnet_kernel(layer_cfgs)

    in_specs = [pl.BlockSpec((None, H * W, Cin0), lambda b: (b, 0, 0))]
    flat_inputs = [x]
    for (w_pad, b_pad, _) in prepped:
        # Constant index_map: weight/bias blocks stay VMEM-resident across steps.
        in_specs.append(pl.BlockSpec(w_pad.shape, lambda b: (0, 0, 0)))
        in_specs.append(pl.BlockSpec(b_pad.shape, lambda b: (0, 0)))
        flat_inputs += [w_pad, b_pad]

    out = pl.pallas_call(
        kernel,
        out_shape=jax.ShapeDtypeStruct((B, L_last, npad), jnp.float32),
        grid=(B,),
        in_specs=in_specs,
        out_specs=pl.BlockSpec((None, L_last, npad), lambda b: (b, 0, 0)),
        compiler_params=pltpu.CompilerParams(
            dimension_semantics=("parallel",),          # megacore shards batch
            vmem_limit_bytes=32 * 1024 * 1024),         # explicit; safe on v5e/v6e/v7x
    )(*flat_inputs)

    # Drop zero pad channels, unpack the row-major grid, discard garbage columns.
    out = out[:, :, :Cout_last]                                   # (B, L_last, Cout)
    out = jnp.pad(out, ((0, 0), (0, Ho_last * W - L_last), (0, 0)))
    out = out.reshape(B, Ho_last, W, Cout_last)[:, :, :Wo_last, :]
    return jnp.transpose(out, (0, 3, 1, 2)).astype(x_nchw.dtype)  # -> NCHW


# ------------------------ deterministic param init ---------------------------
def init_convnet2d_params(key, in_channels, hidden_channels, kernel_sizes):
    assert len(hidden_channels) == len(kernel_sizes)
    params = []
    cin = in_channels
    for cout, k in zip(hidden_channels, kernel_sizes):
        key, kw_key, kb_key = jax.random.split(key, 3)
        fan_in = cin * k * k
        bound = 1.0 / math.sqrt(fan_in)           # PyTorch-style uniform bound
        w = jax.random.uniform(kw_key, (cout, cin, k, k), jnp.float32,
                               minval=-bound, maxval=bound)
        b = jax.random.uniform(kb_key, (cout,), jnp.float32,
                               minval=-bound, maxval=bound)
        params.append((w, b))
        cin = cout
    return params


# ------------------------------- reference -----------------------------------
def reference_forward(x_nchw, params):
    x = x_nchw
    for w, b in params:
        x = lax.conv_general_dilated(
            x, w, window_strides=(1, 1), padding="VALID",
            dimension_numbers=("NCHW", "OIHW", "NCHW"))
        x = jnp.maximum(x + b.reshape(1, -1, 1, 1), 0.0)
    return x


if __name__ == "__main__":
    key = jax.random.PRNGKey(0)
    k_x, k_p = jax.random.split(key)

    # ConvNet2d(in_channels=4, hidden_channels=[8, 16], kernel_sizes=[3, 3])
    in_channels = 4
    hidden_channels = [8, 16]
    kernel_sizes = [3, 3]

    x = jax.random.normal(k_x, (2, in_channels, 16, 16), jnp.float32)  # NCHW
    params = init_convnet2d_params(k_p, in_channels, hidden_channels, kernel_sizes)

    # One-time weight reshape / lane-padding (hoisted out of the forward pass).
    prepped, npad = prepare_pallas_params(params)

    out = convnet2d_forward(x, prepped, npad)
    out = jax.block_until_ready(out)

    ref = reference_forward(x, params)
    assert out.shape == ref.shape == (2, 16, 12, 12), out.shape
    assert jnp.allclose(out, ref, atol=1e-4, rtol=1e-4), "mismatch vs reference"

    print("KERNEL_OK")
</pallas_src>

<mosaic_0001>
module attributes {stable_mosaic.version = 11 : i64} {
  func.func @kernel(%arg0: i32, %arg1: memref<1x256x4xf32, #tpu.memory_space<vmem>>, %arg2: memref<9x4x128xf32, #tpu.memory_space<vmem>>, %arg3: memref<1x128xf32, #tpu.memory_space<vmem>>, %arg4: memref<9x8x128xf32, #tpu.memory_space<vmem>>, %arg5: memref<1x128xf32, #tpu.memory_space<vmem>>, %arg6: memref<1x188x128xf32, #tpu.memory_space<vmem>>) attributes {dimension_semantics = [#tpu.dimension_semantics<parallel>], iteration_bounds = array<i64: 2>, scalar_prefetch = 0 : i64, scratch_operands = 0 : i64, tpu.core_type = #tpu.core_type<tc>, window_params = [{transform_indices = @transform_0, window_bounds = array<i64: 1, 256, 4>}, {pipeline_mode = #tpu.pipeline_mode<synchronous>, transform_indices = @transform_1, window_bounds = array<i64: 9, 4, 128>}, {pipeline_mode = #tpu.pipeline_mode<synchronous>, transform_indices = @transform_2, window_bounds = array<i64: 1, 128>}, {pipeline_mode = #tpu.pipeline_mode<synchronous>, transform_indices = @transform_3, window_bounds = array<i64: 9, 8, 128>}, {pipeline_mode = #tpu.pipeline_mode<synchronous>, transform_indices = @transform_4, window_bounds = array<i64: 1, 128>}, {transform_indices = @transform_5, window_bounds = array<i64: 1, 188, 128>}]} {
    %c0 = arith.constant 0 : index
    %c0_0 = arith.constant 0 : index
    %c0_1 = arith.constant 0 : index
    %0 = vector.load %arg1[%c0, %c0_0, %c0_1] : memref<1x256x4xf32, #tpu.memory_space<vmem>>, vector<1x256x4xf32>
    %1 = vector.shape_cast %0 : vector<1x256x4xf32> to vector<256x4xf32>
    %cst = arith.constant 0.000000e+00 : f32
    %2 = vector.broadcast %cst : f32 to vector<222x128xf32>
    %3 = vector.extract_strided_slice %1 {offsets = [0, 0], sizes = [222, 4], strides = [1, 1]} : vector<256x4xf32> to vector<222x4xf32>
    %c0_2 = arith.constant 0 : index
    %c0_3 = arith.constant 0 : index
    %c0_4 = arith.constant 0 : index
    %4 = vector.load %arg2[%c0_2, %c0_3, %c0_4] : memref<9x4x128xf32, #tpu.memory_space<vmem>>, vector<1x4x128xf32>
    %5 = vector.shape_cast %4 : vector<1x4x128xf32> to vector<4x128xf32>
    %cst_5 = arith.constant dense<0.000000e+00> : vector<222x128xf32>
    %6 = tpu.matmul %3, %5, %cst_5 {dimension_numbers = #tpu.dot_dimension_numbers<[1], [0], [0], [1], [0, 0, 1, 1], [], []>} : vector<222x4xf32>, vector<4x128xf32>, vector<222x128xf32> -> vector<222x128xf32>
    %7 = arith.addf %2, %6 : vector<222x128xf32>
    %8 = vector.extract_strided_slice %1 {offsets = [1, 0], sizes = [222, 4], strides = [1, 1]} : vector<256x4xf32> to vector<222x4xf32>
    %c1 = arith.constant 1 : index
    %c0_6 = arith.constant 0 : index
    %c0_7 = arith.constant 0 : index
    %9 = vector.load %arg2[%c1, %c0_6, %c0_7] : memref<9x4x128xf32, #tpu.memory_space<vmem>>, vector<1x4x128xf32>
    %10 = vector.shape_cast %9 : vector<1x4x128xf32> to vector<4x128xf32>
    %cst_8 = arith.constant dense<0.000000e+00> : vector<222x128xf32>
    %11 = tpu.matmul %8, %10, %cst_8 {dimension_numbers = #tpu.dot_dimension_numbers<[1], [0], [0], [1], [0, 0, 1, 1], [], []>} : vector<222x4xf32>, vector<4x128xf32>, vector<222x128xf32> -> vector<222x128xf32>
    %12 = arith.addf %7, %11 : vector<222x128xf32>
    %13 = vector.extract_strided_slice %1 {offsets = [2, 0], sizes = [222, 4], strides = [1, 1]} : vector<256x4xf32> to vector<222x4xf32>
    %c2 = arith.constant 2 : index
    %c0_9 = arith.constant 0 : index
    %c0_10 = arith.constant 0 : index
    %14 = vector.load %arg2[%c2, %c0_9, %c0_10] : memref<9x4x128xf32, #tpu.memory_space<vmem>>, vector<1x4x128xf32>
    %15 = vector.shape_cast %14 : vector<1x4x128xf32> to vector<4x128xf32>
    %cst_11 = arith.constant dense<0.000000e+00> : vector<222x128xf32>
    %16 = tpu.matmul %13, %15, %cst_11 {dimension_numbers = #tpu.dot_dimension_numbers<[1], [0], [0], [1], [0, 0, 1, 1], [], []>} : vector<222x4xf32>, vector<4x128xf32>, vector<222x128xf32> -> vector<222x128xf32>
    %17 = arith.addf %12, %16 : vector<222x128xf32>
    %18 = vector.extract_strided_slice %1 {offsets = [16, 0], sizes = [222, 4], strides = [1, 1]} : vector<256x4xf32> to vector<222x4xf32>
    %c3 = arith.constant 3 : index
    %c0_12 = arith.constant 0 : index
    %c0_13 = arith.constant 0 : index
    %19 = vector.load %arg2[%c3, %c0_12, %c0_13] : memref<9x4x128xf32, #tpu.memory_space<vmem>>, vector<1x4x128xf32>
    %20 = vector.shape_cast %19 : vector<1x4x128xf32> to vector<4x128xf32>
    %cst_14 = arith.constant dense<0.000000e+00> : vector<222x128xf32>
    %21 = tpu.matmul %18, %20, %cst_14 {dimension_numbers = #tpu.dot_dimension_numbers<[1], [0], [0], [1], [0, 0, 1, 1], [], []>} : vector<222x4xf32>, vector<4x128xf32>, vector<222x128xf32> -> vector<222x128xf32>
    %22 = arith.addf %17, %21 : vector<222x128xf32>
    %23 = vector.extract_strided_slice %1 {offsets = [17, 0], sizes = [222, 4], strides = [1, 1]} : vector<256x4xf32> to vector<222x4xf32>
    %c4 = arith.constant 4 : index
    %c0_15 = arith.constant 0 : index
    %c0_16 = arith.constant 0 : index
    %24 = vector.load %arg2[%c4, %c0_15, %c0_16] : memref<9x4x128xf32, #tpu.memory_space<vmem>>, vector<1x4x128xf32>
    %25 = vector.shape_cast %24 : vector<1x4x128xf32> to vector<4x128xf32>
    %cst_17 = arith.constant dense<0.000000e+00> : vector<222x128xf32>
    %26 = tpu.matmul %23, %25, %cst_17 {dimension_numbers = #tpu.dot_dimension_numbers<[1], [0], [0], [1], [0, 0, 1, 1], [], []>} : vector<222x4xf32>, vector<4x128xf32>, vector<222x128xf32> -> vector<222x128xf32>
    %27 = arith.addf %22, %26 : vector<222x128xf32>
    %28 = vector.extract_strided_slice %1 {offsets = [18, 0], sizes = [222, 4], strides = [1, 1]} : vector<256x4xf32> to vector<222x4xf32>
    %c5 = arith.constant 5 : index
    %c0_18 = arith.constant 0 : index
    %c0_19 = arith.constant 0 : index
    %29 = vector.load %arg2[%c5, %c0_18, %c0_19] : memref<9x4x128xf32, #tpu.memory_space<vmem>>, vector<1x4x128xf32>
    %30 = vector.shape_cast %29 : vector<1x4x128xf32> to vector<4x128xf32>
    %cst_20 = arith.constant dense<0.000000e+00> : vector<222x128xf32>
    %31 = tpu.matmul %28, %30, %cst_20 {dimension_numbers = #tpu.dot_dimension_numbers<[1], [0], [0], [1], [0, 0, 1, 1], [], []>} : vector<222x4xf32>, vector<4x128xf32>, vector<222x128xf32> -> vector<222x128xf32>
    %32 = arith.addf %27, %31 : vector<222x128xf32>
    %33 = vector.extract_strided_slice %1 {offsets = [32, 0], sizes = [222, 4], strides = [1, 1]} : vector<256x4xf32> to vector<222x4xf32>
    %c6 = arith.constant 6 : index
    %c0_21 = arith.constant 0 : index
    %c0_22 = arith.constant 0 : index
    %34 = vector.load %arg2[%c6, %c0_21, %c0_22] : memref<9x4x128xf32, #tpu.memory_space<vmem>>, vector<1x4x128xf32>
    %35 = vector.shape_cast %34 : vector<1x4x128xf32> to vector<4x128xf32>
    %cst_23 = arith.constant dense<0.000000e+00> : vector<222x128xf32>
    %36 = tpu.matmul %33, %35, %cst_23 {dimension_numbers = #tpu.dot_dimension_numbers<[1], [0], [0], [1], [0, 0, 1, 1], [], []>} : vector<222x4xf32>, vector<4x128xf32>, vector<222x128xf32> -> vector<222x128xf32>
    %37 = arith.addf %32, %36 : vector<222x128xf32>
    %38 = vector.extract_strided_slice %1 {offsets = [33, 0], sizes = [222, 4], strides = [1, 1]} : vector<256x4xf32> to vector<222x4xf32>
    %c7 = arith.constant 7 : index
    %c0_24 = arith.constant 0 : index
    %c0_25 = arith.constant 0 : index
    %39 = vector.load %arg2[%c7, %c0_24, %c0_25] : memref<9x4x128xf32, #tpu.memory_space<vmem>>, vector<1x4x128xf32>
    %40 = vector.shape_cast %39 : vector<1x4x128xf32> to vector<4x128xf32>
    %cst_26 = arith.constant dense<0.000000e+00> : vector<222x128xf32>
    %41 = tpu.matmul %38, %40, %cst_26 {dimension_numbers = #tpu.dot_dimension_numbers<[1], [0], [0], [1], [0, 0, 1, 1], [], []>} : vector<222x4xf32>, vector<4x128xf32>, vector<222x128xf32> -> vector<222x128xf32>
    %42 = arith.addf %37, %41 : vector<222x128xf32>
    %43 = vector.extract_strided_slice %1 {offsets = [34, 0], sizes = [222, 4], strides = [1, 1]} : vector<256x4xf32> to vector<222x4xf32>
    %c8 = arith.constant 8 : index
    %c0_27 = arith.constant 0 : index
    %c0_28 = arith.constant 0 : index
    %44 = vector.load %arg2[%c8, %c0_27, %c0_28] : memref<9x4x128xf32, #tpu.memory_space<vmem>>, vector<1x4x128xf32>
    %45 = vector.shape_cast %44 : vector<1x4x128xf32> to vector<4x128xf32>
    %cst_29 = arith.constant dense<0.000000e+00> : vector<222x128xf32>
    %46 = tpu.matmul %43, %45, %cst_29 {dimension_numbers = #tpu.dot_dimension_numbers<[1], [0], [0], [1], [0, 0, 1, 1], [], []>} : vector<222x4xf32>, vector<4x128xf32>, vector<222x128xf32> -> vector<222x128xf32>
    %47 = arith.addf %42, %46 : vector<222x128xf32>
    %c0_30 = arith.constant 0 : index
    %c0_31 = arith.constant 0 : index
    %48 = vector.load %arg3[%c0_30, %c0_31] : memref<1x128xf32, #tpu.memory_space<vmem>>, vector<1x128xf32>
    %49 = vector.broadcast %48 : vector<1x128xf32> to vector<222x128xf32>
    %50 = arith.addf %47, %49 : vector<222x128xf32>
    %cst_32 = arith.constant 0.000000e+00 : f32
    %51 = vector.broadcast %cst_32 : f32 to vector<222x128xf32>
    %52 = arith.maximumf %50, %51 : vector<222x128xf32>
    %cst_33 = arith.constant 0.000000e+00 : f32
    %53 = vector.broadcast %cst_33 : f32 to vector<188x128xf32>
    %54 = vector.extract_strided_slice %52 {offsets = [0, 0], sizes = [188, 8], strides = [1, 1]} : vector<222x128xf32> to vector<188x8xf32>
    %c0_34 = arith.constant 0 : index
    %c0_35 = arith.constant 0 : index
    %c0_36 = arith.constant 0 : index
    %55 = vector.load %arg4[%c0_34, %c0_35, %c0_36] : memref<9x8x128xf32, #tpu.memory_space<vmem>>, vector<1x8x128xf32>
    %56 = vector.shape_cast %55 : vector<1x8x128xf32> to vector<8x128xf32>
    %cst_37 = arith.constant dense<0.000000e+00> : vector<188x128xf32>
    %57 = tpu.matmul %54, %56, %cst_37 {dimension_numbers = #tpu.dot_dimension_numbers<[1], [0], [0], [1], [0, 0, 1, 1], [], []>} : vector<188x8xf32>, vector<8x128xf32>, vector<188x128xf32> -> vector<188x128xf32>
    %58 = arith.addf %53, %57 : vector<188x128xf32>
    %59 = vector.extract_strided_slice %52 {offsets = [1, 0], sizes = [188, 8], strides = [1, 1]} : vector<222x128xf32> to vector<188x8xf32>
    %c1_38 = arith.constant 1 : index
    %c0_39 = arith.constant 0 : index
    %c0_40 = arith.constant 0 : index
    %60 = vector.load %arg4[%c1_38, %c0_39, %c0_40] : memref<9x8x128xf32, #tpu.memory_space<vmem>>, vector<1x8x128xf32>
    %61 = vector.shape_cast %60 : vector<1x8x128xf32> to vector<8x128xf32>
    %cst_41 = arith.constant dense<0.000000e+00> : vector<188x128xf32>
    %62 = tpu.matmul %59, %61, %cst_41 {dimension_numbers = #tpu.dot_dimension_numbers<[1], [0], [0], [1], [0, 0, 1, 1], [], []>} : vector<188x8xf32>, vector<8x128xf32>, vector<188x128xf32> -> vector<188x128xf32>
    %63 = arith.addf %58, %62 : vector<188x128xf32>
    %64 = vector.extract_strided_slice %52 {offsets = [2, 0], sizes = [188, 8], strides = [1, 1]} : vector<222x128xf32> to vector<188x8xf32>
    %c2_42 = arith.constant 2 : index
    %c0_43 = arith.constant 0 : index
    %c0_44 = arith.constant 0 : index
    %65 = vector.load %arg4[%c2_42, %c0_43, %c0_44] : memref<9x8x128xf32, #tpu.memory_space<vmem>>, vector<1x8x128xf32>
    %66 = vector.shape_cast %65 : vector<1x8x128xf32> to vector<8x128xf32>
    %cst_45 = arith.constant dense<0.000000e+00> : vector<188x128xf32>
    %67 = tpu.matmul %64, %66, %cst_45 {dimension_numbers = #tpu.dot_dimension_numbers<[1], [0], [0], [1], [0, 0, 1, 1], [], []>} : vector<188x8xf32>, vector<8x128xf32>, vector<188x128xf32> -> vector<188x128xf32>
    %68 = arith.addf %63, %67 : vector<188x128xf32>
    %69 = vector.extract_strided_slice %52 {offsets = [16, 0], sizes = [188, 8], strides = [1, 1]} : vector<222x128xf32> to vector<188x8xf32>
    %c3_46 = arith.constant 3 : index
    %c0_47 = arith.constant 0 : index
    %c0_48 = arith.constant 0 : index
    %70 = vector.load %arg4[%c3_46, %c0_47, %c0_48] : memref<9x8x128xf32, #tpu.memory_space<vmem>>, vector<1x8x128xf32>
    %71 = vector.shape_cast %70 : vector<1x8x128xf32> to vector<8x128xf32>
    %cst_49 = arith.constant dense<0.000000e+00> : vector<188x128xf32>
    %72 = tpu.matmul %69, %71, %cst_49 {dimension_numbers = #tpu.dot_dimension_numbers<[1], [0], [0], [1], [0, 0, 1, 1], [], []>} : vector<188x8xf32>, vector<8x128xf32>, vector<188x128xf32> -> vector<188x128xf32>
    %73 = arith.addf %68, %72 : vector<188x128xf32>
    %74 = vector.extract_strided_slice %52 {offsets = [17, 0], sizes = [188, 8], strides = [1, 1]} : vector<222x128xf32> to vector<188x8xf32>
    %c4_50 = arith.constant 4 : index
    %c0_51 = arith.constant 0 : index
    %c0_52 = arith.constant 0 : index
    %75 = vector.load %arg4[%c4_50, %c0_51, %c0_52] : memref<9x8x128xf32, #tpu.memory_space<vmem>>, vector<1x8x128xf32>
    %76 = vector.shape_cast %75 : vector<1x8x128xf32> to vector<8x128xf32>
    %cst_53 = arith.constant dense<0.000000e+00> : vector<188x128xf32>
    %77 = tpu.matmul %74, %76, %cst_53 {dimension_numbers = #tpu.dot_dimension_numbers<[1], [0], [0], [1], [0, 0, 1, 1], [], []>} : vector<188x8xf32>, vector<8x128xf32>, vector<188x128xf32> -> vector<188x128xf32>
    %78 = arith.addf %73, %77 : vector<188x128xf32>
    %79 = vector.extract_strided_slice %52 {offsets = [18, 0], sizes = [188, 8], strides = [1, 1]} : vector<222x128xf32> to vector<188x8xf32>
    %c5_54 = arith.constant 5 : index
    %c0_55 = arith.constant 0 : index
    %c0_56 = arith.constant 0 : index
    %80 = vector.load %arg4[%c5_54, %c0_55, %c0_56] : memref<9x8x128xf32, #tpu.memory_space<vmem>>, vector<1x8x128xf32>
    %81 = vector.shape_cast %80 : vector<1x8x128xf32> to vector<8x128xf32>
    %cst_57 = arith.constant dense<0.000000e+00> : vector<188x128xf32>
    %82 = tpu.matmul %79, %81, %cst_57 {dimension_numbers = #tpu.dot_dimension_numbers<[1], [0], [0], [1], [0, 0, 1, 1], [], []>} : vector<188x8xf32>, vector<8x128xf32>, vector<188x128xf32> -> vector<188x128xf32>
    %83 = arith.addf %78, %82 : vector<188x128xf32>
    %84 = vector.extract_strided_slice %52 {offsets = [32, 0], sizes = [188, 8], strides = [1, 1]} : vector<222x128xf32> to vector<188x8xf32>
    %c6_58 = arith.constant 6 : index
    %c0_59 = arith.constant 0 : index
    %c0_60 = arith.constant 0 : index
    %85 = vector.load %arg4[%c6_58, %c0_59, %c0_60] : memref<9x8x128xf32, #tpu.memory_space<vmem>>, vector<1x8x128xf32>
    %86 = vector.shape_cast %85 : vector<1x8x128xf32> to vector<8x128xf32>
    %cst_61 = arith.constant dense<0.000000e+00> : vector<188x128xf32>
    %87 = tpu.matmul %84, %86, %cst_61 {dimension_numbers = #tpu.dot_dimension_numbers<[1], [0], [0], [1], [0, 0, 1, 1], [], []>} : vector<188x8xf32>, vector<8x128xf32>, vector<188x128xf32> -> vector<188x128xf32>
    %88 = arith.addf %83, %87 : vector<188x128xf32>
    %89 = vector.extract_strided_slice %52 {offsets = [33, 0], sizes = [188, 8], strides = [1, 1]} : vector<222x128xf32> to vector<188x8xf32>
    %c7_62 = arith.constant 7 : index
    %c0_63 = arith.constant 0 : index
    %c0_64 = arith.constant 0 : index
    %90 = vector.load %arg4[%c7_62, %c0_63, %c0_64] : memref<9x8x128xf32, #tpu.memory_space<vmem>>, vector<1x8x128xf32>
    %91 = vector.shape_cast %90 : vector<1x8x128xf32> to vector<8x128xf32>
    %cst_65 = arith.constant dense<0.000000e+00> : vector<188x128xf32>
    %92 = tpu.matmul %89, %91, %cst_65 {dimension_numbers = #tpu.dot_dimension_numbers<[1], [0], [0], [1], [0, 0, 1, 1], [], []>} : vector<188x8xf32>, vector<8x128xf32>, vector<188x128xf32> -> vector<188x128xf32>
    %93 = arith.addf %88, %92 : vector<188x128xf32>
    %94 = vector.extract_strided_slice %52 {offsets = [34, 0], sizes = [188, 8], strides = [1, 1]} : vector<222x128xf32> to vector<188x8xf32>
    %c8_66 = arith.constant 8 : index
    %c0_67 = arith.constant 0 : index
    %c0_68 = arith.constant 0 : index
    %95 = vector.load %arg4[%c8_66, %c0_67, %c0_68] : memref<9x8x128xf32, #tpu.memory_space<vmem>>, vector<1x8x128xf32>
    %96 = vector.shape_cast %95 : vector<1x8x128xf32> to vector<8x128xf32>
    %cst_69 = arith.constant dense<0.000000e+00> : vector<188x128xf32>
    %97 = tpu.matmul %94, %96, %cst_69 {dimension_numbers = #tpu.dot_dimension_numbers<[1], [0], [0], [1], [0, 0, 1, 1], [], []>} : vector<188x8xf32>, vector<8x128xf32>, vector<188x128xf32> -> vector<188x128xf32>
    %98 = arith.addf %93, %97 : vector<188x128xf32>
    %c0_70 = arith.constant 0 : index
    %c0_71 = arith.constant 0 : index
    %99 = vector.load %arg5[%c0_70, %c0_71] : memref<1x128xf32, #tpu.memory_space<vmem>>, vector<1x128xf32>
    %100 = vector.broadcast %99 : vector<1x128xf32> to vector<188x128xf32>
    %101 = arith.addf %98, %100 : vector<188x128xf32>
    %cst_72 = arith.constant 0.000000e+00 : f32
    %102 = vector.broadcast %cst_72 : f32 to vector<188x128xf32>
    %103 = arith.maximumf %101, %102 : vector<188x128xf32>
    %c0_73 = arith.constant 0 : index
    %c0_74 = arith.constant 0 : index
    %c0_75 = arith.constant 0 : index
    %104 = vector.load %arg6[%c0_73, %c0_74, %c0_75] : memref<1x188x128xf32, #tpu.memory_space<vmem>>, vector<1x188x128xf32>
    %105 = vector.shape_cast %104 : vector<1x188x128xf32> to vector<188x128xf32>
    %106 = vector.shape_cast %103 : vector<188x128xf32> to vector<1x188x128xf32>
    tpu.vector_store %arg6[%c0_73, %c0_74, %c0_75], %106 {strides = array<i32>} : memref<1x188x128xf32, #tpu.memory_space<vmem>>, vector<1x188x128xf32>,
    return
  }
  func.func @transform_0(%arg0: i32) -> (i32, i32, i32) {
    %c0_i32 = arith.constant 0 : i32
    %c0_i32_0 = arith.constant 0 : i32
    %c0_i32_1 = arith.constant 0 : i32
    return %arg0, %c0_i32, %c0_i32_0 : i32, i32, i32
  }
  func.func @transform_1(%arg0: i32) -> (i32, i32, i32) {
    %c0_i32 = arith.constant 0 : i32
    %c0_i32_0 = arith.constant 0 : i32
    %c0_i32_1 = arith.constant 0 : i32
    %c0_i32_2 = arith.constant 0 : i32
    return %c0_i32, %c0_i32_0, %c0_i32_1 : i32, i32, i32
  }
  func.func @transform_2(%arg0: i32) -> (i32, i32) {
    %c0_i32 = arith.constant 0 : i32
    %c0_i32_0 = arith.constant 0 : i32
    %c0_i32_1 = arith.constant 0 : i32
    return %c0_i32, %c0_i32_0 : i32, i32
  }
  func.func @transform_3(%arg0: i32) -> (i32, i32, i32) {
    %c0_i32 = arith.constant 0 : i32
    %c0_i32_0 = arith.constant 0 : i32
    %c0_i32_1 = arith.constant 0 : i32
    %c0_i32_2 = arith.constant 0 : i32
    return %c0_i32, %c0_i32_0, %c0_i32_1 : i32, i32, i32
  }
  func.func @transform_4(%arg0: i32) -> (i32, i32) {
    %c0_i32 = arith.constant 0 : i32
    %c0_i32_0 = arith.constant 0 : i32
    %c0_i32_1 = arith.constant 0 : i32
    return %c0_i32, %c0_i32_0 : i32, i32
  }
  func.func @transform_5(%arg0: i32) -> (i32, i32, i32) {
    %c0_i32 = arith.constant 0 : i32
    %c0_i32_0 = arith.constant 0 : i32
    %c0_i32_1 = arith.constant 0 : i32
    return %arg0, %c0_i32, %c0_i32_0 : i32, i32, i32
  }
}

</mosaic_0001>

<llo_original>
// kernel: tpu_custom_call.1
$region0: #{tpu_custom_call.1}
  #allocation0 [shape = 'u32[]', space=smem, size = 0x4, offset = 0x4, fixed_abs, tag = 'smem constant byte address 0x4 - core index']
  #allocation1 [shape = 'u32[72,128]{1,0:T(1,128)}', space=vmem, size = 0x9000, scoped, tag = 'internal scratch']
  %s0 = inlined_call_operand.vmem [shape: f32[2,256,4], index: 0, kind: input, shape index: {}]
  %s1 = inlined_call_operand.vmem [shape: f32[9,4,128], index: 1, kind: input, shape index: {}]
  %s2 = inlined_call_operand.vmem [shape: f32[1,128], index: 2, kind: input, shape index: {}]
  %s3 = inlined_call_operand.vmem [shape: f32[9,8,128], index: 3, kind: input, shape index: {}]
  %s4 = inlined_call_operand.vmem [shape: f32[1,128], index: 4, kind: input, shape index: {}]
  %s5 = inlined_call_operand.vmem [shape: f32[2,188,128], index: 5, kind: output, shape index: {}]
  %s6 = sld [smem:[#allocation0]]
  $region53: #{tpu_custom_call.1} parent=0
    _
  %s8 = ssub.s32 1, %s6
  %s9 = scalar_select 0, %s8, %s6
  loop: start=0, step=1, limit=4
  $region2: #{tpu_custom_call.1} parent=0 // loop_pre_header
    _
  $region3: #{tpu_custom_call.1} parent=0 // loop_header
    %s11 = sphi 0, %s15
    %p12 = scmp.ge.s32.totalorder %s11, 4
    %s21 = sphi 0, %s23
    %s24 = sphi 0, %s21
    %s25 = sphi 0, %s24
    %s41 = sphi 0, %s25
    %s45 = sphi 0, %s45
    %s47 = sphi 0, %s45
    %s48 = sphi 0, %s47
    %s62 = sphi 0, %s48
    %s66 = sphi 0, %s66
    %s68 = sphi 0, %s66
    %s69 = sphi 0, %s68
    %s83 = sphi 0, %s69
    %s87 = sphi 0, %s87
    %s89 = sphi 0, %s87
    %s90 = sphi 0, %s89
    %s104 = sphi 0, %s90
    %s108 = sphi 0, %s108
    %s110 = sphi 0, %s108
    %s111 = sphi 0, %s110
    %s125 = sphi 0, %s111
    %s131 = sphi 0, %s133
    %s134 = sphi 0, %s131
    %s135 = sphi 0, %s134
    %s151 = sphi 0, %s135
  $region4: #{tpu_custom_call.1} parent=0 // loop_header_branch
    %14 = sbr.rel (%p12) target = $region8
  $region5: #{tpu_custom_call.1} parent=0 // loop_body
    %s16 = ssub.s32 %s11, 1
    %s17 = ssub.s32 %s11, 2
    %s18 = sadd.s32 %s11, 1
    %s19 = ssub.s32 %s11, %s18
    %p20 = scmp.eq.s32.totalorder %s19, 0
    %s22 = sadd.s32 %s21, 1
    %s23 = scalar_select %p20, %s21, %s22
    %p26 = pneg %p20
    %p27 = scmp.eq.s32.totalorder %s11, 1
    %p28 = por %p26, %p27
    %p29 = scmp.ne.s32.totalorder %s21, %s24
    %p30 = scmp.eq.s32.totalorder %s11, 0
    %p31 = por %p29, %p30
    %p32 = scmp.ne.s32.totalorder %s21, %s24
    %p33 = scmp.eq.s32.totalorder %s16, 1
    %p34 = por %p32, %p33
    %p35 = scmp.ne.s32.totalorder %s24, %s25
    %p36 = scmp.eq.s32.totalorder %s16, 0
    %p37 = por %p35, %p36
    %p38 = scmp.ne.s32.totalorder %s24, %s25
    %p39 = scmp.eq.s32.totalorder %s17, 1
    %p40 = por %p38, %p39
    %p42 = scmp.ne.s32.totalorder %s25, %s41
    %p43 = scmp.eq.s32.totalorder %s17, 0
    %p44 = por %p42, %p43
    %s46 = sadd.s32 %s45, 1
    %p49 = scmp.eq.s32.totalorder %s11, 1
    %p50 = scmp.ne.s32.totalorder %s45, %s47
    %p51 = scmp.eq.s32.totalorder %s11, 0
    %p52 = por %p50, %p51
    %p53 = scmp.ne.s32.totalorder %s45, %s47
    %p54 = scmp.eq.s32.totalorder %s16, 1
    %p55 = por %p53, %p54
    %p56 = scmp.ne.s32.totalorder %s47, %s48
    %p57 = scmp.eq.s32.totalorder %s16, 0
    %p58 = por %p56, %p57
    %p59 = scmp.ne.s32.totalorder %s47, %s48
    %p60 = scmp.eq.s32.totalorder %s17, 1
    %p61 = por %p59, %p60
    %p63 = scmp.ne.s32.totalorder %s48, %s62
    %p64 = scmp.eq.s32.totalorder %s17, 0
    %p65 = por %p63, %p64
    %s67 = sadd.s32 %s66, 1
    %p70 = scmp.eq.s32.totalorder %s11, 1
    %p71 = scmp.ne.s32.totalorder %s66, %s68
    %p72 = scmp.eq.s32.totalorder %s11, 0
    %p73 = por %p71, %p72
    %p74 = scmp.ne.s32.totalorder %s66, %s68
    %p75 = scmp.eq.s32.totalorder %s16, 1
    %p76 = por %p74, %p75
    %p77 = scmp.ne.s32.totalorder %s68, %s69
    %p78 = scmp.eq.s32.totalorder %s16, 0
    %p79 = por %p77, %p78
    %p80 = scmp.ne.s32.totalorder %s68, %s69
    %p81 = scmp.eq.s32.totalorder %s17, 1
    %p82 = por %p80, %p81
    %p84 = scmp.ne.s32.totalorder %s69, %s83
    %p85 = scmp.eq.s32.totalorder %s17, 0
    %p86 = por %p84, %p85
    %s88 = sadd.s32 %s87, 1
    %p91 = scmp.eq.s32.totalorder %s11, 1
    %p92 = scmp.ne.s32.totalorder %s87, %s89
    %p93 = scmp.eq.s32.totalorder %s11, 0
    %p94 = por %p92, %p93
    %p95 = scmp.ne.s32.totalorder %s87, %s89
    %p96 = scmp.eq.s32.totalorder %s16, 1
    %p97 = por %p95, %p96
    %p98 = scmp.ne.s32.totalorder %s89, %s90
    %p99 = scmp.eq.s32.totalorder %s16, 0
    %p100 = por %p98, %p99
    %p101 = scmp.ne.s32.totalorder %s89, %s90
    %p102 = scmp.eq.s32.totalorder %s17, 1
    %p103 = por %p101, %p102
    %p105 = scmp.ne.s32.totalorder %s90, %s104
    %p106 = scmp.eq.s32.totalorder %s17, 0
    %p107 = por %p105, %p106
    %s109 = sadd.s32 %s108, 1
    %p112 = scmp.eq.s32.totalorder %s11, 1
    %p113 = scmp.ne.s32.totalorder %s108, %s110
    %p114 = scmp.eq.s32.totalorder %s11, 0
    %p115 = por %p113, %p114
    %p116 = scmp.ne.s32.totalorder %s108, %s110
    %p117 = scmp.eq.s32.totalorder %s16, 1
    %p118 = por %p116, %p117
    %p119 = scmp.ne.s32.totalorder %s110, %s111
    %p120 = scmp.eq.s32.totalorder %s16, 0
    %p121 = por %p119, %p120
    %p122 = scmp.ne.s32.totalorder %s110, %s111
    %p123 = scmp.eq.s32.totalorder %s17, 1
    %p124 = por %p122, %p123
    %p126 = scmp.ne.s32.totalorder %s111, %s125
    %p127 = scmp.eq.s32.totalorder %s17, 0
    %p128 = por %p126, %p127
    %s129 = ssub.s32 %s11, %s18
    %p130 = scmp.eq.s32.totalorder %s129, 0
    %s132 = sadd.s32 %s131, 1
    %s133 = scalar_select %p130, %s131, %s132
    %p136 = pneg %p130
    %p137 = scmp.eq.s32.totalorder %s11, 1
    %p138 = por %p136, %p137
    %p139 = scmp.ne.s32.totalorder %s131, %s134
    %p140 = scmp.eq.s32.totalorder %s11, 0
    %p141 = por %p139, %p140
    %p142 = scmp.ne.s32.totalorder %s131, %s134
    %p143 = scmp.eq.s32.totalorder %s16, 1
    %p144 = por %p142, %p143
    %p145 = scmp.ne.s32.totalorder %s134, %s135
    %p146 = scmp.eq.s32.totalorder %s16, 0
    %p147 = por %p145, %p146
    %p148 = scmp.ne.s32.totalorder %s134, %s135
    %p149 = scmp.eq.s32.totalorder %s17, 1
    %p150 = por %p148, %p149
    %p152 = scmp.ne.s32.totalorder %s135, %s151
    %p153 = scmp.eq.s32.totalorder %s17, 0
    %p154 = por %p152, %p153
    %p155 = scmp.le.s32.totalorder 1, %s11
    %p156 = scmp.lt.s32.totalorder %s11, 3
    %p157 = pnand %p155, %p156
    %p158 = pneg %p157
    // Predicated region
    $region9: #{tpu_custom_call.1} parent=5 // pred_check
      _
    $region10: #{tpu_custom_call.1} parent=5 // pred_check_branch
      %160 = sbr.rel (%p157) target = $region12
    $region11: #{tpu_custom_call.1} parent=5 // pred_region
      %s161 = ssub.s32 %s11, 1
      // Predicated region
      $region13: #{tpu_custom_call.1} parent=11 // pred_check
        %p162 = pneg %p58
      $region14: #{tpu_custom_call.1} parent=11 // pred_check_branch
        %164 = sbr.rel (%p162) target = $region16
      $region15: #{tpu_custom_call.1} parent=11 // pred_region
        _
      $region16: #{tpu_custom_call.1} parent=11 // pred_fallthru
        _
      // Predicated region
      $region17: #{tpu_custom_call.1} parent=11 // pred_check
        %p165 = pneg %p79
      $region18: #{tpu_custom_call.1} parent=11 // pred_check_branch
        %167 = sbr.rel (%p165) target = $region20
      $region19: #{tpu_custom_call.1} parent=11 // pred_region
        _
      $region20: #{tpu_custom_call.1} parent=11 // pred_fallthru
        _
      // Predicated region
      $region21: #{tpu_custom_call.1} parent=11 // pred_check
        %p168 = pneg %p100
      $region22: #{tpu_custom_call.1} parent=11 // pred_check_branch
        %170 = sbr.rel (%p168) target = $region24
      $region23: #{tpu_custom_call.1} parent=11 // pred_region
        _
      $region24: #{tpu_custom_call.1} parent=11 // pred_fallthru
        _
      // Predicated region
      $region25: #{tpu_custom_call.1} parent=11 // pred_check
        %p171 = pneg %p121
      $region26: #{tpu_custom_call.1} parent=11 // pred_check_branch
        %173 = sbr.rel (%p171) target = $region28
      $region27: #{tpu_custom_call.1} parent=11 // pred_region
        _
      $region28: #{tpu_custom_call.1} parent=11 // pred_fallthru
        _
    $region12: #{tpu_custom_call.1} parent=5 // pred_fallthru
      _
    %p174 = scmp.lt.s32.totalorder %s11, 2
    // Predicated region
    $region29: #{tpu_custom_call.1} parent=5 // pred_check
      %p175 = pneg %p174
    $region30: #{tpu_custom_call.1} parent=5 // pred_check_branch
      %177 = sbr.rel (%p175) target = $region32
    $region31: #{tpu_custom_call.1} parent=5 // pred_region
      // Predicated region
      $region33: #{tpu_custom_call.1} parent=31 // pred_check
        %p178 = pneg %p31
      $region34: #{tpu_custom_call.1} parent=31 // pred_check_branch
        %180 = sbr.rel (%p178) target = $region36
      $region35: #{tpu_custom_call.1} parent=31 // pred_region
        %p181 = scmp.lt.s32.totalorder %s11, 1
        %s182 = scalar_select %p181, %s11, 1
        %s183 = smul.addr %s182, 32
        %s184 = smul.addr %s183, 8
        %s185 = scalar_lea.vmem %s0, %s184
      $region36: #{tpu_custom_call.1} parent=31 // pred_fallthru
        _
    $region32: #{tpu_custom_call.1} parent=5 // pred_fallthru
      _
    %p186 = scmp.le.s32.totalorder 1, %s11
    %p187 = scmp.lt.s32.totalorder %s11, 3
    %p188 = pnand %p186, %p187
    %p189 = pneg %p188
    // Predicated region
    $region37: #{tpu_custom_call.1} parent=5 // pred_check
      _
    $region38: #{tpu_custom_call.1} parent=5 // pred_check_branch
      %191 = sbr.rel (%p188) target = $region40
    $region39: #{tpu_custom_call.1} parent=5 // pred_region
      %s192 = ssub.s32 %s11, 1
      %p193 = scmp.lt.s32.totalorder %s16, 1
      %s194 = scalar_select %p193, %s16, 1
      %s195 = smul.addr %s194, 32
      %s196 = smul.addr %s195, 8
      %s197 = scalar_lea.vmem %s0, %s196
      %p198 = pneg %p37
      %p199 = pneg %p34
      %p200 = pneg %p58
      %p201 = pneg %p55
      %p202 = pneg %p79
      %p203 = pneg %p76
      %p204 = pneg %p100
      %p205 = pneg %p97
      %p206 = pneg %p121
      %p207 = pneg %p118
      %p208 = pneg %p147
      %p209 = pneg %p144
      %p210 = scmp.lt.s32.totalorder %s16, 1
      %s211 = scalar_select %p210, %s16, 1
      %s212 = smul.addr %s211, 24
      %s213 = smul.addr %s212, 8
      %s214 = scalar_lea.vmem %s5, %s213
      %p215 = scmp.lt.s32.totalorder %s16, 1
      %s216 = scalar_select %p215, %s16, 1
      %s217 = smul.addr %s216, 32
      %s218 = smul.addr %s217, 8
      %s219 = scalar_lea.vmem %s0, %s218
      %p220 = scmp.lt.s32.totalorder %s16, 1
      %s221 = scalar_select %p220, %s16, 1
      %s222 = smul.addr %s221, 24
      %s223 = smul.addr %s222, 8
      %s224 = scalar_lea.vmem %s5, %s223
      %v225 = vld [vmem:[%s219] sm:$0xff]
      %v226 = vld [vmem:[%s219 + $0x8] sm:$0xff]
      %v227 = vld [vmem:[%s219 + $0x10] sm:$0xff]
      %v228 = vld [vmem:[%s219 + $0x18] sm:$0xff]
      %v229 = vld [vmem:[%s219 + $0x20] sm:$0xff]
      %v230 = vld [vmem:[%s219 + $0x28] sm:$0xff]
      %v231 = vld [vmem:[%s219 + $0x30] sm:$0xff]
      %v232 = vld [vmem:[%s219 + $0x38] sm:$0xff]
      %v233 = vld [vmem:[%s219 + $0x40] sm:$0xff]
      %v234 = vld [vmem:[%s219 + $0x48] sm:$0xff]
      %v235 = vld [vmem:[%s219 + $0x50] sm:$0xff]
      %v236 = vld [vmem:[%s219 + $0x58] sm:$0xff]
      %v237 = vld [vmem:[%s219 + $0x60] sm:$0xff]
      %v238 = vld [vmem:[%s219 + $0x68] sm:$0xff]
      %v239 = vld [vmem:[%s219 + $0x70] sm:$0xff]
      %v240 = vld [vmem:[%s219 + $0x78] sm:$0xff]
      %v241 = vld [vmem:[%s219 + $0x80] sm:$0xff]
      %v242 = vld [vmem:[%s219 + $0x88] sm:$0xff]
      %v243 = vld [vmem:[%s219 + $0x90] sm:$0xff]
      %v244 = vld [vmem:[%s219 + $0x98] sm:$0xff]
      %v245 = vld [vmem:[%s219 + $0xa0] sm:$0xff]
      %v246 = vld [vmem:[%s219 + $0xa8] sm:$0xff]
      %v247 = vld [vmem:[%s219 + $0xb0] sm:$0xff]
      %v248 = vld [vmem:[%s219 + $0xb8] sm:$0xff]
      %v249 = vld [vmem:[%s219 + $0xc0] sm:$0xff]
      %v250 = vld [vmem:[%s219 + $0xc8] sm:$0xff]
      %v251 = vld [vmem:[%s219 + $0xd0] sm:$0xff]
      %v252 = vld [vmem:[%s219 + $0xd8] sm:$0xff]
      %v253 = vld [vmem:[%s219 + $0xe0] sm:$0xff]
      %v254 = vld [vmem:[%s219 + $0xe8] sm:$0xff]
      %v255 = vld [vmem:[%s219 + $0xf0] sm:$0xff]
      %v256 = vld [vmem:[%s219 + $0xf8] sm:$0xff]
      %v257 = vld [vmem:[%s1] sm:$0xf]
      %s258 = scalar_lea.vmem %s1, 4
      %v259 = vld [vmem:[%s258] sm:$0xf]
      %vm288 = vcmask 1046528
      %v289 = vrot.slane %v225, 1
      %v290 = vrot.slane %v226, 1
      %v291 = vsel %vm288, %v289, %v290
      %v292 = vrot.slane %v227, 1
      %v293 = vsel %vm288, %v290, %v292
      %v294 = vrot.slane %v228, 1
      %v295 = vsel %vm288, %v292, %v294
      %v296 = vrot.slane %v229, 1
      %v297 = vsel %vm288, %v294, %v296
      %v298 = vrot.slane %v230, 1
      %v299 = vsel %vm288, %v296, %v298
      %v300 = vrot.slane %v231, 1
      %v301 = vsel %vm288, %v298, %v300
      %v302 = vrot.slane %v232, 1
      %v303 = vsel %vm288, %v300, %v302
      %v304 = vrot.slane %v233, 1
      %v305 = vsel %vm288, %v302, %v304
      %v306 = vrot.slane %v234, 1
      %v307 = vsel %vm288, %v304, %v306
      %v308 = vrot.slane %v235, 1
      %v309 = vsel %vm288, %v306, %v308
      %v310 = vrot.slane %v236, 1
      %v311 = vsel %vm288, %v308, %v310
      %v312 = vrot.slane %v237, 1
      %v313 = vsel %vm288, %v310, %v312
      %v314 = vrot.slane %v238, 1
      %v315 = vsel %vm288, %v312, %v314
      %v316 = vrot.slane %v239, 1
      %v317 = vsel %vm288, %v314, %v316
      %v318 = vrot.slane %v240, 1
      %v319 = vsel %vm288, %v316, %v318
      %v320 = vrot.slane %v241, 1
      %v321 = vsel %vm288, %v318, %v320
      %v322 = vrot.slane %v242, 1
      %v323 = vsel %vm288, %v320, %v322
      %v324 = vrot.slane %v243, 1
      %v325 = vsel %vm288, %v322, %v324
      %v326 = vrot.slane %v244, 1
      %v327 = vsel %vm288, %v324, %v326
      %v328 = vrot.slane %v245, 1
      %v329 = vsel %vm288, %v326, %v328
      %v330 = vrot.slane %v246, 1
      %v331 = vsel %vm288, %v328, %v330
      %v332 = vrot.slane %v247, 1
      %v333 = vsel %vm288, %v330, %v332
      %v334 = vrot.slane %v248, 1
      %v335 = vsel %vm288, %v332, %v334
      %v336 = vrot.slane %v249, 1
      %v337 = vsel %vm288, %v334, %v336
      %v338 = vrot.slane %v250, 1
      %v339 = vsel %vm288, %v336, %v338
      %v340 = vrot.slane %v251, 1
      %v341 = vsel %vm288, %v338, %v340
      %v342 = vrot.slane %v252, 1
      %v343 = vsel %vm288, %v340, %v342
      %vm344 = vcmask 31744
      %v345 = vsel %vm344, %v291, 0
      %v347 = vsel %vm344, %v293, 0
      %v349 = vsel %vm344, %v295, 0
      %v351 = vsel %vm344, %v297, 0
      %v353 = vsel %vm344, %v299, 0
      %v355 = vsel %vm344, %v301, 0
      %v357 = vsel %vm344, %v303, 0
      %v359 = vsel %vm344, %v305, 0
      %v361 = vsel %vm344, %v307, 0
      %v363 = vsel %vm344, %v309, 0
      %v365 = vsel %vm344, %v311, 0
      %v367 = vsel %vm344, %v313, 0
      %v369 = vsel %vm344, %v315, 0
      %v371 = vsel %vm344, %v317, 0
      %v373 = vsel %vm344, %v319, 0
      %v375 = vsel %vm344, %v321, 0
      %v377 = vsel %vm344, %v323, 0
      %v379 = vsel %vm344, %v325, 0
      %v381 = vsel %vm344, %v327, 0
      %v383 = vsel %vm344, %v329, 0
      %v385 = vsel %vm344, %v331, 0
      %v387 = vsel %vm344, %v333, 0
      %v389 = vsel %vm344, %v335, 0
      %v391 = vsel %vm344, %v337, 0
      %v393 = vsel %vm344, %v339, 0
      %v395 = vsel %vm344, %v341, 0
      %v397 = vsel %vm344, %v343, 0
      %v399 = vsel %vm344, %v342, 0
      %vm401 = vcmask 1043456
      %v403 = vsel %vm401, %v259, 0
      %405 = vmatpush.msra.mxu0 0.0
      %406 = vmatpush.msra.mxu0 0.0
      %407 = vmatpush.msra.mxu0 0.0
      %408 = vmatpush.msra.mxu0 0.0
      %409 = vmatpush.msra.mxu0 0.0
      %410 = vmatpush.msra.mxu0 0.0
      %411 = vmatpush.msra.mxu0 0.0
      %412 = vmatpush.msra.mxu0 0.0
      %413 = vmatpush.msra.mxu0 0.0
      %414 = vmatpush.msra.mxu0 0.0
      %415 = vmatpush.msra.mxu0 0.0
      %416 = vmatpush.msra.mxu0 0.0
      %417 = vmatpush.msra.mxu0 0.0
      %418 = vmatpush.msra.mxu0 0.0
      %419 = vmatpush.msra.mxu0 0.0
      %420 = vmatpush.msra.mxu0 %v403
      %421 = vmatmul.f32.gmra.mxu0 %v345
      %v422 = vpop.f32.mrf.mxu0
      %v423 = vadd.f32 0.0, %v422
      %424 = vmatmul.f32.gmra.mxu0 %v347
      %v425 = vpop.f32.mrf.mxu0
      %v426 = vadd.f32 0.0, %v425
      %427 = vmatmul.f32.gmra.mxu0 %v349
      %v428 = vpop.f32.mrf.mxu0
      %v429 = vadd.f32 0.0, %v428
      %430 = vmatmul.f32.gmra.mxu0 %v351
      %v431 = vpop.f32.mrf.mxu0
      %v432 = vadd.f32 0.0, %v431
      %433 = vmatmul.f32.gmra.mxu0 %v353
      %v434 = vpop.f32.mrf.mxu0
      %v435 = vadd.f32 0.0, %v434
      %436 = vmatmul.f32.gmra.mxu0 %v355
      %v437 = vpop.f32.mrf.mxu0
      %v438 = vadd.f32 0.0, %v437
      %439 = vmatmul.f32.gmra.mxu0 %v357
      %v440 = vpop.f32.mrf.mxu0
      %v441 = vadd.f32 0.0, %v440
      %442 = vmatmul.f32.gmra.mxu0 %v359
      %v443 = vpop.f32.mrf.mxu0
      %v444 = vadd.f32 0.0, %v443
      %445 = vmatmul.f32.gmra.mxu0 %v361
      %v446 = vpop.f32.mrf.mxu0
      %v447 = vadd.f32 0.0, %v446
      %448 = vmatmul.f32.gmra.mxu0 %v363
      %v449 = vpop.f32.mrf.mxu0
      %v450 = vadd.f32 0.0, %v449
      %451 = vmatmul.f32.gmra.mxu0 %v365
      %v452 = vpop.f32.mrf.mxu0
      %v453 = vadd.f32 0.0, %v452
      %454 = vmatmul.f32.gmra.mxu0 %v367
      %v455 = vpop.f32.mrf.mxu0
      %v456 = vadd.f32 0.0, %v455
      %457 = vmatmul.f32.gmra.mxu0 %v369
      %v458 = vpop.f32.mrf.mxu0
      %v459 = vadd.f32 0.0, %v458
      %460 = vmatmul.f32.gmra.mxu0 %v371
      %v461 = vpop.f32.mrf.mxu0
      %v462 = vadd.f32 0.0, %v461
      %463 = vmatmul.f32.gmra.mxu0 %v373
      %v464 = vpop.f32.mrf.mxu0
      %v465 = vadd.f32 0.0, %v464
      %466 = vmatmul.f32.gmra.mxu0 %v375
      %v467 = vpop.f32.mrf.mxu0
      %v468 = vadd.f32 0.0, %v467
      %469 = vmatmul.f32.gmra.mxu0 %v377
      %v470 = vpop.f32.mrf.mxu0
      %v471 = vadd.f32 0.0, %v470
      %472 = vmatmul.f32.gmra.mxu0 %v379
      %v473 = vpop.f32.mrf.mxu0
      %v474 = vadd.f32 0.0, %v473
      %475 = vmatmul.f32.gmra.mxu0 %v381
      %v476 = vpop.f32.mrf.mxu0
      %v477 = vadd.f32 0.0, %v476
      %478 = vmatmul.f32.gmra.mxu0 %v383
      %v479 = vpop.f32.mrf.mxu0
      %v480 = vadd.f32 0.0, %v479
      %481 = vmatmul.f32.gmra.mxu0 %v385
      %v482 = vpop.f32.mrf.mxu0
      %v483 = vadd.f32 0.0, %v482
      %484 = vmatmul.f32.gmra.mxu0 %v387
      %v485 = vpop.f32.mrf.mxu0
      %v486 = vadd.f32 0.0, %v485
      %487 = vmatmul.f32.gmra.mxu0 %v389
      %v488 = vpop.f32.mrf.mxu0
      %v489 = vadd.f32 0.0, %v488
      %490 = vmatmul.f32.gmra.mxu0 %v391
      %v491 = vpop.f32.mrf.mxu0
      %v492 = vadd.f32 0.0, %v491
      %493 = vmatmul.f32.gmra.mxu0 %v393
      %v494 = vpop.f32.mrf.mxu0
      %v495 = vadd.f32 0.0, %v494
      %496 = vmatmul.f32.gmra.mxu0 %v395
      %v497 = vpop.f32.mrf.mxu0
      %v498 = vadd.f32 0.0, %v497
      %499 = vmatmul.f32.gmra.mxu0 %v397
      %v500 = vpop.f32.mrf.mxu0
      %v501 = vadd.f32 0.0, %v500
      %502 = vmatmul.f32.gmra.mxu0 %v399
      %v503 = vpop.f32.mrf.mxu0
      %v504 = vadd.f32 0.0, %v503
      %505 = vdwg.mxu0
      %v506 = vsel %vm344, %v225, 0
      %v508 = vsel %vm344, %v226, 0
      %v510 = vsel %vm344, %v227, 0
      %v512 = vsel %vm344, %v228, 0
      %v514 = vsel %vm344, %v229, 0
      %v516 = vsel %vm344, %v230, 0
      %v518 = vsel %vm344, %v231, 0
      %v520 = vsel %vm344, %v232, 0
      %v522 = vsel %vm344, %v233, 0
      %v524 = vsel %vm344, %v234, 0
      %v526 = vsel %vm344, %v235, 0
      %v528 = vsel %vm344, %v236, 0
      %v530 = vsel %vm344, %v237, 0
      %v532 = vsel %vm344, %v238, 0
      %v534 = vsel %vm344, %v239, 0
      %v536 = vsel %vm344, %v240, 0
      %v538 = vsel %vm344, %v241, 0
      %v540 = vsel %vm344, %v242, 0
      %v542 = vsel %vm344, %v243, 0
      %v544 = vsel %vm344, %v244, 0
      %v546 = vsel %vm344, %v245, 0
      %v548 = vsel %vm344, %v246, 0
      %v550 = vsel %vm344, %v247, 0
      %v552 = vsel %vm344, %v248, 0
      %v554 = vsel %vm344, %v249, 0
      %v556 = vsel %vm344, %v250, 0
      %v558 = vsel %vm344, %v251, 0
      %v560 = vsel %vm344, %v252, 0
      %v563 = vsel %vm401, %v257, 0
      %565 = vmatpush.msra.mxu0 0.0
      %566 = vmatpush.msra.mxu0 0.0
      %567 = vmatpush.msra.mxu0 0.0
      %568 = vmatpush.msra.mxu0 0.0
      %569 = vmatpush.msra.mxu0 0.0
      %570 = vmatpush.msra.mxu0 0.0
      %571 = vmatpush.msra.mxu0 0.0
      %572 = vmatpush.msra.mxu0 0.0
      %573 = vmatpush.msra.mxu0 0.0
      %574 = vmatpush.msra.mxu0 0.0
      %575 = vmatpush.msra.mxu0 0.0
      %576 = vmatpush.msra.mxu0 0.0
      %577 = vmatpush.msra.mxu0 0.0
      %578 = vmatpush.msra.mxu0 0.0
      %579 = vmatpush.msra.mxu0 0.0
      %580 = vmatpush.msra.mxu0 %v563
      %581 = vmatmul.f32.gmra.mxu0 %v506
      %v582 = vpop.f32.mrf.mxu0
      %v583 = vadd.f32 %v423, %v582
      %584 = vmatmul.f32.gmra.mxu0 %v508
      %v585 = vpop.f32.mrf.mxu0
      %v586 = vadd.f32 %v426, %v585
      %587 = vmatmul.f32.gmra.mxu0 %v510
      %v588 = vpop.f32.mrf.mxu0
      %v589 = vadd.f32 %v429, %v588
      %590 = vmatmul.f32.gmra.mxu0 %v512
      %v591 = vpop.f32.mrf.mxu0
      %v592 = vadd.f32 %v432, %v591
      %593 = vmatmul.f32.gmra.mxu0 %v514
      %v594 = vpop.f32.mrf.mxu0
      %v595 = vadd.f32 %v435, %v594
      %596 = vmatmul.f32.gmra.mxu0 %v516
      %v597 = vpop.f32.mrf.mxu0
      %v598 = vadd.f32 %v438, %v597
      %599 = vmatmul.f32.gmra.mxu0 %v518
      %v600 = vpop.f32.mrf.mxu0
      %v601 = vadd.f32 %v441, %v600
      %602 = vmatmul.f32.gmra.mxu0 %v520
      %v603 = vpop.f32.mrf.mxu0
      %v604 = vadd.f32 %v444, %v603
      %605 = vmatmul.f32.gmra.mxu0 %v522
      %v606 = vpop.f32.mrf.mxu0
      %v607 = vadd.f32 %v447, %v606
      %608 = vmatmul.f32.gmra.mxu0 %v524
      %v609 = vpop.f32.mrf.mxu0
      %v610 = vadd.f32 %v450, %v609
      %611 = vmatmul.f32.gmra.mxu0 %v526
      %v612 = vpop.f32.mrf.mxu0
      %v613 = vadd.f32 %v453, %v612
      %614 = vmatmul.f32.gmra.mxu0 %v528
      %v615 = vpop.f32.mrf.mxu0
      %v616 = vadd.f32 %v456, %v615
      %617 = vmatmul.f32.gmra.mxu0 %v530
      %v618 = vpop.f32.mrf.mxu0
      %v619 = vadd.f32 %v459, %v618
      %620 = vmatmul.f32.gmra.mxu0 %v532
      %v621 = vpop.f32.mrf.mxu0
      %v622 = vadd.f32 %v462, %v621
      %623 = vmatmul.f32.gmra.mxu0 %v534
      %v624 = vpop.f32.mrf.mxu0
      %v625 = vadd.f32 %v465, %v624
      %626 = vmatmul.f32.gmra.mxu0 %v536
      %v627 = vpop.f32.mrf.mxu0
      %v628 = vadd.f32 %v468, %v627
      %629 = vmatmul.f32.gmra.mxu0 %v538
      %v630 = vpop.f32.mrf.mxu0
      %v631 = vadd.f32 %v471, %v630
      %632 = vmatmul.f32.gmra.mxu0 %v540
      %v633 = vpop.f32.mrf.mxu0
      %v634 = vadd.f32 %v474, %v633
      %635 = vmatmul.f32.gmra.mxu0 %v542
      %v636 = vpop.f32.mrf.mxu0
      %v637 = vadd.f32 %v477, %v636
      %638 = vmatmul.f32.gmra.mxu0 %v544
      %v639 = vpop.f32.mrf.mxu0
      %v640 = vadd.f32 %v480, %v639
      %641 = vmatmul.f32.gmra.mxu0 %v546
      %v642 = vpop.f32.mrf.mxu0
      %v643 = vadd.f32 %v483, %v642
      %644 = vmatmul.f32.gmra.mxu0 %v548
      %v645 = vpop.f32.mrf.mxu0
      %v646 = vadd.f32 %v486, %v645
      %647 = vmatmul.f32.gmra.mxu0 %v550
      %v648 = vpop.f32.mrf.mxu0
      %v649 = vadd.f32 %v489, %v648
      %650 = vmatmul.f32.gmra.mxu0 %v552
      %v651 = vpop.f32.mrf.mxu0
      %v652 = vadd.f32 %v492, %v651
      %653 = vmatmul.f32.gmra.mxu0 %v554
      %v654 = vpop.f32.mrf.mxu0
      %v655 = vadd.f32 %v495, %v654
      %656 = vmatmul.f32.gmra.mxu0 %v556
      %v657 = vpop.f32.mrf.mxu0
      %v658 = vadd.f32 %v498, %v657
      %659 = vmatmul.f32.gmra.mxu0 %v558
      %v660 = vpop.f32.mrf.mxu0
      %v661 = vadd.f32 %v501, %v660
      %662 = vmatmul.f32.gmra.mxu0 %v560
      %v663 = vpop.f32.mrf.mxu0
      %v664 = vadd.f32 %v504, %v663
      %665 = vdwg.mxu0
      %s666 = scalar_lea.vmem %s1, 8
      %v667 = vld [vmem:[%s666] sm:$0xf]
      %vm668 = vcmask 1045504
      %v669 = vrot.slane %v225, 2
      %v670 = vrot.slane %v226, 2
      %v671 = vsel %vm668, %v669, %v670
      %v672 = vrot.slane %v227, 2
      %v673 = vsel %vm668, %v670, %v672
      %v674 = vrot.slane %v228, 2
      %v675 = vsel %vm668, %v672, %v674
      %v676 = vrot.slane %v229, 2
      %v677 = vsel %vm668, %v674, %v676
      %v678 = vrot.slane %v230, 2
      %v679 = vsel %vm668, %v676, %v678
      %v680 = vrot.slane %v231, 2
      %v681 = vsel %vm668, %v678, %v680
      %v682 = vrot.slane %v232, 2
      %v683 = vsel %vm668, %v680, %v682
      %v684 = vrot.slane %v233, 2
      %v685 = vsel %vm668, %v682, %v684
      %v686 = vrot.slane %v234, 2
      %v687 = vsel %vm668, %v684, %v686
      %v688 = vrot.slane %v235, 2
      %v689 = vsel %vm668, %v686, %v688
      %v690 = vrot.slane %v236, 2
      %v691 = vsel %vm668, %v688, %v690
      %v692 = vrot.slane %v237, 2
      %v693 = vsel %vm668, %v690, %v692
      %v694 = vrot.slane %v238, 2
      %v695 = vsel %vm668, %v692, %v694
      %v696 = vrot.slane %v239, 2
      %v697 = vsel %vm668, %v694, %v696
      %v698 = vrot.slane %v240, 2
      %v699 = vsel %vm668, %v696, %v698
      %v700 = vrot.slane %v241, 2
      %v701 = vsel %vm668, %v698, %v700
      %v702 = vrot.slane %v242, 2
      %v703 = vsel %vm668, %v700, %v702
      %v704 = vrot.slane %v243, 2
      %v705 = vsel %vm668, %v702, %v704
      %v706 = vrot.slane %v244, 2
      %v707 = vsel %vm668, %v704, %v706
      %v708 = vrot.slane %v245, 2
      %v709 = vsel %vm668, %v706, %v708
      %v710 = vrot.slane %v246, 2
      %v711 = vsel %vm668, %v708, %v710
      %v712 = vrot.slane %v247, 2
      %v713 = vsel %vm668, %v710, %v712
      %v714 = vrot.slane %v248, 2
      %v715 = vsel %vm668, %v712, %v714
      %v716 = vrot.slane %v249, 2
      %v717 = vsel %vm668, %v714, %v716
      %v718 = vrot.slane %v250, 2
      %v719 = vsel %vm668, %v716, %v718
      %v720 = vrot.slane %v251, 2
      %v721 = vsel %vm668, %v718, %v720
      %v722 = vrot.slane %v252, 2
      %v723 = vsel %vm668, %v720, %v722
      %v724 = vsel %vm344, %v671, 0
      %v726 = vsel %vm344, %v673, 0
      %v728 = vsel %vm344, %v675, 0
      %v730 = vsel %vm344, %v677, 0
      %v732 = vsel %vm344, %v679, 0
      %v734 = vsel %vm344, %v681, 0
      %v736 = vsel %vm344, %v683, 0
      %v738 = vsel %vm344, %v685, 0
      %v740 = vsel %vm344, %v687, 0
      %v742 = vsel %vm344, %v689, 0
      %v744 = vsel %vm344, %v691, 0
      %v746 = vsel %vm344, %v693, 0
      %v748 = vsel %vm344, %v695, 0
      %v750 = vsel %vm344, %v697, 0
      %v752 = vsel %vm344, %v699, 0
      %v754 = vsel %vm344, %v701, 0
      %v756 = vsel %vm344, %v703, 0
      %v758 = vsel %vm344, %v705, 0
      %v760 = vsel %vm344, %v707, 0
      %v762 = vsel %vm344, %v709, 0
      %v764 = vsel %vm344, %v711, 0
      %v766 = vsel %vm344, %v713, 0
      %v768 = vsel %vm344, %v715, 0
      %v770 = vsel %vm344, %v717, 0
      %v772 = vsel %vm344, %v719, 0
      %v774 = vsel %vm344, %v721, 0
      %v776 = vsel %vm344, %v723, 0
      %v778 = vsel %vm344, %v722, 0
      %v781 = vsel %vm401, %v667, 0
      %783 = vmatpush.msra.mxu0 0.0
      %784 = vmatpush.msra.mxu0 0.0
      %785 = vmatpush.msra.mxu0 0.0
      %786 = vmatpush.msra.mxu0 0.0
      %787 = vmatpush.msra.mxu0 0.0
      %788 = vmatpush.msra.mxu0 0.0
      %789 = vmatpush.msra.mxu0 0.0
      %790 = vmatpush.msra.mxu0 0.0
      %791 = vmatpush.msra.mxu0 0.0
      %792 = vmatpush.msra.mxu0 0.0
      %793 = vmatpush.msra.mxu0 0.0
      %794 = vmatpush.msra.mxu0 0.0
      %795 = vmatpush.msra.mxu0 0.0
      %796 = vmatpush.msra.mxu0 0.0
      %797 = vmatpush.msra.mxu0 0.0
      %798 = vmatpush.msra.mxu0 %v781
      %799 = vmatmul.f32.gmra.mxu0 %v724
      %v800 = vpop.f32.mrf.mxu0
      %v801 = vadd.f32 0.0, %v800
      %802 = vmatmul.f32.gmra.mxu0 %v726
      %v803 = vpop.f32.mrf.mxu0
      %v804 = vadd.f32 0.0, %v803
      %805 = vmatmul.f32.gmra.mxu0 %v728
      %v806 = vpop.f32.mrf.mxu0
      %v807 = vadd.f32 0.0, %v806
      %808 = vmatmul.f32.gmra.mxu0 %v730
      %v809 = vpop.f32.mrf.mxu0
      %v810 = vadd.f32 0.0, %v809
      %811 = vmatmul.f32.gmra.mxu0 %v732
      %v812 = vpop.f32.mrf.mxu0
      %v813 = vadd.f32 0.0, %v812
      %814 = vmatmul.f32.gmra.mxu0 %v734
      %v815 = vpop.f32.mrf.mxu0
      %v816 = vadd.f32 0.0, %v815
      %817 = vmatmul.f32.gmra.mxu0 %v736
      %v818 = vpop.f32.mrf.mxu0
      %v819 = vadd.f32 0.0, %v818
      %820 = vmatmul.f32.gmra.mxu0 %v738
      %v821 = vpop.f32.mrf.mxu0
      %v822 = vadd.f32 0.0, %v821
      %823 = vmatmul.f32.gmra.mxu0 %v740
      %v824 = vpop.f32.mrf.mxu0
      %v825 = vadd.f32 0.0, %v824
      %826 = vmatmul.f32.gmra.mxu0 %v742
      %v827 = vpop.f32.mrf.mxu0
      %v828 = vadd.f32 0.0, %v827
      %829 = vmatmul.f32.gmra.mxu0 %v744
      %v830 = vpop.f32.mrf.mxu0
      %v831 = vadd.f32 0.0, %v830
      %832 = vmatmul.f32.gmra.mxu0 %v746
      %v833 = vpop.f32.mrf.mxu0
      %v834 = vadd.f32 0.0, %v833
      %835 = vmatmul.f32.gmra.mxu0 %v748
      %v836 = vpop.f32.mrf.mxu0
      %v837 = vadd.f32 0.0, %v836
      %838 = vmatmul.f32.gmra.mxu0 %v750
      %v839 = vpop.f32.mrf.mxu0
      %v840 = vadd.f32 0.0, %v839
      %841 = vmatmul.f32.gmra.mxu0 %v752
      %v842 = vpop.f32.mrf.mxu0
      %v843 = vadd.f32 0.0, %v842
      %844 = vmatmul.f32.gmra.mxu0 %v754
      %v845 = vpop.f32.mrf.mxu0
      %v846 = vadd.f32 0.0, %v845
      %847 = vmatmul.f32.gmra.mxu0 %v756
      %v848 = vpop.f32.mrf.mxu0
      %v849 = vadd.f32 0.0, %v848
      %850 = vmatmul.f32.gmra.mxu0 %v758
      %v851 = vpop.f32.mrf.mxu0
      %v852 = vadd.f32 0.0, %v851
      %853 = vmatmul.f32.gmra.mxu0 %v760
      %v854 = vpop.f32.mrf.mxu0
      %v855 = vadd.f32 0.0, %v854
      %856 = vmatmul.f32.gmra.mxu0 %v762
      %v857 = vpop.f32.mrf.mxu0
      %v858 = vadd.f32 0.0, %v857
      %859 = vmatmul.f32.gmra.mxu0 %v764
      %v860 = vpop.f32.mrf.mxu0
      %v861 = vadd.f32 0.0, %v860
      %862 = vmatmul.f32.gmra.mxu0 %v766
      %v863 = vpop.f32.mrf.mxu0
      %v864 = vadd.f32 0.0, %v863
      %865 = vmatmul.f32.gmra.mxu0 %v768
      %v866 = vpop.f32.mrf.mxu0
      %v867 = vadd.f32 0.0, %v866
      %868 = vmatmul.f32.gmra.mxu0 %v770
      %v869 = vpop.f32.mrf.mxu0
      %v870 = vadd.f32 0.0, %v869
      %871 = vmatmul.f32.gmra.mxu0 %v772
      %v872 = vpop.f32.mrf.mxu0
      %v873 = vadd.f32 0.0, %v872
      %874 = vmatmul.f32.gmra.mxu0 %v774
      %v875 = vpop.f32.mrf.mxu0
      %v876 = vadd.f32 0.0, %v875
      %877 = vmatmul.f32.gmra.mxu0 %v776
      %v878 = vpop.f32.mrf.mxu0
      %v879 = vadd.f32 0.0, %v878
      %880 = vmatmul.f32.gmra.mxu0 %v778
      %v881 = vpop.f32.mrf.mxu0
      %v882 = vadd.f32 0.0, %v881
      %883 = vdwg.mxu0
      %v884 = vadd.f32 %v583, %v801
      %v885 = vadd.f32 %v586, %v804
      %v886 = vadd.f32 %v589, %v807
      %v887 = vadd.f32 %v592, %v810
      %v888 = vadd.f32 %v595, %v813
      %v889 = vadd.f32 %v598, %v816
      %v890 = vadd.f32 %v601, %v819
      %v891 = vadd.f32 %v604, %v822
      %v892 = vadd.f32 %v607, %v825
      %v893 = vadd.f32 %v610, %v828
      %v894 = vadd.f32 %v613, %v831
      %v895 = vadd.f32 %v616, %v834
      %v896 = vadd.f32 %v619, %v837
      %v897 = vadd.f32 %v622, %v840
      %v898 = vadd.f32 %v625, %v843
      %v899 = vadd.f32 %v628, %v846
      %v900 = vadd.f32 %v631, %v849
      %v901 = vadd.f32 %v634, %v852
      %v902 = vadd.f32 %v637, %v855
      %v903 = vadd.f32 %v640, %v858
      %v904 = vadd.f32 %v643, %v861
      %v905 = vadd.f32 %v646, %v864
      %v906 = vadd.f32 %v649, %v867
      %v907 = vadd.f32 %v652, %v870
      %v908 = vadd.f32 %v655, %v873
      %v909 = vadd.f32 %v658, %v876
      %v910 = vadd.f32 %v661, %v879
      %v911 = vadd.f32 %v664, %v882
      %s912 = scalar_lea.vmem %s1, 12
      %v913 = vld [vmem:[%s912] sm:$0xf]
      %v915 = vsel %vm344, %v253, 0
      %v918 = vsel %vm344, %v254, 0
      %v921 = vsel %vm401, %v913, 0
      %923 = vmatpush.msra.mxu0 0.0
      %924 = vmatpush.msra.mxu0 0.0
      %925 = vmatpush.msra.mxu0 0.0
      %926 = vmatpush.msra.mxu0 0.0
      %927 = vmatpush.msra.mxu0 0.0
      %928 = vmatpush.msra.mxu0 0.0
      %929 = vmatpush.msra.mxu0 0.0
      %930 = vmatpush.msra.mxu0 0.0
      %931 = vmatpush.msra.mxu0 0.0
      %932 = vmatpush.msra.mxu0 0.0
      %933 = vmatpush.msra.mxu0 0.0
      %934 = vmatpush.msra.mxu0 0.0
      %935 = vmatpush.msra.mxu0 0.0
      %936 = vmatpush.msra.mxu0 0.0
      %937 = vmatpush.msra.mxu0 0.0
      %938 = vmatpush.msra.mxu0 %v921
      %939 = vmatmul.f32.gmra.mxu0 %v510
      %v940 = vpop.f32.mrf.mxu0
      %v941 = vadd.f32 0.0, %v940
      %942 = vmatmul.f32.gmra.mxu0 %v512
      %v943 = vpop.f32.mrf.mxu0
      %v944 = vadd.f32 0.0, %v943
      %945 = vmatmul.f32.gmra.mxu0 %v514
      %v946 = vpop.f32.mrf.mxu0
      %v947 = vadd.f32 0.0, %v946
      %948 = vmatmul.f32.gmra.mxu0 %v516
      %v949 = vpop.f32.mrf.mxu0
      %v950 = vadd.f32 0.0, %v949
      %951 = vmatmul.f32.gmra.mxu0 %v518
      %v952 = vpop.f32.mrf.mxu0
      %v953 = vadd.f32 0.0, %v952
      %954 = vmatmul.f32.gmra.mxu0 %v520
      %v955 = vpop.f32.mrf.mxu0
      %v956 = vadd.f32 0.0, %v955
      %957 = vmatmul.f32.gmra.mxu0 %v522
      %v958 = vpop.f32.mrf.mxu0
      %v959 = vadd.f32 0.0, %v958
      %960 = vmatmul.f32.gmra.mxu0 %v524
      %v961 = vpop.f32.mrf.mxu0
      %v962 = vadd.f32 0.0, %v961
      %963 = vmatmul.f32.gmra.mxu0 %v526
      %v964 = vpop.f32.mrf.mxu0
      %v965 = vadd.f32 0.0, %v964
      %966 = vmatmul.f32.gmra.mxu0 %v528
      %v967 = vpop.f32.mrf.mxu0
      %v968 = vadd.f32 0.0, %v967
      %969 = vmatmul.f32.gmra.mxu0 %v530
      %v970 = vpop.f32.mrf.mxu0
      %v971 = vadd.f32 0.0, %v970
      %972 = vmatmul.f32.gmra.mxu0 %v532
      %v973 = vpop.f32.mrf.mxu0
      %v974 = vadd.f32 0.0, %v973
      %975 = vmatmul.f32.gmra.mxu0 %v534
      %v976 = vpop.f32.mrf.mxu0
      %v977 = vadd.f32 0.0, %v976
      %978 = vmatmul.f32.gmra.mxu0 %v536
      %v979 = vpop.f32.mrf.mxu0
      %v980 = vadd.f32 0.0, %v979
      %981 = vmatmul.f32.gmra.mxu0 %v538
      %v982 = vpop.f32.mrf.mxu0
      %v983 = vadd.f32 0.0, %v982
      %984 = vmatmul.f32.gmra.mxu0 %v540
      %v985 = vpop.f32.mrf.mxu0
      %v986 = vadd.f32 0.0, %v985
      %987 = vmatmul.f32.gmra.mxu0 %v542
      %v988 = vpop.f32.mrf.mxu0
      %v989 = vadd.f32 0.0, %v988
      %990 = vmatmul.f32.gmra.mxu0 %v544
      %v991 = vpop.f32.mrf.mxu0
      %v992 = vadd.f32 0.0, %v991
      %993 = vmatmul.f32.gmra.mxu0 %v546
      %v994 = vpop.f32.mrf.mxu0
      %v995 = vadd.f32 0.0, %v994
      %996 = vmatmul.f32.gmra.mxu0 %v548
      %v997 = vpop.f32.mrf.mxu0
      %v998 = vadd.f32 0.0, %v997
      %999 = vmatmul.f32.gmra.mxu0 %v550
      %v1000 = vpop.f32.mrf.mxu0
      %v1001 = vadd.f32 0.0, %v1000
      %1002 = vmatmul.f32.gmra.mxu0 %v552
      %v1003 = vpop.f32.mrf.mxu0
      %v1004 = vadd.f32 0.0, %v1003
      %1005 = vmatmul.f32.gmra.mxu0 %v554
      %v1006 = vpop.f32.mrf.mxu0
      %v1007 = vadd.f32 0.0, %v1006
      %1008 = vmatmul.f32.gmra.mxu0 %v556
      %v1009 = vpop.f32.mrf.mxu0
      %v1010 = vadd.f32 0.0, %v1009
      %1011 = vmatmul.f32.gmra.mxu0 %v558
      %v1012 = vpop.f32.mrf.mxu0
      %v1013 = vadd.f32 0.0, %v1012
      %1014 = vmatmul.f32.gmra.mxu0 %v560
      %v1015 = vpop.f32.mrf.mxu0
      %v1016 = vadd.f32 0.0, %v1015
      %1017 = vmatmul.f32.gmra.mxu0 %v915
      %v1018 = vpop.f32.mrf.mxu0
      %v1019 = vadd.f32 0.0, %v1018
      %1020 = vmatmul.f32.gmra.mxu0 %v918
      %v1021 = vpop.f32.mrf.mxu0
      %v1022 = vadd.f32 0.0, %v1021
      %1023 = vdwg.mxu0
      %v1024 = vadd.f32 %v884, %v941
      %v1025 = vadd.f32 %v885, %v944
      %v1026 = vadd.f32 %v886, %v947
      %v1027 = vadd.f32 %v887, %v950
      %v1028 = vadd.f32 %v888, %v953
      %v1029 = vadd.f32 %v889, %v956
      %v1030 = vadd.f32 %v890, %v959
      %v1031 = vadd.f32 %v891, %v962
      %v1032 = vadd.f32 %v892, %v965
      %v1033 = vadd.f32 %v893, %v968
      %v1034 = vadd.f32 %v894, %v971
      %v1035 = vadd.f32 %v895, %v974
      %v1036 = vadd.f32 %v896, %v977
      %v1037 = vadd.f32 %v897, %v980
      %v1038 = vadd.f32 %v898, %v983
      %v1039 = vadd.f32 %v899, %v986
      %v1040 = vadd.f32 %v900, %v989
      %v1041 = vadd.f32 %v901, %v992
      %v1042 = vadd.f32 %v902, %v995
      %v1043 = vadd.f32 %v903, %v998
      %v1044 = vadd.f32 %v904, %v1001
      %v1045 = vadd.f32 %v905, %v1004
      %v1046 = vadd.f32 %v906, %v1007
      %v1047 = vadd.f32 %v907, %v1010
      %v1048 = vadd.f32 %v908, %v1013
      %v1049 = vadd.f32 %v909, %v1016
      %v1050 = vadd.f32 %v910, %v1019
      %v1051 = vadd.f32 %v911, %v1022
      %s1052 = scalar_lea.vmem %s1, 16
      %v1053 = vld [vmem:[%s1052] sm:$0xf]
      %v1054 = vrot.slane %v253, 1
      %v1055 = vsel %vm288, %v342, %v1054
      %v1056 = vrot.slane %v254, 1
      %v1057 = vsel %vm288, %v1054, %v1056
      %v1058 = vsel %vm344, %v1055, 0
      %v1060 = vsel %vm344, %v1057, 0
      %v1062 = vsel %vm344, %v1056, 0
      %v1065 = vsel %vm401, %v1053, 0
      %1067 = vmatpush.msra.mxu0 0.0
      %1068 = vmatpush.msra.mxu0 0.0
      %1069 = vmatpush.msra.mxu0 0.0
      %1070 = vmatpush.msra.mxu0 0.0
      %1071 = vmatpush.msra.mxu0 0.0
      %1072 = vmatpush.msra.mxu0 0.0
      %1073 = vmatpush.msra.mxu0 0.0
      %1074 = vmatpush.msra.mxu0 0.0
      %1075 = vmatpush.msra.mxu0 0.0
      %1076 = vmatpush.msra.mxu0 0.0
      %1077 = vmatpush.msra.mxu0 0.0
      %1078 = vmatpush.msra.mxu0 0.0
      %1079 = vmatpush.msra.mxu0 0.0
      %1080 = vmatpush.msra.mxu0 0.0
      %1081 = vmatpush.msra.mxu0 0.0
      %1082 = vmatpush.msra.mxu0 %v1065
      %1083 = vmatmul.f32.gmra.mxu0 %v349
      %v1084 = vpop.f32.mrf.mxu0
      %v1085 = vadd.f32 0.0, %v1084
      %1086 = vmatmul.f32.gmra.mxu0 %v351
      %v1087 = vpop.f32.mrf.mxu0
      %v1088 = vadd.f32 0.0, %v1087
      %1089 = vmatmul.f32.gmra.mxu0 %v353
      %v1090 = vpop.f32.mrf.mxu0
      %v1091 = vadd.f32 0.0, %v1090
      %1092 = vmatmul.f32.gmra.mxu0 %v355
      %v1093 = vpop.f32.mrf.mxu0
      %v1094 = vadd.f32 0.0, %v1093
      %1095 = vmatmul.f32.gmra.mxu0 %v357
      %v1096 = vpop.f32.mrf.mxu0
      %v1097 = vadd.f32 0.0, %v1096
      %1098 = vmatmul.f32.gmra.mxu0 %v359
      %v1099 = vpop.f32.mrf.mxu0
      %v1100 = vadd.f32 0.0, %v1099
      %1101 = vmatmul.f32.gmra.mxu0 %v361
      %v1102 = vpop.f32.mrf.mxu0
      %v1103 = vadd.f32 0.0, %v1102
      %1104 = vmatmul.f32.gmra.mxu0 %v363
      %v1105 = vpop.f32.mrf.mxu0
      %v1106 = vadd.f32 0.0, %v1105
      %1107 = vmatmul.f32.gmra.mxu0 %v365
      %v1108 = vpop.f32.mrf.mxu0
      %v1109 = vadd.f32 0.0, %v1108
      %1110 = vmatmul.f32.gmra.mxu0 %v367
      %v1111 = vpop.f32.mrf.mxu0
      %v1112 = vadd.f32 0.0, %v1111
      %1113 = vmatmul.f32.gmra.mxu0 %v369
      %v1114 = vpop.f32.mrf.mxu0
      %v1115 = vadd.f32 0.0, %v1114
      %1116 = vmatmul.f32.gmra.mxu0 %v371
      %v1117 = vpop.f32.mrf.mxu0
      %v1118 = vadd.f32 0.0, %v1117
      %1119 = vmatmul.f32.gmra.mxu0 %v373
      %v1120 = vpop.f32.mrf.mxu0
      %v1121 = vadd.f32 0.0, %v1120
      %1122 = vmatmul.f32.gmra.mxu0 %v375
      %v1123 = vpop.f32.mrf.mxu0
      %v1124 = vadd.f32 0.0, %v1123
      %1125 = vmatmul.f32.gmra.mxu0 %v377
      %v1126 = vpop.f32.mrf.mxu0
      %v1127 = vadd.f32 0.0, %v1126
      %1128 = vmatmul.f32.gmra.mxu0 %v379
      %v1129 = vpop.f32.mrf.mxu0
      %v1130 = vadd.f32 0.0, %v1129
      %1131 = vmatmul.f32.gmra.mxu0 %v381
      %v1132 = vpop.f32.mrf.mxu0
      %v1133 = vadd.f32 0.0, %v1132
      %1134 = vmatmul.f32.gmra.mxu0 %v383
      %v1135 = vpop.f32.mrf.mxu0
      %v1136 = vadd.f32 0.0, %v1135
      %1137 = vmatmul.f32.gmra.mxu0 %v385
      %v1138 = vpop.f32.mrf.mxu0
      %v1139 = vadd.f32 0.0, %v1138
      %1140 = vmatmul.f32.gmra.mxu0 %v387
      %v1141 = vpop.f32.mrf.mxu0
      %v1142 = vadd.f32 0.0, %v1141
      %1143 = vmatmul.f32.gmra.mxu0 %v389
      %v1144 = vpop.f32.mrf.mxu0
      %v1145 = vadd.f32 0.0, %v1144
      %1146 = vmatmul.f32.gmra.mxu0 %v391
      %v1147 = vpop.f32.mrf.mxu0
      %v1148 = vadd.f32 0.0, %v1147
      %1149 = vmatmul.f32.gmra.mxu0 %v393
      %v1150 = vpop.f32.mrf.mxu0
      %v1151 = vadd.f32 0.0, %v1150
      %1152 = vmatmul.f32.gmra.mxu0 %v395
      %v1153 = vpop.f32.mrf.mxu0
      %v1154 = vadd.f32 0.0, %v1153
      %1155 = vmatmul.f32.gmra.mxu0 %v397
      %v1156 = vpop.f32.mrf.mxu0
      %v1157 = vadd.f32 0.0, %v1156
      %1158 = vmatmul.f32.gmra.mxu0 %v1058
      %v1159 = vpop.f32.mrf.mxu0
      %v1160 = vadd.f32 0.0, %v1159
      %1161 = vmatmul.f32.gmra.mxu0 %v1060
      %v1162 = vpop.f32.mrf.mxu0
      %v1163 = vadd.f32 0.0, %v1162
      %1164 = vmatmul.f32.gmra.mxu0 %v1062
      %v1165 = vpop.f32.mrf.mxu0
      %v1166 = vadd.f32 0.0, %v1165
      %1167 = vdwg.mxu0
      %v1168 = vadd.f32 %v1024, %v1085
      %v1169 = vadd.f32 %v1025, %v1088
      %v1170 = vadd.f32 %v1026, %v1091
      %v1171 = vadd.f32 %v1027, %v1094
      %v1172 = vadd.f32 %v1028, %v1097
      %v1173 = vadd.f32 %v1029, %v1100
      %v1174 = vadd.f32 %v1030, %v1103
      %v1175 = vadd.f32 %v1031, %v1106
      %v1176 = vadd.f32 %v1032, %v1109
      %v1177 = vadd.f32 %v1033, %v1112
      %v1178 = vadd.f32 %v1034, %v1115
      %v1179 = vadd.f32 %v1035, %v1118
      %v1180 = vadd.f32 %v1036, %v1121
      %v1181 = vadd.f32 %v1037, %v1124
      %v1182 = vadd.f32 %v1038, %v1127
      %v1183 = vadd.f32 %v1039, %v1130
      %v1184 = vadd.f32 %v1040, %v1133
      %v1185 = vadd.f32 %v1041, %v1136
      %v1186 = vadd.f32 %v1042, %v1139
      %v1187 = vadd.f32 %v1043, %v1142
      %v1188 = vadd.f32 %v1044, %v1145
      %v1189 = vadd.f32 %v1045, %v1148
      %v1190 = vadd.f32 %v1046, %v1151
      %v1191 = vadd.f32 %v1047, %v1154
      %v1192 = vadd.f32 %v1048, %v1157
      %v1193 = vadd.f32 %v1049, %v1160
      %v1194 = vadd.f32 %v1050, %v1163
      %v1195 = vadd.f32 %v1051, %v1166
      %s1196 = scalar_lea.vmem %s1, 20
      %v1197 = vld [vmem:[%s1196] sm:$0xf]
      %v1198 = vrot.slane %v253, 2
      %v1199 = vsel %vm668, %v722, %v1198
      %v1200 = vrot.slane %v254, 2
      %v1201 = vsel %vm668, %v1198, %v1200
      %v1202 = vsel %vm344, %v1199, 0
      %v1204 = vsel %vm344, %v1201, 0
      %v1206 = vsel %vm344, %v1200, 0
      %v1209 = vsel %vm401, %v1197, 0
      %1211 = vmatpush.msra.mxu0 0.0
      %1212 = vmatpush.msra.mxu0 0.0
      %1213 = vmatpush.msra.mxu0 0.0
      %1214 = vmatpush.msra.mxu0 0.0
      %1215 = vmatpush.msra.mxu0 0.0
      %1216 = vmatpush.msra.mxu0 0.0
      %1217 = vmatpush.msra.mxu0 0.0
      %1218 = vmatpush.msra.mxu0 0.0
      %1219 = vmatpush.msra.mxu0 0.0
      %1220 = vmatpush.msra.mxu0 0.0
      %1221 = vmatpush.msra.mxu0 0.0
      %1222 = vmatpush.msra.mxu0 0.0
      %1223 = vmatpush.msra.mxu0 0.0
      %1224 = vmatpush.msra.mxu0 0.0
      %1225 = vmatpush.msra.mxu0 0.0
      %1226 = vmatpush.msra.mxu0 %v1209
      %1227 = vmatmul.f32.gmra.mxu0 %v728
      %v1228 = vpop.f32.mrf.mxu0
      %v1229 = vadd.f32 0.0, %v1228
      %1230 = vmatmul.f32.gmra.mxu0 %v730
      %v1231 = vpop.f32.mrf.mxu0
      %v1232 = vadd.f32 0.0, %v1231
      %1233 = vmatmul.f32.gmra.mxu0 %v732
      %v1234 = vpop.f32.mrf.mxu0
      %v1235 = vadd.f32 0.0, %v1234
      %1236 = vmatmul.f32.gmra.mxu0 %v734
      %v1237 = vpop.f32.mrf.mxu0
      %v1238 = vadd.f32 0.0, %v1237
      %1239 = vmatmul.f32.gmra.mxu0 %v736
      %v1240 = vpop.f32.mrf.mxu0
      %v1241 = vadd.f32 0.0, %v1240
      %1242 = vmatmul.f32.gmra.mxu0 %v738
      %v1243 = vpop.f32.mrf.mxu0
      %v1244 = vadd.f32 0.0, %v1243
      %1245 = vmatmul.f32.gmra.mxu0 %v740
      %v1246 = vpop.f32.mrf.mxu0
      %v1247 = vadd.f32 0.0, %v1246
      %1248 = vmatmul.f32.gmra.mxu0 %v742
      %v1249 = vpop.f32.mrf.mxu0
      %v1250 = vadd.f32 0.0, %v1249
      %1251 = vmatmul.f32.gmra.mxu0 %v744
      %v1252 = vpop.f32.mrf.mxu0
      %v1253 = vadd.f32 0.0, %v1252
      %1254 = vmatmul.f32.gmra.mxu0 %v746
      %v1255 = vpop.f32.mrf.mxu0
      %v1256 = vadd.f32 0.0, %v1255
      %1257 = vmatmul.f32.gmra.mxu0 %v748
      %v1258 = vpop.f32.mrf.mxu0
      %v1259 = vadd.f32 0.0, %v1258
      %1260 = vmatmul.f32.gmra.mxu0 %v750
      %v1261 = vpop.f32.mrf.mxu0
      %v1262 = vadd.f32 0.0, %v1261
      %1263 = vmatmul.f32.gmra.mxu0 %v752
      %v1264 = vpop.f32.mrf.mxu0
      %v1265 = vadd.f32 0.0, %v1264
      %1266 = vmatmul.f32.gmra.mxu0 %v754
      %v1267 = vpop.f32.mrf.mxu0
      %v1268 = vadd.f32 0.0, %v1267
      %1269 = vmatmul.f32.gmra.mxu0 %v756
      %v1270 = vpop.f32.mrf.mxu0
      %v1271 = vadd.f32 0.0, %v1270
      %1272 = vmatmul.f32.gmra.mxu0 %v758
      %v1273 = vpop.f32.mrf.mxu0
      %v1274 = vadd.f32 0.0, %v1273
      %1275 = vmatmul.f32.gmra.mxu0 %v760
      %v1276 = vpop.f32.mrf.mxu0
      %v1277 = vadd.f32 0.0, %v1276
      %1278 = vmatmul.f32.gmra.mxu0 %v762
      %v1279 = vpop.f32.mrf.mxu0
      %v1280 = vadd.f32 0.0, %v1279
      %1281 = vmatmul.f32.gmra.mxu0 %v764
      %v1282 = vpop.f32.mrf.mxu0
      %v1283 = vadd.f32 0.0, %v1282
      %1284 = vmatmul.f32.gmra.mxu0 %v766
      %v1285 = vpop.f32.mrf.mxu0
      %v1286 = vadd.f32 0.0, %v1285
      %1287 = vmatmul.f32.gmra.mxu0 %v768
      %v1288 = vpop.f32.mrf.mxu0
      %v1289 = vadd.f32 0.0, %v1288
      %1290 = vmatmul.f32.gmra.mxu0 %v770
      %v1291 = vpop.f32.mrf.mxu0
      %v1292 = vadd.f32 0.0, %v1291
      %1293 = vmatmul.f32.gmra.mxu0 %v772
      %v1294 = vpop.f32.mrf.mxu0
      %v1295 = vadd.f32 0.0, %v1294
      %1296 = vmatmul.f32.gmra.mxu0 %v774
      %v1297 = vpop.f32.mrf.mxu0
      %v1298 = vadd.f32 0.0, %v1297
      %1299 = vmatmul.f32.gmra.mxu0 %v776
      %v1300 = vpop.f32.mrf.mxu0
      %v1301 = vadd.f32 0.0, %v1300
      %1302 = vmatmul.f32.gmra.mxu0 %v1202
      %v1303 = vpop.f32.mrf.mxu0
      %v1304 = vadd.f32 0.0, %v1303
      %1305 = vmatmul.f32.gmra.mxu0 %v1204
      %v1306 = vpop.f32.mrf.mxu0
      %v1307 = vadd.f32 0.0, %v1306
      %1308 = vmatmul.f32.gmra.mxu0 %v1206
      %v1309 = vpop.f32.mrf.mxu0
      %v1310 = vadd.f32 0.0, %v1309
      %1311 = vdwg.mxu0
      %v1312 = vadd.f32 %v1168, %v1229
      %v1313 = vadd.f32 %v1169, %v1232
      %v1314 = vadd.f32 %v1170, %v1235
      %v1315 = vadd.f32 %v1171, %v1238
      %v1316 = vadd.f32 %v1172, %v1241
      %v1317 = vadd.f32 %v1173, %v1244
      %v1318 = vadd.f32 %v1174, %v1247
      %v1319 = vadd.f32 %v1175, %v1250
      %v1320 = vadd.f32 %v1176, %v1253
      %v1321 = vadd.f32 %v1177, %v1256
      %v1322 = vadd.f32 %v1178, %v1259
      %v1323 = vadd.f32 %v1179, %v1262
      %v1324 = vadd.f32 %v1180, %v1265
      %v1325 = vadd.f32 %v1181, %v1268
      %v1326 = vadd.f32 %v1182, %v1271
      %v1327 = vadd.f32 %v1183, %v1274
      %v1328 = vadd.f32 %v1184, %v1277
      %v1329 = vadd.f32 %v1185, %v1280
      %v1330 = vadd.f32 %v1186, %v1283
      %v1331 = vadd.f32 %v1187, %v1286
      %v1332 = vadd.f32 %v1188, %v1289
      %v1333 = vadd.f32 %v1189, %v1292
      %v1334 = vadd.f32 %v1190, %v1295
      %v1335 = vadd.f32 %v1191, %v1298
      %v1336 = vadd.f32 %v1192, %v1301
      %v1337 = vadd.f32 %v1193, %v1304
      %v1338 = vadd.f32 %v1194, %v1307
      %v1339 = vadd.f32 %v1195, %v1310
      %s1340 = scalar_lea.vmem %s1, 24
      %v1341 = vld [vmem:[%s1340] sm:$0xf]
      %v1343 = vsel %vm344, %v255, 0
      %v1346 = vsel %vm344, %v256, 0
      %v1349 = vsel %vm401, %v1341, 0
      %1351 = vmatpush.msra.mxu0 0.0
      %1352 = vmatpush.msra.mxu0 0.0
      %1353 = vmatpush.msra.mxu0 0.0
      %1354 = vmatpush.msra.mxu0 0.0
      %1355 = vmatpush.msra.mxu0 0.0
      %1356 = vmatpush.msra.mxu0 0.0
      %1357 = vmatpush.msra.mxu0 0.0
      %1358 = vmatpush.msra.mxu0 0.0
      %1359 = vmatpush.msra.mxu0 0.0
      %1360 = vmatpush.msra.mxu0 0.0
      %1361 = vmatpush.msra.mxu0 0.0
      %1362 = vmatpush.msra.mxu0 0.0
      %1363 = vmatpush.msra.mxu0 0.0
      %1364 = vmatpush.msra.mxu0 0.0
      %1365 = vmatpush.msra.mxu0 0.0
      %1366 = vmatpush.msra.mxu0 %v1349
      %1367 = vmatmul.f32.gmra.mxu0 %v514
      %v1368 = vpop.f32.mrf.mxu0
      %v1369 = vadd.f32 0.0, %v1368
      %1370 = vmatmul.f32.gmra.mxu0 %v516
      %v1371 = vpop.f32.mrf.mxu0
      %v1372 = vadd.f32 0.0, %v1371
      %1373 = vmatmul.f32.gmra.mxu0 %v518
      %v1374 = vpop.f32.mrf.mxu0
      %v1375 = vadd.f32 0.0, %v1374
      %1376 = vmatmul.f32.gmra.mxu0 %v520
      %v1377 = vpop.f32.mrf.mxu0
      %v1378 = vadd.f32 0.0, %v1377
      %1379 = vmatmul.f32.gmra.mxu0 %v522
      %v1380 = vpop.f32.mrf.mxu0
      %v1381 = vadd.f32 0.0, %v1380
      %1382 = vmatmul.f32.gmra.mxu0 %v524
      %v1383 = vpop.f32.mrf.mxu0
      %v1384 = vadd.f32 0.0, %v1383
      %1385 = vmatmul.f32.gmra.mxu0 %v526
      %v1386 = vpop.f32.mrf.mxu0
      %v1387 = vadd.f32 0.0, %v1386
      %1388 = vmatmul.f32.gmra.mxu0 %v528
      %v1389 = vpop.f32.mrf.mxu0
      %v1390 = vadd.f32 0.0, %v1389
      %1391 = vmatmul.f32.gmra.mxu0 %v530
      %v1392 = vpop.f32.mrf.mxu0
      %v1393 = vadd.f32 0.0, %v1392
      %1394 = vmatmul.f32.gmra.mxu0 %v532
      %v1395 = vpop.f32.mrf.mxu0
      %v1396 = vadd.f32 0.0, %v1395
      %1397 = vmatmul.f32.gmra.mxu0 %v534
      %v1398 = vpop.f32.mrf.mxu0
      %v1399 = vadd.f32 0.0, %v1398
      %1400 = vmatmul.f32.gmra.mxu0 %v536
      %v1401 = vpop.f32.mrf.mxu0
      %v1402 = vadd.f32 0.0, %v1401
      %1403 = vmatmul.f32.gmra.mxu0 %v538
      %v1404 = vpop.f32.mrf.mxu0
      %v1405 = vadd.f32 0.0, %v1404
      %1406 = vmatmul.f32.gmra.mxu0 %v540
      %v1407 = vpop.f32.mrf.mxu0
      %v1408 = vadd.f32 0.0, %v1407
      %1409 = vmatmul.f32.gmra.mxu0 %v542
      %v1410 = vpop.f32.mrf.mxu0
      %v1411 = vadd.f32 0.0, %v1410
      %1412 = vmatmul.f32.gmra.mxu0 %v544
      %v1413 = vpop.f32.mrf.mxu0
      %v1414 = vadd.f32 0.0, %v1413
      %1415 = vmatmul.f32.gmra.mxu0 %v546
      %v1416 = vpop.f32.mrf.mxu0
      %v1417 = vadd.f32 0.0, %v1416
      %1418 = vmatmul.f32.gmra.mxu0 %v548
      %v1419 = vpop.f32.mrf.mxu0
      %v1420 = vadd.f32 0.0, %v1419
      %1421 = vmatmul.f32.gmra.mxu0 %v550
      %v1422 = vpop.f32.mrf.mxu0
      %v1423 = vadd.f32 0.0, %v1422
      %1424 = vmatmul.f32.gmra.mxu0 %v552
      %v1425 = vpop.f32.mrf.mxu0
      %v1426 = vadd.f32 0.0, %v1425
      %1427 = vmatmul.f32.gmra.mxu0 %v554
      %v1428 = vpop.f32.mrf.mxu0
      %v1429 = vadd.f32 0.0, %v1428
      %1430 = vmatmul.f32.gmra.mxu0 %v556
      %v1431 = vpop.f32.mrf.mxu0
      %v1432 = vadd.f32 0.0, %v1431
      %1433 = vmatmul.f32.gmra.mxu0 %v558
      %v1434 = vpop.f32.mrf.mxu0
      %v1435 = vadd.f32 0.0, %v1434
      %1436 = vmatmul.f32.gmra.mxu0 %v560
      %v1437 = vpop.f32.mrf.mxu0
      %v1438 = vadd.f32 0.0, %v1437
      %1439 = vmatmul.f32.gmra.mxu0 %v915
      %v1440 = vpop.f32.mrf.mxu0
      %v1441 = vadd.f32 0.0, %v1440
      %1442 = vmatmul.f32.gmra.mxu0 %v918
      %v1443 = vpop.f32.mrf.mxu0
      %v1444 = vadd.f32 0.0, %v1443
      %1445 = vmatmul.f32.gmra.mxu0 %v1343
      %v1446 = vpop.f32.mrf.mxu0
      %v1447 = vadd.f32 0.0, %v1446
      %1448 = vmatmul.f32.gmra.mxu0 %v1346
      %v1449 = vpop.f32.mrf.mxu0
      %v1450 = vadd.f32 0.0, %v1449
      %1451 = vdwg.mxu0
      %v1452 = vadd.f32 %v1312, %v1369
      %v1453 = vadd.f32 %v1313, %v1372
      %v1454 = vadd.f32 %v1314, %v1375
      %v1455 = vadd.f32 %v1315, %v1378
      %v1456 = vadd.f32 %v1316, %v1381
      %v1457 = vadd.f32 %v1317, %v1384
      %v1458 = vadd.f32 %v1318, %v1387
      %v1459 = vadd.f32 %v1319, %v1390
      %v1460 = vadd.f32 %v1320, %v1393
      %v1461 = vadd.f32 %v1321, %v1396
      %v1462 = vadd.f32 %v1322, %v1399
      %v1463 = vadd.f32 %v1323, %v1402
      %v1464 = vadd.f32 %v1324, %v1405
      %v1465 = vadd.f32 %v1325, %v1408
      %v1466 = vadd.f32 %v1326, %v1411
      %v1467 = vadd.f32 %v1327, %v1414
      %v1468 = vadd.f32 %v1328, %v1417
      %v1469 = vadd.f32 %v1329, %v1420
      %v1470 = vadd.f32 %v1330, %v1423
      %v1471 = vadd.f32 %v1331, %v1426
      %v1472 = vadd.f32 %v1332, %v1429
      %v1473 = vadd.f32 %v1333, %v1432
      %v1474 = vadd.f32 %v1334, %v1435
      %v1475 = vadd.f32 %v1335, %v1438
      %v1476 = vadd.f32 %v1336, %v1441
      %v1477 = vadd.f32 %v1337, %v1444
      %v1478 = vadd.f32 %v1338, %v1447
      %v1479 = vadd.f32 %v1339, %v1450
      %s1480 = scalar_lea.vmem %s1, 28
      %v1481 = vld [vmem:[%s1480] sm:$0xf]
      %v1482 = vrot.slane %v255, 1
      %v1483 = vsel %vm288, %v1056, %v1482
      %v1484 = vrot.slane %v256, 1
      %v1485 = vsel %vm288, %v1482, %v1484
      %v1486 = vsel %vm344, %v1483, 0
      %v1488 = vsel %vm344, %v1485, 0
      %v1490 = vsel %vm344, %v1484, 0
      %v1493 = vsel %vm401, %v1481, 0
      %1495 = vmatpush.msra.mxu0 0.0
      %1496 = vmatpush.msra.mxu0 0.0
      %1497 = vmatpush.msra.mxu0 0.0
      %1498 = vmatpush.msra.mxu0 0.0
      %1499 = vmatpush.msra.mxu0 0.0
      %1500 = vmatpush.msra.mxu0 0.0
      %1501 = vmatpush.msra.mxu0 0.0
      %1502 = vmatpush.msra.mxu0 0.0
      %1503 = vmatpush.msra.mxu0 0.0
      %1504 = vmatpush.msra.mxu0 0.0
      %1505 = vmatpush.msra.mxu0 0.0
      %1506 = vmatpush.msra.mxu0 0.0
      %1507 = vmatpush.msra.mxu0 0.0
      %1508 = vmatpush.msra.mxu0 0.0
      %1509 = vmatpush.msra.mxu0 0.0
      %1510 = vmatpush.msra.mxu0 %v1493
      %1511 = vmatmul.f32.gmra.mxu0 %v353
      %v1512 = vpop.f32.mrf.mxu0
      %v1513 = vadd.f32 0.0, %v1512
      %1514 = vmatmul.f32.gmra.mxu0 %v355
      %v1515 = vpop.f32.mrf.mxu0
      %v1516 = vadd.f32 0.0, %v1515
      %1517 = vmatmul.f32.gmra.mxu0 %v357
      %v1518 = vpop.f32.mrf.mxu0
      %v1519 = vadd.f32 0.0, %v1518
      %1520 = vmatmul.f32.gmra.mxu0 %v359
      %v1521 = vpop.f32.mrf.mxu0
      %v1522 = vadd.f32 0.0, %v1521
      %1523 = vmatmul.f32.gmra.mxu0 %v361
      %v1524 = vpop.f32.mrf.mxu0
      %v1525 = vadd.f32 0.0, %v1524
      %1526 = vmatmul.f32.gmra.mxu0 %v363
      %v1527 = vpop.f32.mrf.mxu0
      %v1528 = vadd.f32 0.0, %v1527
      %1529 = vmatmul.f32.gmra.mxu0 %v365
      %v1530 = vpop.f32.mrf.mxu0
      %v1531 = vadd.f32 0.0, %v1530
      %1532 = vmatmul.f32.gmra.mxu0 %v367
      %v1533 = vpop.f32.mrf.mxu0
      %v1534 = vadd.f32 0.0, %v1533
      %1535 = vmatmul.f32.gmra.mxu0 %v369
      %v1536 = vpop.f32.mrf.mxu0
      %v1537 = vadd.f32 0.0, %v1536
      %1538 = vmatmul.f32.gmra.mxu0 %v371
      %v1539 = vpop.f32.mrf.mxu0
      %v1540 = vadd.f32 0.0, %v1539
      %1541 = vmatmul.f32.gmra.mxu0 %v373
      %v1542 = vpop.f32.mrf.mxu0
      %v1543 = vadd.f32 0.0, %v1542
      %1544 = vmatmul.f32.gmra.mxu0 %v375
      %v1545 = vpop.f32.mrf.mxu0
      %v1546 = vadd.f32 0.0, %v1545
      %1547 = vmatmul.f32.gmra.mxu0 %v377
      %v1548 = vpop.f32.mrf.mxu0
      %v1549 = vadd.f32 0.0, %v1548
      %1550 = vmatmul.f32.gmra.mxu0 %v379
      %v1551 = vpop.f32.mrf.mxu0
      %v1552 = vadd.f32 0.0, %v1551
      %1553 = vmatmul.f32.gmra.mxu0 %v381
      %v1554 = vpop.f32.mrf.mxu0
      %v1555 = vadd.f32 0.0, %v1554
      %1556 = vmatmul.f32.gmra.mxu0 %v383
      %v1557 = vpop.f32.mrf.mxu0
      %v1558 = vadd.f32 0.0, %v1557
      %1559 = vmatmul.f32.gmra.mxu0 %v385
      %v1560 = vpop.f32.mrf.mxu0
      %v1561 = vadd.f32 0.0, %v1560
      %1562 = vmatmul.f32.gmra.mxu0 %v387
      %v1563 = vpop.f32.mrf.mxu0
      %v1564 = vadd.f32 0.0, %v1563
      %1565 = vmatmul.f32.gmra.mxu0 %v389
      %v1566 = vpop.f32.mrf.mxu0
      %v1567 = vadd.f32 0.0, %v1566
      %1568 = vmatmul.f32.gmra.mxu0 %v391
      %v1569 = vpop.f32.mrf.mxu0
      %v1570 = vadd.f32 0.0, %v1569
      %1571 = vmatmul.f32.gmra.mxu0 %v393
      %v1572 = vpop.f32.mrf.mxu0
      %v1573 = vadd.f32 0.0, %v1572
      %1574 = vmatmul.f32.gmra.mxu0 %v395
      %v1575 = vpop.f32.mrf.mxu0
      %v1576 = vadd.f32 0.0, %v1575
      %1577 = vmatmul.f32.gmra.mxu0 %v397
      %v1578 = vpop.f32.mrf.mxu0
      %v1579 = vadd.f32 0.0, %v1578
      %1580 = vmatmul.f32.gmra.mxu0 %v1058
      %v1581 = vpop.f32.mrf.mxu0
      %v1582 = vadd.f32 0.0, %v1581
      %1583 = vmatmul.f32.gmra.mxu0 %v1060
      %v1584 = vpop.f32.mrf.mxu0
      %v1585 = vadd.f32 0.0, %v1584
      %1586 = vmatmul.f32.gmra.mxu0 %v1486
      %v1587 = vpop.f32.mrf.mxu0
      %v1588 = vadd.f32 0.0, %v1587
      %1589 = vmatmul.f32.gmra.mxu0 %v1488
      %v1590 = vpop.f32.mrf.mxu0
      %v1591 = vadd.f32 0.0, %v1590
      %1592 = vmatmul.f32.gmra.mxu0 %v1490
      %v1593 = vpop.f32.mrf.mxu0
      %v1594 = vadd.f32 0.0, %v1593
      %1595 = vdwg.mxu0
      %v1596 = vadd.f32 %v1452, %v1513
      %v1597 = vadd.f32 %v1453, %v1516
      %v1598 = vadd.f32 %v1454, %v1519
      %v1599 = vadd.f32 %v1455, %v1522
      %v1600 = vadd.f32 %v1456, %v1525
      %v1601 = vadd.f32 %v1457, %v1528
      %v1602 = vadd.f32 %v1458, %v1531
      %v1603 = vadd.f32 %v1459, %v1534
      %v1604 = vadd.f32 %v1460, %v1537
      %v1605 = vadd.f32 %v1461, %v1540
      %v1606 = vadd.f32 %v1462, %v1543
      %v1607 = vadd.f32 %v1463, %v1546
      %v1608 = vadd.f32 %v1464, %v1549
      %v1609 = vadd.f32 %v1465, %v1552
      %v1610 = vadd.f32 %v1466, %v1555
      %v1611 = vadd.f32 %v1467, %v1558
      %v1612 = vadd.f32 %v1468, %v1561
      %v1613 = vadd.f32 %v1469, %v1564
      %v1614 = vadd.f32 %v1470, %v1567
      %v1615 = vadd.f32 %v1471, %v1570
      %v1616 = vadd.f32 %v1472, %v1573
      %v1617 = vadd.f32 %v1473, %v1576
      %v1618 = vadd.f32 %v1474, %v1579
      %v1619 = vadd.f32 %v1475, %v1582
      %v1620 = vadd.f32 %v1476, %v1585
      %v1621 = vadd.f32 %v1477, %v1588
      %v1622 = vadd.f32 %v1478, %v1591
      %v1623 = vadd.f32 %v1479, %v1594
      %s1624 = scalar_lea.vmem %s1, 32
      %v1625 = vld [vmem:[%s1624] sm:$0xf]
      %v1626 = vrot.slane %v255, 2
      %v1627 = vsel %vm668, %v1200, %v1626
      %v1628 = vrot.slane %v256, 2
      %v1629 = vsel %vm668, %v1626, %v1628
      %v1630 = vsel %vm344, %v1627, 0
      %v1632 = vsel %vm344, %v1629, 0
      %v1634 = vsel %vm344, %v1628, 0
      %v1637 = vsel %vm401, %v1625, 0
      %1639 = vmatpush.msra.mxu0 0.0
      %1640 = vmatpush.msra.mxu0 0.0
      %1641 = vmatpush.msra.mxu0 0.0
      %1642 = vmatpush.msra.mxu0 0.0
      %1643 = vmatpush.msra.mxu0 0.0
      %1644 = vmatpush.msra.mxu0 0.0
      %1645 = vmatpush.msra.mxu0 0.0
      %1646 = vmatpush.msra.mxu0 0.0
      %1647 = vmatpush.msra.mxu0 0.0
      %1648 = vmatpush.msra.mxu0 0.0
      %1649 = vmatpush.msra.mxu0 0.0
      %1650 = vmatpush.msra.mxu0 0.0
      %1651 = vmatpush.msra.mxu0 0.0
      %1652 = vmatpush.msra.mxu0 0.0
      %1653 = vmatpush.msra.mxu0 0.0
      %1654 = vmatpush.msra.mxu0 %v1637
      %1655 = vmatmul.f32.gmra.mxu0 %v732
      %v1656 = vpop.f32.mrf.mxu0
      %v1657 = vadd.f32 0.0, %v1656
      %1658 = vmatmul.f32.gmra.mxu0 %v734
      %v1659 = vpop.f32.mrf.mxu0
      %v1660 = vadd.f32 0.0, %v1659
      %1661 = vmatmul.f32.gmra.mxu0 %v736
      %v1662 = vpop.f32.mrf.mxu0
      %v1663 = vadd.f32 0.0, %v1662
      %1664 = vmatmul.f32.gmra.mxu0 %v738
      %v1665 = vpop.f32.mrf.mxu0
      %v1666 = vadd.f32 0.0, %v1665
      %1667 = vmatmul.f32.gmra.mxu0 %v740
      %v1668 = vpop.f32.mrf.mxu0
      %v1669 = vadd.f32 0.0, %v1668
      %1670 = vmatmul.f32.gmra.mxu0 %v742
      %v1671 = vpop.f32.mrf.mxu0
      %v1672 = vadd.f32 0.0, %v1671
      %1673 = vmatmul.f32.gmra.mxu0 %v744
      %v1674 = vpop.f32.mrf.mxu0
      %v1675 = vadd.f32 0.0, %v1674
      %1676 = vmatmul.f32.gmra.mxu0 %v746
      %v1677 = vpop.f32.mrf.mxu0
      %v1678 = vadd.f32 0.0, %v1677
      %1679 = vmatmul.f32.gmra.mxu0 %v748
      %v1680 = vpop.f32.mrf.mxu0
      %v1681 = vadd.f32 0.0, %v1680
      %1682 = vmatmul.f32.gmra.mxu0 %v750
      %v1683 = vpop.f32.mrf.mxu0
      %v1684 = vadd.f32 0.0, %v1683
      %1685 = vmatmul.f32.gmra.mxu0 %v752
      %v1686 = vpop.f32.mrf.mxu0
      %v1687 = vadd.f32 0.0, %v1686
      %1688 = vmatmul.f32.gmra.mxu0 %v754
      %v1689 = vpop.f32.mrf.mxu0
      %v1690 = vadd.f32 0.0, %v1689
      %1691 = vmatmul.f32.gmra.mxu0 %v756
      %v1692 = vpop.f32.mrf.mxu0
      %v1693 = vadd.f32 0.0, %v1692
      %1694 = vmatmul.f32.gmra.mxu0 %v758
      %v1695 = vpop.f32.mrf.mxu0
      %v1696 = vadd.f32 0.0, %v1695
      %1697 = vmatmul.f32.gmra.mxu0 %v760
      %v1698 = vpop.f32.mrf.mxu0
      %v1699 = vadd.f32 0.0, %v1698
      %1700 = vmatmul.f32.gmra.mxu0 %v762
      %v1701 = vpop.f32.mrf.mxu0
      %v1702 = vadd.f32 0.0, %v1701
      %1703 = vmatmul.f32.gmra.mxu0 %v764
      %v1704 = vpop.f32.mrf.mxu0
      %v1705 = vadd.f32 0.0, %v1704
      %1706 = vmatmul.f32.gmra.mxu0 %v766
      %v1707 = vpop.f32.mrf.mxu0
      %v1708 = vadd.f32 0.0, %v1707
      %1709 = vmatmul.f32.gmra.mxu0 %v768
      %v1710 = vpop.f32.mrf.mxu0
      %v1711 = vadd.f32 0.0, %v1710
      %1712 = vmatmul.f32.gmra.mxu0 %v770
      %v1713 = vpop.f32.mrf.mxu0
      %v1714 = vadd.f32 0.0, %v1713
      %1715 = vmatmul.f32.gmra.mxu0 %v772
      %v1716 = vpop.f32.mrf.mxu0
      %v1717 = vadd.f32 0.0, %v1716
      %1718 = vmatmul.f32.gmra.mxu0 %v774
      %v1719 = vpop.f32.mrf.mxu0
      %v1720 = vadd.f32 0.0, %v1719
      %1721 = vmatmul.f32.gmra.mxu0 %v776
      %v1722 = vpop.f32.mrf.mxu0
      %v1723 = vadd.f32 0.0, %v1722
      %1724 = vmatmul.f32.gmra.mxu0 %v1202
      %v1725 = vpop.f32.mrf.mxu0
      %v1726 = vadd.f32 0.0, %v1725
      %1727 = vmatmul.f32.gmra.mxu0 %v1204
      %v1728 = vpop.f32.mrf.mxu0
      %v1729 = vadd.f32 0.0, %v1728
      %1730 = vmatmul.f32.gmra.mxu0 %v1630
      %v1731 = vpop.f32.mrf.mxu0
      %v1732 = vadd.f32 0.0, %v1731
      %1733 = vmatmul.f32.gmra.mxu0 %v1632
      %v1734 = vpop.f32.mrf.mxu0
      %v1735 = vadd.f32 0.0, %v1734
      %1736 = vmatmul.f32.gmra.mxu0 %v1634
      %v1737 = vpop.f32.mrf.mxu0
      %v1738 = vadd.f32 0.0, %v1737
      %1739 = vdwg.mxu0
      %v1740 = vadd.f32 %v1596, %v1657
      %v1741 = vadd.f32 %v1597, %v1660
      %v1742 = vadd.f32 %v1598, %v1663
      %v1743 = vadd.f32 %v1599, %v1666
      %v1744 = vadd.f32 %v1600, %v1669
      %v1745 = vadd.f32 %v1601, %v1672
      %v1746 = vadd.f32 %v1602, %v1675
      %v1747 = vadd.f32 %v1603, %v1678
      %v1748 = vadd.f32 %v1604, %v1681
      %v1749 = vadd.f32 %v1605, %v1684
      %v1750 = vadd.f32 %v1606, %v1687
      %v1751 = vadd.f32 %v1607, %v1690
      %v1752 = vadd.f32 %v1608, %v1693
      %v1753 = vadd.f32 %v1609, %v1696
      %v1754 = vadd.f32 %v1610, %v1699
      %v1755 = vadd.f32 %v1611, %v1702
      %v1756 = vadd.f32 %v1612, %v1705
      %v1757 = vadd.f32 %v1613, %v1708
      %v1758 = vadd.f32 %v1614, %v1711
      %v1759 = vadd.f32 %v1615, %v1714
      %v1760 = vadd.f32 %v1616, %v1717
      %v1761 = vadd.f32 %v1617, %v1720
      %v1762 = vadd.f32 %v1618, %v1723
      %v1763 = vadd.f32 %v1619, %v1726
      %v1764 = vadd.f32 %v1620, %v1729
      %v1765 = vadd.f32 %v1621, %v1732
      %v1766 = vadd.f32 %v1622, %v1735
      %v1767 = vadd.f32 %v1623, %v1738
      %v1768 = vld [vmem:[%s2] sm:$0x1]
      %v1770 = vperm.slane %v1768, 0
      %v1772 = vadd.f32 %v1740, %v1770
      %v1773 = vadd.f32 %v1741, %v1770
      %v1774 = vadd.f32 %v1742, %v1770
      %v1775 = vadd.f32 %v1743, %v1770
      %v1776 = vadd.f32 %v1744, %v1770
      %v1777 = vadd.f32 %v1745, %v1770
      %v1778 = vadd.f32 %v1746, %v1770
      %v1779 = vadd.f32 %v1747, %v1770
      %v1780 = vadd.f32 %v1748, %v1770
      %v1781 = vadd.f32 %v1749, %v1770
      %v1782 = vadd.f32 %v1750, %v1770
      %v1783 = vadd.f32 %v1751, %v1770
      %v1784 = vadd.f32 %v1752, %v1770
      %v1785 = vadd.f32 %v1753, %v1770
      %v1786 = vadd.f32 %v1754, %v1770
      %v1787 = vadd.f32 %v1755, %v1770
      %v1788 = vadd.f32 %v1756, %v1770
      %v1789 = vadd.f32 %v1757, %v1770
      %v1790 = vadd.f32 %v1758, %v1770
      %v1791 = vadd.f32 %v1759, %v1770
      %v1792 = vadd.f32 %v1760, %v1770
      %v1793 = vadd.f32 %v1761, %v1770
      %v1794 = vadd.f32 %v1762, %v1770
      %v1795 = vadd.f32 %v1763, %v1770
      %v1796 = vadd.f32 %v1764, %v1770
      %v1797 = vadd.f32 %v1765, %v1770
      %v1798 = vadd.f32 %v1766, %v1770
      %v1799 = vadd.f32 %v1767, %v1770
      %v1800 = vmax.f32 %v1772, 0.0
      %v1801 = vmax.f32 %v1773, 0.0
      %v1802 = vmax.f32 %v1774, 0.0
      %v1803 = vmax.f32 %v1775, 0.0
      %v1804 = vmax.f32 %v1776, 0.0
      %v1805 = vmax.f32 %v1777, 0.0
      %v1806 = vmax.f32 %v1778, 0.0
      %v1807 = vmax.f32 %v1779, 0.0
      %v1808 = vmax.f32 %v1780, 0.0
      %v1809 = vmax.f32 %v1781, 0.0
      %v1810 = vmax.f32 %v1782, 0.0
      %v1811 = vmax.f32 %v1783, 0.0
      %v1812 = vmax.f32 %v1784, 0.0
      %v1813 = vmax.f32 %v1785, 0.0
      %v1814 = vmax.f32 %v1786, 0.0
      %v1815 = vmax.f32 %v1787, 0.0
      %v1816 = vmax.f32 %v1788, 0.0
      %v1817 = vmax.f32 %v1789, 0.0
      %v1818 = vmax.f32 %v1790, 0.0
      %v1819 = vmax.f32 %v1791, 0.0
      %v1820 = vmax.f32 %v1792, 0.0
      %v1821 = vmax.f32 %v1793, 0.0
      %v1822 = vmax.f32 %v1794, 0.0
      %v1823 = vmax.f32 %v1795, 0.0
      %v1824 = vmax.f32 %v1796, 0.0
      %v1825 = vmax.f32 %v1797, 0.0
      %v1826 = vmax.f32 %v1798, 0.0
      %v1827 = vmax.f32 %v1799, 0.0
      %v1828 = vld [vmem:[%s3] sm:$0xff]
      %s1829 = scalar_lea.vmem %s3, 8
      %v1830 = vld [vmem:[%s1829] sm:$0xff]
      %v1855 = vrot.slane %v1800, 1
      %v1856 = vrot.slane %v1801, 1
      %v1857 = vsel %vm288, %v1855, %v1856
      %v1858 = vrot.slane %v1802, 1
      %v1859 = vsel %vm288, %v1856, %v1858
      %v1860 = vrot.slane %v1803, 1
      %v1861 = vsel %vm288, %v1858, %v1860
      %v1862 = vrot.slane %v1804, 1
      %v1863 = vsel %vm288, %v1860, %v1862
      %v1864 = vrot.slane %v1805, 1
      %v1865 = vsel %vm288, %v1862, %v1864
      %v1866 = vrot.slane %v1806, 1
      %v1867 = vsel %vm288, %v1864, %v1866
      %v1868 = vrot.slane %v1807, 1
      %v1869 = vsel %vm288, %v1866, %v1868
      %v1870 = vrot.slane %v1808, 1
      %v1871 = vsel %vm288, %v1868, %v1870
      %v1872 = vrot.slane %v1809, 1
      %v1873 = vsel %vm288, %v1870, %v1872
      %v1874 = vrot.slane %v1810, 1
      %v1875 = vsel %vm288, %v1872, %v1874
      %v1876 = vrot.slane %v1811, 1
      %v1877 = vsel %vm288, %v1874, %v1876
      %v1878 = vrot.slane %v1812, 1
      %v1879 = vsel %vm288, %v1876, %v1878
      %v1880 = vrot.slane %v1813, 1
      %v1881 = vsel %vm288, %v1878, %v1880
      %v1882 = vrot.slane %v1814, 1
      %v1883 = vsel %vm288, %v1880, %v1882
      %v1884 = vrot.slane %v1815, 1
      %v1885 = vsel %vm288, %v1882, %v1884
      %v1886 = vrot.slane %v1816, 1
      %v1887 = vsel %vm288, %v1884, %v1886
      %v1888 = vrot.slane %v1817, 1
      %v1889 = vsel %vm288, %v1886, %v1888
      %v1890 = vrot.slane %v1818, 1
      %v1891 = vsel %vm288, %v1888, %v1890
      %v1892 = vrot.slane %v1819, 1
      %v1893 = vsel %vm288, %v1890, %v1892
      %v1894 = vrot.slane %v1820, 1
      %v1895 = vsel %vm288, %v1892, %v1894
      %v1896 = vrot.slane %v1821, 1
      %v1897 = vsel %vm288, %v1894, %v1896
      %v1898 = vrot.slane %v1822, 1
      %v1899 = vsel %vm288, %v1896, %v1898
      %v1900 = vrot.slane %v1823, 1
      %v1901 = vsel %vm288, %v1898, %v1900
      %vm1902 = vcmask 64512
      %v1903 = vsel %vm1902, %v1857, 0
      %v1905 = vsel %vm1902, %v1859, 0
      %v1907 = vsel %vm1902, %v1861, 0
      %v1909 = vsel %vm1902, %v1863, 0
      %v1911 = vsel %vm1902, %v1865, 0
      %v1913 = vsel %vm1902, %v1867, 0
      %v1915 = vsel %vm1902, %v1869, 0
      %v1917 = vsel %vm1902, %v1871, 0
      %v1919 = vsel %vm1902, %v1873, 0
      %v1921 = vsel %vm1902, %v1875, 0
      %v1923 = vsel %vm1902, %v1877, 0
      %v1925 = vsel %vm1902, %v1879, 0
      %v1927 = vsel %vm1902, %v1881, 0
      %v1929 = vsel %vm1902, %v1883, 0
      %v1931 = vsel %vm1902, %v1885, 0
      %v1933 = vsel %vm1902, %v1887, 0
      %v1935 = vsel %vm1902, %v1889, 0
      %v1937 = vsel %vm1902, %v1891, 0
      %v1939 = vsel %vm1902, %v1893, 0
      %v1941 = vsel %vm1902, %v1895, 0
      %v1943 = vsel %vm1902, %v1897, 0
      %v1945 = vsel %vm1902, %v1899, 0
      %v1947 = vsel %vm1902, %v1901, 0
      %v1949 = vsel %vm1902, %v1900, 0
      %1951 = vmatpush.msra.mxu0 0.0
      %1952 = vmatpush.msra.mxu0 0.0
      %1953 = vmatpush.msra.mxu0 0.0
      %1954 = vmatpush.msra.mxu0 0.0
      %1955 = vmatpush.msra.mxu0 0.0
      %1956 = vmatpush.msra.mxu0 0.0
      %1957 = vmatpush.msra.mxu0 0.0
      %1958 = vmatpush.msra.mxu0 0.0
      %1959 = vmatpush.msra.mxu0 0.0
      %1960 = vmatpush.msra.mxu0 0.0
      %1961 = vmatpush.msra.mxu0 0.0
      %1962 = vmatpush.msra.mxu0 0.0
      %1963 = vmatpush.msra.mxu0 0.0
      %1964 = vmatpush.msra.mxu0 0.0
      %1965 = vmatpush.msra.mxu0 0.0
      %1966 = vmatpush.msra.mxu0 %v1830
      %1967 = vmatmul.f32.gmra.mxu0 %v1903
      %v1968 = vpop.f32.mrf.mxu0
      %v1969 = vadd.f32 0.0, %v1968
      %1970 = vmatmul.f32.gmra.mxu0 %v1905
      %v1971 = vpop.f32.mrf.mxu0
      %v1972 = vadd.f32 0.0, %v1971
      %1973 = vmatmul.f32.gmra.mxu0 %v1907
      %v1974 = vpop.f32.mrf.mxu0
      %v1975 = vadd.f32 0.0, %v1974
      %1976 = vmatmul.f32.gmra.mxu0 %v1909
      %v1977 = vpop.f32.mrf.mxu0
      %v1978 = vadd.f32 0.0, %v1977
      %1979 = vmatmul.f32.gmra.mxu0 %v1911
      %v1980 = vpop.f32.mrf.mxu0
      %v1981 = vadd.f32 0.0, %v1980
      %1982 = vmatmul.f32.gmra.mxu0 %v1913
      %v1983 = vpop.f32.mrf.mxu0
      %v1984 = vadd.f32 0.0, %v1983
      %1985 = vmatmul.f32.gmra.mxu0 %v1915
      %v1986 = vpop.f32.mrf.mxu0
      %v1987 = vadd.f32 0.0, %v1986
      %1988 = vmatmul.f32.gmra.mxu0 %v1917
      %v1989 = vpop.f32.mrf.mxu0
      %v1990 = vadd.f32 0.0, %v1989
      %1991 = vmatmul.f32.gmra.mxu0 %v1919
      %v1992 = vpop.f32.mrf.mxu0
      %v1993 = vadd.f32 0.0, %v1992
      %1994 = vmatmul.f32.gmra.mxu0 %v1921
      %v1995 = vpop.f32.mrf.mxu0
      %v1996 = vadd.f32 0.0, %v1995
      %1997 = vmatmul.f32.gmra.mxu0 %v1923
      %v1998 = vpop.f32.mrf.mxu0
      %v1999 = vadd.f32 0.0, %v1998
      %2000 = vmatmul.f32.gmra.mxu0 %v1925
      %v2001 = vpop.f32.mrf.mxu0
      %v2002 = vadd.f32 0.0, %v2001
      %2003 = vmatmul.f32.gmra.mxu0 %v1927
      %v2004 = vpop.f32.mrf.mxu0
      %v2005 = vadd.f32 0.0, %v2004
      %2006 = vmatmul.f32.gmra.mxu0 %v1929
      %v2007 = vpop.f32.mrf.mxu0
      %v2008 = vadd.f32 0.0, %v2007
      %2009 = vmatmul.f32.gmra.mxu0 %v1931
      %v2010 = vpop.f32.mrf.mxu0
      %v2011 = vadd.f32 0.0, %v2010
      %2012 = vmatmul.f32.gmra.mxu0 %v1933
      %v2013 = vpop.f32.mrf.mxu0
      %v2014 = vadd.f32 0.0, %v2013
      %2015 = vmatmul.f32.gmra.mxu0 %v1935
      %v2016 = vpop.f32.mrf.mxu0
      %v2017 = vadd.f32 0.0, %v2016
      %2018 = vmatmul.f32.gmra.mxu0 %v1937
      %v2019 = vpop.f32.mrf.mxu0
      %v2020 = vadd.f32 0.0, %v2019
      %2021 = vmatmul.f32.gmra.mxu0 %v1939
      %v2022 = vpop.f32.mrf.mxu0
      %v2023 = vadd.f32 0.0, %v2022
      %2024 = vmatmul.f32.gmra.mxu0 %v1941
      %v2025 = vpop.f32.mrf.mxu0
      %v2026 = vadd.f32 0.0, %v2025
      %2027 = vmatmul.f32.gmra.mxu0 %v1943
      %v2028 = vpop.f32.mrf.mxu0
      %v2029 = vadd.f32 0.0, %v2028
      %2030 = vmatmul.f32.gmra.mxu0 %v1945
      %v2031 = vpop.f32.mrf.mxu0
      %v2032 = vadd.f32 0.0, %v2031
      %2033 = vmatmul.f32.gmra.mxu0 %v1947
      %v2034 = vpop.f32.mrf.mxu0
      %v2035 = vadd.f32 0.0, %v2034
      %2036 = vmatmul.f32.gmra.mxu0 %v1949
      %v2037 = vpop.f32.mrf.mxu0
      %v2038 = vadd.f32 0.0, %v2037
      %2039 = vdwg.mxu0
      %v2040 = vsel %vm1902, %v1800, 0
      %v2042 = vsel %vm1902, %v1801, 0
      %v2044 = vsel %vm1902, %v1802, 0
      %v2046 = vsel %vm1902, %v1803, 0
      %v2048 = vsel %vm1902, %v1804, 0
      %v2050 = vsel %vm1902, %v1805, 0
      %v2052 = vsel %vm1902, %v1806, 0
      %v2054 = vsel %vm1902, %v1807, 0
      %v2056 = vsel %vm1902, %v1808, 0
      %v2058 = vsel %vm1902, %v1809, 0
      %v2060 = vsel %vm1902, %v1810, 0
      %v2062 = vsel %vm1902, %v1811, 0
      %v2064 = vsel %vm1902, %v1812, 0
      %v2066 = vsel %vm1902, %v1813, 0
      %v2068 = vsel %vm1902, %v1814, 0
      %v2070 = vsel %vm1902, %v1815, 0
      %v2072 = vsel %vm1902, %v1816, 0
      %v2074 = vsel %vm1902, %v1817, 0
      %v2076 = vsel %vm1902, %v1818, 0
      %v2078 = vsel %vm1902, %v1819, 0
      %v2080 = vsel %vm1902, %v1820, 0
      %v2082 = vsel %vm1902, %v1821, 0
      %v2084 = vsel %vm1902, %v1822, 0
      %v2086 = vsel %vm1902, %v1823, 0
      %2088 = vmatpush.msra.mxu0 0.0
      %2089 = vmatpush.msra.mxu0 0.0
      %2090 = vmatpush.msra.mxu0 0.0
      %2091 = vmatpush.msra.mxu0 0.0
      %2092 = vmatpush.msra.mxu0 0.0
      %2093 = vmatpush.msra.mxu0 0.0
      %2094 = vmatpush.msra.mxu0 0.0
      %2095 = vmatpush.msra.mxu0 0.0
      %2096 = vmatpush.msra.mxu0 0.0
      %2097 = vmatpush.msra.mxu0 0.0
      %2098 = vmatpush.msra.mxu0 0.0
      %2099 = vmatpush.msra.mxu0 0.0
      %2100 = vmatpush.msra.mxu0 0.0
      %2101 = vmatpush.msra.mxu0 0.0
      %2102 = vmatpush.msra.mxu0 0.0
      %2103 = vmatpush.msra.mxu0 %v1828
      %2104 = vmatmul.f32.gmra.mxu0 %v2040
      %v2105 = vpop.f32.mrf.mxu0
      %v2106 = vadd.f32 %v1969, %v2105
      %2107 = vmatmul.f32.gmra.mxu0 %v2042
      %v2108 = vpop.f32.mrf.mxu0
      %v2109 = vadd.f32 %v1972, %v2108
      %2110 = vmatmul.f32.gmra.mxu0 %v2044
      %v2111 = vpop.f32.mrf.mxu0
      %v2112 = vadd.f32 %v1975, %v2111
      %2113 = vmatmul.f32.gmra.mxu0 %v2046
      %v2114 = vpop.f32.mrf.mxu0
      %v2115 = vadd.f32 %v1978, %v2114
      %2116 = vmatmul.f32.gmra.mxu0 %v2048
      %v2117 = vpop.f32.mrf.mxu0
      %v2118 = vadd.f32 %v1981, %v2117
      %2119 = vmatmul.f32.gmra.mxu0 %v2050
      %v2120 = vpop.f32.mrf.mxu0
      %v2121 = vadd.f32 %v1984, %v2120
      %2122 = vmatmul.f32.gmra.mxu0 %v2052
      %v2123 = vpop.f32.mrf.mxu0
      %v2124 = vadd.f32 %v1987, %v2123
      %2125 = vmatmul.f32.gmra.mxu0 %v2054
      %v2126 = vpop.f32.mrf.mxu0
      %v2127 = vadd.f32 %v1990, %v2126
      %2128 = vmatmul.f32.gmra.mxu0 %v2056
      %v2129 = vpop.f32.mrf.mxu0
      %v2130 = vadd.f32 %v1993, %v2129
      %2131 = vmatmul.f32.gmra.mxu0 %v2058
      %v2132 = vpop.f32.mrf.mxu0
      %v2133 = vadd.f32 %v1996, %v2132
      %2134 = vmatmul.f32.gmra.mxu0 %v2060
      %v2135 = vpop.f32.mrf.mxu0
      %v2136 = vadd.f32 %v1999, %v2135
      %2137 = vmatmul.f32.gmra.mxu0 %v2062
      %v2138 = vpop.f32.mrf.mxu0
      %v2139 = vadd.f32 %v2002, %v2138
      %2140 = vmatmul.f32.gmra.mxu0 %v2064
      %v2141 = vpop.f32.mrf.mxu0
      %v2142 = vadd.f32 %v2005, %v2141
      %2143 = vmatmul.f32.gmra.mxu0 %v2066
      %v2144 = vpop.f32.mrf.mxu0
      %v2145 = vadd.f32 %v2008, %v2144
      %2146 = vmatmul.f32.gmra.mxu0 %v2068
      %v2147 = vpop.f32.mrf.mxu0
      %v2148 = vadd.f32 %v2011, %v2147
      %2149 = vmatmul.f32.gmra.mxu0 %v2070
      %v2150 = vpop.f32.mrf.mxu0
      %v2151 = vadd.f32 %v2014, %v2150
      %2152 = vmatmul.f32.gmra.mxu0 %v2072
      %v2153 = vpop.f32.mrf.mxu0
      %v2154 = vadd.f32 %v2017, %v2153
      %2155 = vmatmul.f32.gmra.mxu0 %v2074
      %v2156 = vpop.f32.mrf.mxu0
      %v2157 = vadd.f32 %v2020, %v2156
      %2158 = vmatmul.f32.gmra.mxu0 %v2076
      %v2159 = vpop.f32.mrf.mxu0
      %v2160 = vadd.f32 %v2023, %v2159
      %2161 = vmatmul.f32.gmra.mxu0 %v2078
      %v2162 = vpop.f32.mrf.mxu0
      %v2163 = vadd.f32 %v2026, %v2162
      %2164 = vmatmul.f32.gmra.mxu0 %v2080
      %v2165 = vpop.f32.mrf.mxu0
      %v2166 = vadd.f32 %v2029, %v2165
      %2167 = vmatmul.f32.gmra.mxu0 %v2082
      %v2168 = vpop.f32.mrf.mxu0
      %v2169 = vadd.f32 %v2032, %v2168
      %2170 = vmatmul.f32.gmra.mxu0 %v2084
      %v2171 = vpop.f32.mrf.mxu0
      %v2172 = vadd.f32 %v2035, %v2171
      %2173 = vmatmul.f32.gmra.mxu0 %v2086
      %v2174 = vpop.f32.mrf.mxu0
      %v2175 = vadd.f32 %v2038, %v2174
      %2176 = vdwg.mxu0
      %s2177 = scalar_lea.vmem %s3, 16
      %v2178 = vld [vmem:[%s2177] sm:$0xff]
      %v2179 = vrot.slane %v1800, 2
      %v2180 = vrot.slane %v1801, 2
      %v2181 = vsel %vm668, %v2179, %v2180
      %v2182 = vrot.slane %v1802, 2
      %v2183 = vsel %vm668, %v2180, %v2182
      %v2184 = vrot.slane %v1803, 2
      %v2185 = vsel %vm668, %v2182, %v2184
      %v2186 = vrot.slane %v1804, 2
      %v2187 = vsel %vm668, %v2184, %v2186
      %v2188 = vrot.slane %v1805, 2
      %v2189 = vsel %vm668, %v2186, %v2188
      %v2190 = vrot.slane %v1806, 2
      %v2191 = vsel %vm668, %v2188, %v2190
      %v2192 = vrot.slane %v1807, 2
      %v2193 = vsel %vm668, %v2190, %v2192
      %v2194 = vrot.slane %v1808, 2
      %v2195 = vsel %vm668, %v2192, %v2194
      %v2196 = vrot.slane %v1809, 2
      %v2197 = vsel %vm668, %v2194, %v2196
      %v2198 = vrot.slane %v1810, 2
      %v2199 = vsel %vm668, %v2196, %v2198
      %v2200 = vrot.slane %v1811, 2
      %v2201 = vsel %vm668, %v2198, %v2200
      %v2202 = vrot.slane %v1812, 2
      %v2203 = vsel %vm668, %v2200, %v2202
      %v2204 = vrot.slane %v1813, 2
      %v2205 = vsel %vm668, %v2202, %v2204
      %v2206 = vrot.slane %v1814, 2
      %v2207 = vsel %vm668, %v2204, %v2206
      %v2208 = vrot.slane %v1815, 2
      %v2209 = vsel %vm668, %v2206, %v2208
      %v2210 = vrot.slane %v1816, 2
      %v2211 = vsel %vm668, %v2208, %v2210
      %v2212 = vrot.slane %v1817, 2
      %v2213 = vsel %vm668, %v2210, %v2212
      %v2214 = vrot.slane %v1818, 2
      %v2215 = vsel %vm668, %v2212, %v2214
      %v2216 = vrot.slane %v1819, 2
      %v2217 = vsel %vm668, %v2214, %v2216
      %v2218 = vrot.slane %v1820, 2
      %v2219 = vsel %vm668, %v2216, %v2218
      %v2220 = vrot.slane %v1821, 2
      %v2221 = vsel %vm668, %v2218, %v2220
      %v2222 = vrot.slane %v1822, 2
      %v2223 = vsel %vm668, %v2220, %v2222
      %v2224 = vrot.slane %v1823, 2
      %v2225 = vsel %vm668, %v2222, %v2224
      %v2226 = vsel %vm1902, %v2181, 0
      %v2228 = vsel %vm1902, %v2183, 0
      %v2230 = vsel %vm1902, %v2185, 0
      %v2232 = vsel %vm1902, %v2187, 0
      %v2234 = vsel %vm1902, %v2189, 0
      %v2236 = vsel %vm1902, %v2191, 0
      %v2238 = vsel %vm1902, %v2193, 0
      %v2240 = vsel %vm1902, %v2195, 0
      %v2242 = vsel %vm1902, %v2197, 0
      %v2244 = vsel %vm1902, %v2199, 0
      %v2246 = vsel %vm1902, %v2201, 0
      %v2248 = vsel %vm1902, %v2203, 0
      %v2250 = vsel %vm1902, %v2205, 0
      %v2252 = vsel %vm1902, %v2207, 0
      %v2254 = vsel %vm1902, %v2209, 0
      %v2256 = vsel %vm1902, %v2211, 0
      %v2258 = vsel %vm1902, %v2213, 0
      %v2260 = vsel %vm1902, %v2215, 0
      %v2262 = vsel %vm1902, %v2217, 0
      %v2264 = vsel %vm1902, %v2219, 0
      %v2266 = vsel %vm1902, %v2221, 0
      %v2268 = vsel %vm1902, %v2223, 0
      %v2270 = vsel %vm1902, %v2225, 0
      %v2272 = vsel %vm1902, %v2224, 0
      %2274 = vmatpush.msra.mxu0 0.0
      %2275 = vmatpush.msra.mxu0 0.0
      %2276 = vmatpush.msra.mxu0 0.0
      %2277 = vmatpush.msra.mxu0 0.0
      %2278 = vmatpush.msra.mxu0 0.0
      %2279 = vmatpush.msra.mxu0 0.0
      %2280 = vmatpush.msra.mxu0 0.0
      %2281 = vmatpush.msra.mxu0 0.0
      %2282 = vmatpush.msra.mxu0 0.0
      %2283 = vmatpush.msra.mxu0 0.0
      %2284 = vmatpush.msra.mxu0 0.0
      %2285 = vmatpush.msra.mxu0 0.0
      %2286 = vmatpush.msra.mxu0 0.0
      %2287 = vmatpush.msra.mxu0 0.0
      %2288 = vmatpush.msra.mxu0 0.0
      %2289 = vmatpush.msra.mxu0 %v2178
      %2290 = vmatmul.f32.gmra.mxu0 %v2226
      %v2291 = vpop.f32.mrf.mxu0
      %v2292 = vadd.f32 0.0, %v2291
      %2293 = vmatmul.f32.gmra.mxu0 %v2228
      %v2294 = vpop.f32.mrf.mxu0
      %v2295 = vadd.f32 0.0, %v2294
      %2296 = vmatmul.f32.gmra.mxu0 %v2230
      %v2297 = vpop.f32.mrf.mxu0
      %v2298 = vadd.f32 0.0, %v2297
      %2299 = vmatmul.f32.gmra.mxu0 %v2232
      %v2300 = vpop.f32.mrf.mxu0
      %v2301 = vadd.f32 0.0, %v2300
      %2302 = vmatmul.f32.gmra.mxu0 %v2234
      %v2303 = vpop.f32.mrf.mxu0
      %v2304 = vadd.f32 0.0, %v2303
      %2305 = vmatmul.f32.gmra.mxu0 %v2236
      %v2306 = vpop.f32.mrf.mxu0
      %v2307 = vadd.f32 0.0, %v2306
      %2308 = vmatmul.f32.gmra.mxu0 %v2238
      %v2309 = vpop.f32.mrf.mxu0
      %v2310 = vadd.f32 0.0, %v2309
      %2311 = vmatmul.f32.gmra.mxu0 %v2240
      %v2312 = vpop.f32.mrf.mxu0
      %v2313 = vadd.f32 0.0, %v2312
      %2314 = vmatmul.f32.gmra.mxu0 %v2242
      %v2315 = vpop.f32.mrf.mxu0
      %v2316 = vadd.f32 0.0, %v2315
      %2317 = vmatmul.f32.gmra.mxu0 %v2244
      %v2318 = vpop.f32.mrf.mxu0
      %v2319 = vadd.f32 0.0, %v2318
      %2320 = vmatmul.f32.gmra.mxu0 %v2246
      %v2321 = vpop.f32.mrf.mxu0
      %v2322 = vadd.f32 0.0, %v2321
      %2323 = vmatmul.f32.gmra.mxu0 %v2248
      %v2324 = vpop.f32.mrf.mxu0
      %v2325 = vadd.f32 0.0, %v2324
      %2326 = vmatmul.f32.gmra.mxu0 %v2250
      %v2327 = vpop.f32.mrf.mxu0
      %v2328 = vadd.f32 0.0, %v2327
      %2329 = vmatmul.f32.gmra.mxu0 %v2252
      %v2330 = vpop.f32.mrf.mxu0
      %v2331 = vadd.f32 0.0, %v2330
      %2332 = vmatmul.f32.gmra.mxu0 %v2254
      %v2333 = vpop.f32.mrf.mxu0
      %v2334 = vadd.f32 0.0, %v2333
      %2335 = vmatmul.f32.gmra.mxu0 %v2256
      %v2336 = vpop.f32.mrf.mxu0
      %v2337 = vadd.f32 0.0, %v2336
      %2338 = vmatmul.f32.gmra.mxu0 %v2258
      %v2339 = vpop.f32.mrf.mxu0
      %v2340 = vadd.f32 0.0, %v2339
      %2341 = vmatmul.f32.gmra.mxu0 %v2260
      %v2342 = vpop.f32.mrf.mxu0
      %v2343 = vadd.f32 0.0, %v2342
      %2344 = vmatmul.f32.gmra.mxu0 %v2262
      %v2345 = vpop.f32.mrf.mxu0
      %v2346 = vadd.f32 0.0, %v2345
      %2347 = vmatmul.f32.gmra.mxu0 %v2264
      %v2348 = vpop.f32.mrf.mxu0
      %v2349 = vadd.f32 0.0, %v2348
      %2350 = vmatmul.f32.gmra.mxu0 %v2266
      %v2351 = vpop.f32.mrf.mxu0
      %v2352 = vadd.f32 0.0, %v2351
      %2353 = vmatmul.f32.gmra.mxu0 %v2268
      %v2354 = vpop.f32.mrf.mxu0
      %v2355 = vadd.f32 0.0, %v2354
      %2356 = vmatmul.f32.gmra.mxu0 %v2270
      %v2357 = vpop.f32.mrf.mxu0
      %v2358 = vadd.f32 0.0, %v2357
      %2359 = vmatmul.f32.gmra.mxu0 %v2272
      %v2360 = vpop.f32.mrf.mxu0
      %v2361 = vadd.f32 0.0, %v2360
      %2362 = vdwg.mxu0
      %v2363 = vadd.f32 %v2106, %v2292
      %v2364 = vadd.f32 %v2109, %v2295
      %v2365 = vadd.f32 %v2112, %v2298
      %v2366 = vadd.f32 %v2115, %v2301
      %v2367 = vadd.f32 %v2118, %v2304
      %v2368 = vadd.f32 %v2121, %v2307
      %v2369 = vadd.f32 %v2124, %v2310
      %v2370 = vadd.f32 %v2127, %v2313
      %v2371 = vadd.f32 %v2130, %v2316
      %v2372 = vadd.f32 %v2133, %v2319
      %v2373 = vadd.f32 %v2136, %v2322
      %v2374 = vadd.f32 %v2139, %v2325
      %v2375 = vadd.f32 %v2142, %v2328
      %v2376 = vadd.f32 %v2145, %v2331
      %v2377 = vadd.f32 %v2148, %v2334
      %v2378 = vadd.f32 %v2151, %v2337
      %v2379 = vadd.f32 %v2154, %v2340
      %v2380 = vadd.f32 %v2157, %v2343
      %v2381 = vadd.f32 %v2160, %v2346
      %v2382 = vadd.f32 %v2163, %v2349
      %v2383 = vadd.f32 %v2166, %v2352
      %v2384 = vadd.f32 %v2169, %v2355
      %v2385 = vadd.f32 %v2172, %v2358
      %v2386 = vadd.f32 %v2175, %v2361
      %s2387 = scalar_lea.vmem %s3, 24
      %v2388 = vld [vmem:[%s2387] sm:$0xff]
      %v2390 = vsel %vm1902, %v1824, 0
      %v2393 = vsel %vm1902, %v1825, 0
      %2395 = vmatpush.msra.mxu0 0.0
      %2396 = vmatpush.msra.mxu0 0.0
      %2397 = vmatpush.msra.mxu0 0.0
      %2398 = vmatpush.msra.mxu0 0.0
      %2399 = vmatpush.msra.mxu0 0.0
      %2400 = vmatpush.msra.mxu0 0.0
      %2401 = vmatpush.msra.mxu0 0.0
      %2402 = vmatpush.msra.mxu0 0.0
      %2403 = vmatpush.msra.mxu0 0.0
      %2404 = vmatpush.msra.mxu0 0.0
      %2405 = vmatpush.msra.mxu0 0.0
      %2406 = vmatpush.msra.mxu0 0.0
      %2407 = vmatpush.msra.mxu0 0.0
      %2408 = vmatpush.msra.mxu0 0.0
      %2409 = vmatpush.msra.mxu0 0.0
      %2410 = vmatpush.msra.mxu0 %v2388
      %2411 = vmatmul.f32.gmra.mxu0 %v2044
      %v2412 = vpop.f32.mrf.mxu0
      %v2413 = vadd.f32 0.0, %v2412
      %2414 = vmatmul.f32.gmra.mxu0 %v2046
      %v2415 = vpop.f32.mrf.mxu0
      %v2416 = vadd.f32 0.0, %v2415
      %2417 = vmatmul.f32.gmra.mxu0 %v2048
      %v2418 = vpop.f32.mrf.mxu0
      %v2419 = vadd.f32 0.0, %v2418
      %2420 = vmatmul.f32.gmra.mxu0 %v2050
      %v2421 = vpop.f32.mrf.mxu0
      %v2422 = vadd.f32 0.0, %v2421
      %2423 = vmatmul.f32.gmra.mxu0 %v2052
      %v2424 = vpop.f32.mrf.mxu0
      %v2425 = vadd.f32 0.0, %v2424
      %2426 = vmatmul.f32.gmra.mxu0 %v2054
      %v2427 = vpop.f32.mrf.mxu0
      %v2428 = vadd.f32 0.0, %v2427
      %2429 = vmatmul.f32.gmra.mxu0 %v2056
      %v2430 = vpop.f32.mrf.mxu0
      %v2431 = vadd.f32 0.0, %v2430
      %2432 = vmatmul.f32.gmra.mxu0 %v2058
      %v2433 = vpop.f32.mrf.mxu0
      %v2434 = vadd.f32 0.0, %v2433
      %2435 = vmatmul.f32.gmra.mxu0 %v2060
      %v2436 = vpop.f32.mrf.mxu0
      %v2437 = vadd.f32 0.0, %v2436
      %2438 = vmatmul.f32.gmra.mxu0 %v2062
      %v2439 = vpop.f32.mrf.mxu0
      %v2440 = vadd.f32 0.0, %v2439
      %2441 = vmatmul.f32.gmra.mxu0 %v2064
      %v2442 = vpop.f32.mrf.mxu0
      %v2443 = vadd.f32 0.0, %v2442
      %2444 = vmatmul.f32.gmra.mxu0 %v2066
      %v2445 = vpop.f32.mrf.mxu0
      %v2446 = vadd.f32 0.0, %v2445
      %2447 = vmatmul.f32.gmra.mxu0 %v2068
      %v2448 = vpop.f32.mrf.mxu0
      %v2449 = vadd.f32 0.0, %v2448
      %2450 = vmatmul.f32.gmra.mxu0 %v2070
      %v2451 = vpop.f32.mrf.mxu0
      %v2452 = vadd.f32 0.0, %v2451
      %2453 = vmatmul.f32.gmra.mxu0 %v2072
      %v2454 = vpop.f32.mrf.mxu0
      %v2455 = vadd.f32 0.0, %v2454
      %2456 = vmatmul.f32.gmra.mxu0 %v2074
      %v2457 = vpop.f32.mrf.mxu0
      %v2458 = vadd.f32 0.0, %v2457
      %2459 = vmatmul.f32.gmra.mxu0 %v2076
      %v2460 = vpop.f32.mrf.mxu0
      %v2461 = vadd.f32 0.0, %v2460
      %2462 = vmatmul.f32.gmra.mxu0 %v2078
      %v2463 = vpop.f32.mrf.mxu0
      %v2464 = vadd.f32 0.0, %v2463
      %2465 = vmatmul.f32.gmra.mxu0 %v2080
      %v2466 = vpop.f32.mrf.mxu0
      %v2467 = vadd.f32 0.0, %v2466
      %2468 = vmatmul.f32.gmra.mxu0 %v2082
      %v2469 = vpop.f32.mrf.mxu0
      %v2470 = vadd.f32 0.0, %v2469
      %2471 = vmatmul.f32.gmra.mxu0 %v2084
      %v2472 = vpop.f32.mrf.mxu0
      %v2473 = vadd.f32 0.0, %v2472
      %2474 = vmatmul.f32.gmra.mxu0 %v2086
      %v2475 = vpop.f32.mrf.mxu0
      %v2476 = vadd.f32 0.0, %v2475
      %2477 = vmatmul.f32.gmra.mxu0 %v2390
      %v2478 = vpop.f32.mrf.mxu0
      %v2479 = vadd.f32 0.0, %v2478
      %2480 = vmatmul.f32.gmra.mxu0 %v2393
      %v2481 = vpop.f32.mrf.mxu0
      %v2482 = vadd.f32 0.0, %v2481
      %2483 = vdwg.mxu0
      %v2484 = vadd.f32 %v2363, %v2413
      %v2485 = vadd.f32 %v2364, %v2416
      %v2486 = vadd.f32 %v2365, %v2419
      %v2487 = vadd.f32 %v2366, %v2422
      %v2488 = vadd.f32 %v2367, %v2425
      %v2489 = vadd.f32 %v2368, %v2428
      %v2490 = vadd.f32 %v2369, %v2431
      %v2491 = vadd.f32 %v2370, %v2434
      %v2492 = vadd.f32 %v2371, %v2437
      %v2493 = vadd.f32 %v2372, %v2440
      %v2494 = vadd.f32 %v2373, %v2443
      %v2495 = vadd.f32 %v2374, %v2446
      %v2496 = vadd.f32 %v2375, %v2449
      %v2497 = vadd.f32 %v2376, %v2452
      %v2498 = vadd.f32 %v2377, %v2455
      %v2499 = vadd.f32 %v2378, %v2458
      %v2500 = vadd.f32 %v2379, %v2461
      %v2501 = vadd.f32 %v2380, %v2464
      %v2502 = vadd.f32 %v2381, %v2467
      %v2503 = vadd.f32 %v2382, %v2470
      %v2504 = vadd.f32 %v2383, %v2473
      %v2505 = vadd.f32 %v2384, %v2476
      %v2506 = vadd.f32 %v2385, %v2479
      %v2507 = vadd.f32 %v2386, %v2482
      %s2508 = scalar_lea.vmem %s3, 32
      %v2509 = vld [vmem:[%s2508] sm:$0xff]
      %v2510 = vrot.slane %v1824, 1
      %v2511 = vsel %vm288, %v1900, %v2510
      %v2512 = vrot.slane %v1825, 1
      %v2513 = vsel %vm288, %v2510, %v2512
      %v2514 = vsel %vm1902, %v2511, 0
      %v2516 = vsel %vm1902, %v2513, 0
      %v2518 = vsel %vm1902, %v2512, 0
      %2520 = vmatpush.msra.mxu0 0.0
      %2521 = vmatpush.msra.mxu0 0.0
      %2522 = vmatpush.msra.mxu0 0.0
      %2523 = vmatpush.msra.mxu0 0.0
      %2524 = vmatpush.msra.mxu0 0.0
      %2525 = vmatpush.msra.mxu0 0.0
      %2526 = vmatpush.msra.mxu0 0.0
      %2527 = vmatpush.msra.mxu0 0.0
      %2528 = vmatpush.msra.mxu0 0.0
      %2529 = vmatpush.msra.mxu0 0.0
      %2530 = vmatpush.msra.mxu0 0.0
      %2531 = vmatpush.msra.mxu0 0.0
      %2532 = vmatpush.msra.mxu0 0.0
      %2533 = vmatpush.msra.mxu0 0.0
      %2534 = vmatpush.msra.mxu0 0.0
      %2535 = vmatpush.msra.mxu0 %v2509
      %2536 = vmatmul.f32.gmra.mxu0 %v1907
      %v2537 = vpop.f32.mrf.mxu0
      %v2538 = vadd.f32 0.0, %v2537
      %2539 = vmatmul.f32.gmra.mxu0 %v1909
      %v2540 = vpop.f32.mrf.mxu0
      %v2541 = vadd.f32 0.0, %v2540
      %2542 = vmatmul.f32.gmra.mxu0 %v1911
      %v2543 = vpop.f32.mrf.mxu0
      %v2544 = vadd.f32 0.0, %v2543
      %2545 = vmatmul.f32.gmra.mxu0 %v1913
      %v2546 = vpop.f32.mrf.mxu0
      %v2547 = vadd.f32 0.0, %v2546
      %2548 = vmatmul.f32.gmra.mxu0 %v1915
      %v2549 = vpop.f32.mrf.mxu0
      %v2550 = vadd.f32 0.0, %v2549
      %2551 = vmatmul.f32.gmra.mxu0 %v1917
      %v2552 = vpop.f32.mrf.mxu0
      %v2553 = vadd.f32 0.0, %v2552
      %2554 = vmatmul.f32.gmra.mxu0 %v1919
      %v2555 = vpop.f32.mrf.mxu0
      %v2556 = vadd.f32 0.0, %v2555
      %2557 = vmatmul.f32.gmra.mxu0 %v1921
      %v2558 = vpop.f32.mrf.mxu0
      %v2559 = vadd.f32 0.0, %v2558
      %2560 = vmatmul.f32.gmra.mxu0 %v1923
      %v2561 = vpop.f32.mrf.mxu0
      %v2562 = vadd.f32 0.0, %v2561
      %2563 = vmatmul.f32.gmra.mxu0 %v1925
      %v2564 = vpop.f32.mrf.mxu0
      %v2565 = vadd.f32 0.0, %v2564
      %2566 = vmatmul.f32.gmra.mxu0 %v1927
      %v2567 = vpop.f32.mrf.mxu0
      %v2568 = vadd.f32 0.0, %v2567
      %2569 = vmatmul.f32.gmra.mxu0 %v1929
      %v2570 = vpop.f32.mrf.mxu0
      %v2571 = vadd.f32 0.0, %v2570
      %2572 = vmatmul.f32.gmra.mxu0 %v1931
      %v2573 = vpop.f32.mrf.mxu0
      %v2574 = vadd.f32 0.0, %v2573
      %2575 = vmatmul.f32.gmra.mxu0 %v1933
      %v2576 = vpop.f32.mrf.mxu0
      %v2577 = vadd.f32 0.0, %v2576
      %2578 = vmatmul.f32.gmra.mxu0 %v1935
      %v2579 = vpop.f32.mrf.mxu0
      %v2580 = vadd.f32 0.0, %v2579
      %2581 = vmatmul.f32.gmra.mxu0 %v1937
      %v2582 = vpop.f32.mrf.mxu0
      %v2583 = vadd.f32 0.0, %v2582
      %2584 = vmatmul.f32.gmra.mxu0 %v1939
      %v2585 = vpop.f32.mrf.mxu0
      %v2586 = vadd.f32 0.0, %v2585
      %2587 = vmatmul.f32.gmra.mxu0 %v1941
      %v2588 = vpop.f32.mrf.mxu0
      %v2589 = vadd.f32 0.0, %v2588
      %2590 = vmatmul.f32.gmra.mxu0 %v1943
      %v2591 = vpop.f32.mrf.mxu0
      %v2592 = vadd.f32 0.0, %v2591
      %2593 = vmatmul.f32.gmra.mxu0 %v1945
      %v2594 = vpop.f32.mrf.mxu0
      %v2595 = vadd.f32 0.0, %v2594
      %2596 = vmatmul.f32.gmra.mxu0 %v1947
      %v2597 = vpop.f32.mrf.mxu0
      %v2598 = vadd.f32 0.0, %v2597
      %2599 = vmatmul.f32.gmra.mxu0 %v2514
      %v2600 = vpop.f32.mrf.mxu0
      %v2601 = vadd.f32 0.0, %v2600
      %2602 = vmatmul.f32.gmra.mxu0 %v2516
      %v2603 = vpop.f32.mrf.mxu0
      %v2604 = vadd.f32 0.0, %v2603
      %2605 = vmatmul.f32.gmra.mxu0 %v2518
      %v2606 = vpop.f32.mrf.mxu0
      %v2607 = vadd.f32 0.0, %v2606
      %2608 = vdwg.mxu0
      %v2609 = vadd.f32 %v2484, %v2538
      %v2610 = vadd.f32 %v2485, %v2541
      %v2611 = vadd.f32 %v2486, %v2544
      %v2612 = vadd.f32 %v2487, %v2547
      %v2613 = vadd.f32 %v2488, %v2550
      %v2614 = vadd.f32 %v2489, %v2553
      %v2615 = vadd.f32 %v2490, %v2556
      %v2616 = vadd.f32 %v2491, %v2559
      %v2617 = vadd.f32 %v2492, %v2562
      %v2618 = vadd.f32 %v2493, %v2565
      %v2619 = vadd.f32 %v2494, %v2568
      %v2620 = vadd.f32 %v2495, %v2571
      %v2621 = vadd.f32 %v2496, %v2574
      %v2622 = vadd.f32 %v2497, %v2577
      %v2623 = vadd.f32 %v2498, %v2580
      %v2624 = vadd.f32 %v2499, %v2583
      %v2625 = vadd.f32 %v2500, %v2586
      %v2626 = vadd.f32 %v2501, %v2589
      %v2627 = vadd.f32 %v2502, %v2592
      %v2628 = vadd.f32 %v2503, %v2595
      %v2629 = vadd.f32 %v2504, %v2598
      %v2630 = vadd.f32 %v2505, %v2601
      %v2631 = vadd.f32 %v2506, %v2604
      %v2632 = vadd.f32 %v2507, %v2607
      %s2633 = scalar_lea.vmem %s3, 40
      %v2634 = vld [vmem:[%s2633] sm:$0xff]
      %v2635 = vrot.slane %v1824, 2
      %v2636 = vsel %vm668, %v2224, %v2635
      %v2637 = vrot.slane %v1825, 2
      %v2638 = vsel %vm668, %v2635, %v2637
      %v2639 = vsel %vm1902, %v2636, 0
      %v2641 = vsel %vm1902, %v2638, 0
      %v2643 = vsel %vm1902, %v2637, 0
      %2645 = vmatpush.msra.mxu0 0.0
      %2646 = vmatpush.msra.mxu0 0.0
      %2647 = vmatpush.msra.mxu0 0.0
      %2648 = vmatpush.msra.mxu0 0.0
      %2649 = vmatpush.msra.mxu0 0.0
      %2650 = vmatpush.msra.mxu0 0.0
      %2651 = vmatpush.msra.mxu0 0.0
      %2652 = vmatpush.msra.mxu0 0.0
      %2653 = vmatpush.msra.mxu0 0.0
      %2654 = vmatpush.msra.mxu0 0.0
      %2655 = vmatpush.msra.mxu0 0.0
      %2656 = vmatpush.msra.mxu0 0.0
      %2657 = vmatpush.msra.mxu0 0.0
      %2658 = vmatpush.msra.mxu0 0.0
      %2659 = vmatpush.msra.mxu0 0.0
      %2660 = vmatpush.msra.mxu0 %v2634
      %2661 = vmatmul.f32.gmra.mxu0 %v2230
      %v2662 = vpop.f32.mrf.mxu0
      %v2663 = vadd.f32 0.0, %v2662
      %2664 = vmatmul.f32.gmra.mxu0 %v2232
      %v2665 = vpop.f32.mrf.mxu0
      %v2666 = vadd.f32 0.0, %v2665
      %2667 = vmatmul.f32.gmra.mxu0 %v2234
      %v2668 = vpop.f32.mrf.mxu0
      %v2669 = vadd.f32 0.0, %v2668
      %2670 = vmatmul.f32.gmra.mxu0 %v2236
      %v2671 = vpop.f32.mrf.mxu0
      %v2672 = vadd.f32 0.0, %v2671
      %2673 = vmatmul.f32.gmra.mxu0 %v2238
      %v2674 = vpop.f32.mrf.mxu0
      %v2675 = vadd.f32 0.0, %v2674
      %2676 = vmatmul.f32.gmra.mxu0 %v2240
      %v2677 = vpop.f32.mrf.mxu0
      %v2678 = vadd.f32 0.0, %v2677
      %2679 = vmatmul.f32.gmra.mxu0 %v2242
      %v2680 = vpop.f32.mrf.mxu0
      %v2681 = vadd.f32 0.0, %v2680
      %2682 = vmatmul.f32.gmra.mxu0 %v2244
      %v2683 = vpop.f32.mrf.mxu0
      %v2684 = vadd.f32 0.0, %v2683
      %2685 = vmatmul.f32.gmra.mxu0 %v2246
      %v2686 = vpop.f32.mrf.mxu0
      %v2687 = vadd.f32 0.0, %v2686
      %2688 = vmatmul.f32.gmra.mxu0 %v2248
      %v2689 = vpop.f32.mrf.mxu0
      %v2690 = vadd.f32 0.0, %v2689
      %2691 = vmatmul.f32.gmra.mxu0 %v2250
      %v2692 = vpop.f32.mrf.mxu0
      %v2693 = vadd.f32 0.0, %v2692
      %2694 = vmatmul.f32.gmra.mxu0 %v2252
      %v2695 = vpop.f32.mrf.mxu0
      %v2696 = vadd.f32 0.0, %v2695
      %2697 = vmatmul.f32.gmra.mxu0 %v2254
      %v2698 = vpop.f32.mrf.mxu0
      %v2699 = vadd.f32 0.0, %v2698
      %2700 = vmatmul.f32.gmra.mxu0 %v2256
      %v2701 = vpop.f32.mrf.mxu0
      %v2702 = vadd.f32 0.0, %v2701
      %2703 = vmatmul.f32.gmra.mxu0 %v2258
      %v2704 = vpop.f32.mrf.mxu0
      %v2705 = vadd.f32 0.0, %v2704
      %2706 = vmatmul.f32.gmra.mxu0 %v2260
      %v2707 = vpop.f32.mrf.mxu0
      %v2708 = vadd.f32 0.0, %v2707
      %2709 = vmatmul.f32.gmra.mxu0 %v2262
      %v2710 = vpop.f32.mrf.mxu0
      %v2711 = vadd.f32 0.0, %v2710
      %2712 = vmatmul.f32.gmra.mxu0 %v2264
      %v2713 = vpop.f32.mrf.mxu0
      %v2714 = vadd.f32 0.0, %v2713
      %2715 = vmatmul.f32.gmra.mxu0 %v2266
      %v2716 = vpop.f32.mrf.mxu0
      %v2717 = vadd.f32 0.0, %v2716
      %2718 = vmatmul.f32.gmra.mxu0 %v2268
      %v2719 = vpop.f32.mrf.mxu0
      %v2720 = vadd.f32 0.0, %v2719
      %2721 = vmatmul.f32.gmra.mxu0 %v2270
      %v2722 = vpop.f32.mrf.mxu0
      %v2723 = vadd.f32 0.0, %v2722
      %2724 = vmatmul.f32.gmra.mxu0 %v2639
      %v2725 = vpop.f32.mrf.mxu0
      %v2726 = vadd.f32 0.0, %v2725
      %2727 = vmatmul.f32.gmra.mxu0 %v2641
      %v2728 = vpop.f32.mrf.mxu0
      %v2729 = vadd.f32 0.0, %v2728
      %2730 = vmatmul.f32.gmra.mxu0 %v2643
      %v2731 = vpop.f32.mrf.mxu0
      %v2732 = vadd.f32 0.0, %v2731
      %2733 = vdwg.mxu0
      %v2734 = vadd.f32 %v2609, %v2663
      %v2735 = vadd.f32 %v2610, %v2666
      %v2736 = vadd.f32 %v2611, %v2669
      %v2737 = vadd.f32 %v2612, %v2672
      %v2738 = vadd.f32 %v2613, %v2675
      %v2739 = vadd.f32 %v2614, %v2678
      %v2740 = vadd.f32 %v2615, %v2681
      %v2741 = vadd.f32 %v2616, %v2684
      %v2742 = vadd.f32 %v2617, %v2687
      %v2743 = vadd.f32 %v2618, %v2690
      %v2744 = vadd.f32 %v2619, %v2693
      %v2745 = vadd.f32 %v2620, %v2696
      %v2746 = vadd.f32 %v2621, %v2699
      %v2747 = vadd.f32 %v2622, %v2702
      %v2748 = vadd.f32 %v2623, %v2705
      %v2749 = vadd.f32 %v2624, %v2708
      %v2750 = vadd.f32 %v2625, %v2711
      %v2751 = vadd.f32 %v2626, %v2714
      %v2752 = vadd.f32 %v2627, %v2717
      %v2753 = vadd.f32 %v2628, %v2720
      %v2754 = vadd.f32 %v2629, %v2723
      %v2755 = vadd.f32 %v2630, %v2726
      %v2756 = vadd.f32 %v2631, %v2729
      %v2757 = vadd.f32 %v2632, %v2732
      %s2758 = scalar_lea.vmem %s3, 48
      %v2759 = vld [vmem:[%s2758] sm:$0xff]
      %v2761 = vsel %vm1902, %v1826, 0
      %v2764 = vsel %vm1902, %v1827, 0
      %2766 = vmatpush.msra.mxu0 0.0
      %2767 = vmatpush.msra.mxu0 0.0
      %2768 = vmatpush.msra.mxu0 0.0
      %2769 = vmatpush.msra.mxu0 0.0
      %2770 = vmatpush.msra.mxu0 0.0
      %2771 = vmatpush.msra.mxu0 0.0
      %2772 = vmatpush.msra.mxu0 0.0
      %2773 = vmatpush.msra.mxu0 0.0
      %2774 = vmatpush.msra.mxu0 0.0
      %2775 = vmatpush.msra.mxu0 0.0
      %2776 = vmatpush.msra.mxu0 0.0
      %2777 = vmatpush.msra.mxu0 0.0
      %2778 = vmatpush.msra.mxu0 0.0
      %2779 = vmatpush.msra.mxu0 0.0
      %2780 = vmatpush.msra.mxu0 0.0
      %2781 = vmatpush.msra.mxu0 %v2759
      %2782 = vmatmul.f32.gmra.mxu0 %v2048
      %v2783 = vpop.f32.mrf.mxu0
      %v2784 = vadd.f32 0.0, %v2783
      %2785 = vmatmul.f32.gmra.mxu0 %v2050
      %v2786 = vpop.f32.mrf.mxu0
      %v2787 = vadd.f32 0.0, %v2786
      %2788 = vmatmul.f32.gmra.mxu0 %v2052
      %v2789 = vpop.f32.mrf.mxu0
      %v2790 = vadd.f32 0.0, %v2789
      %2791 = vmatmul.f32.gmra.mxu0 %v2054
      %v2792 = vpop.f32.mrf.mxu0
      %v2793 = vadd.f32 0.0, %v2792
      %2794 = vmatmul.f32.gmra.mxu0 %v2056
      %v2795 = vpop.f32.mrf.mxu0
      %v2796 = vadd.f32 0.0, %v2795
      %2797 = vmatmul.f32.gmra.mxu0 %v2058
      %v2798 = vpop.f32.mrf.mxu0
      %v2799 = vadd.f32 0.0, %v2798
      %2800 = vmatmul.f32.gmra.mxu0 %v2060
      %v2801 = vpop.f32.mrf.mxu0
      %v2802 = vadd.f32 0.0, %v2801
      %2803 = vmatmul.f32.gmra.mxu0 %v2062
      %v2804 = vpop.f32.mrf.mxu0
      %v2805 = vadd.f32 0.0, %v2804
      %2806 = vmatmul.f32.gmra.mxu0 %v2064
      %v2807 = vpop.f32.mrf.mxu0
      %v2808 = vadd.f32 0.0, %v2807
      %2809 = vmatmul.f32.gmra.mxu0 %v2066
      %v2810 = vpop.f32.mrf.mxu0
      %v2811 = vadd.f32 0.0, %v2810
      %2812 = vmatmul.f32.gmra.mxu0 %v2068
      %v2813 = vpop.f32.mrf.mxu0
      %v2814 = vadd.f32 0.0, %v2813
      %2815 = vmatmul.f32.gmra.mxu0 %v2070
      %v2816 = vpop.f32.mrf.mxu0
      %v2817 = vadd.f32 0.0, %v2816
      %2818 = vmatmul.f32.gmra.mxu0 %v2072
      %v2819 = vpop.f32.mrf.mxu0
      %v2820 = vadd.f32 0.0, %v2819
      %2821 = vmatmul.f32.gmra.mxu0 %v2074
      %v2822 = vpop.f32.mrf.mxu0
      %v2823 = vadd.f32 0.0, %v2822
      %2824 = vmatmul.f32.gmra.mxu0 %v2076
      %v2825 = vpop.f32.mrf.mxu0
      %v2826 = vadd.f32 0.0, %v2825
      %2827 = vmatmul.f32.gmra.mxu0 %v2078
      %v2828 = vpop.f32.mrf.mxu0
      %v2829 = vadd.f32 0.0, %v2828
      %2830 = vmatmul.f32.gmra.mxu0 %v2080
      %v2831 = vpop.f32.mrf.mxu0
      %v2832 = vadd.f32 0.0, %v2831
      %2833 = vmatmul.f32.gmra.mxu0 %v2082
      %v2834 = vpop.f32.mrf.mxu0
      %v2835 = vadd.f32 0.0, %v2834
      %2836 = vmatmul.f32.gmra.mxu0 %v2084
      %v2837 = vpop.f32.mrf.mxu0
      %v2838 = vadd.f32 0.0, %v2837
      %2839 = vmatmul.f32.gmra.mxu0 %v2086
      %v2840 = vpop.f32.mrf.mxu0
      %v2841 = vadd.f32 0.0, %v2840
      %2842 = vmatmul.f32.gmra.mxu0 %v2390
      %v2843 = vpop.f32.mrf.mxu0
      %v2844 = vadd.f32 0.0, %v2843
      %2845 = vmatmul.f32.gmra.mxu0 %v2393
      %v2846 = vpop.f32.mrf.mxu0
      %v2847 = vadd.f32 0.0, %v2846
      %2848 = vmatmul.f32.gmra.mxu0 %v2761
      %v2849 = vpop.f32.mrf.mxu0
      %v2850 = vadd.f32 0.0, %v2849
      %2851 = vmatmul.f32.gmra.mxu0 %v2764
      %v2852 = vpop.f32.mrf.mxu0
      %v2853 = vadd.f32 0.0, %v2852
      %2854 = vdwg.mxu0
      %v2855 = vadd.f32 %v2734, %v2784
      %v2856 = vadd.f32 %v2735, %v2787
      %v2857 = vadd.f32 %v2736, %v2790
      %v2858 = vadd.f32 %v2737, %v2793
      %v2859 = vadd.f32 %v2738, %v2796
      %v2860 = vadd.f32 %v2739, %v2799
      %v2861 = vadd.f32 %v2740, %v2802
      %v2862 = vadd.f32 %v2741, %v2805
      %v2863 = vadd.f32 %v2742, %v2808
      %v2864 = vadd.f32 %v2743, %v2811
      %v2865 = vadd.f32 %v2744, %v2814
      %v2866 = vadd.f32 %v2745, %v2817
      %v2867 = vadd.f32 %v2746, %v2820
      %v2868 = vadd.f32 %v2747, %v2823
      %v2869 = vadd.f32 %v2748, %v2826
      %v2870 = vadd.f32 %v2749, %v2829
      %v2871 = vadd.f32 %v2750, %v2832
      %v2872 = vadd.f32 %v2751, %v2835
      %v2873 = vadd.f32 %v2752, %v2838
      %v2874 = vadd.f32 %v2753, %v2841
      %v2875 = vadd.f32 %v2754, %v2844
      %v2876 = vadd.f32 %v2755, %v2847
      %v2877 = vadd.f32 %v2756, %v2850
      %v2878 = vadd.f32 %v2757, %v2853
      %s2879 = scalar_lea.vmem %s3, 56
      %v2880 = vld [vmem:[%s2879] sm:$0xff]
      %v2881 = vrot.slane %v1826, 1
      %v2882 = vsel %vm288, %v2512, %v2881
      %v2883 = vrot.slane %v1827, 1
      %v2884 = vsel %vm288, %v2881, %v2883
      %v2885 = vsel %vm1902, %v2882, 0
      %v2887 = vsel %vm1902, %v2884, 0
      %v2889 = vsel %vm1902, %v2883, 0
      %2891 = vmatpush.msra.mxu0 0.0
      %2892 = vmatpush.msra.mxu0 0.0
      %2893 = vmatpush.msra.mxu0 0.0
      %2894 = vmatpush.msra.mxu0 0.0
      %2895 = vmatpush.msra.mxu0 0.0
      %2896 = vmatpush.msra.mxu0 0.0
      %2897 = vmatpush.msra.mxu0 0.0
      %2898 = vmatpush.msra.mxu0 0.0
      %2899 = vmatpush.msra.mxu0 0.0
      %2900 = vmatpush.msra.mxu0 0.0
      %2901 = vmatpush.msra.mxu0 0.0
      %2902 = vmatpush.msra.mxu0 0.0
      %2903 = vmatpush.msra.mxu0 0.0
      %2904 = vmatpush.msra.mxu0 0.0
      %2905 = vmatpush.msra.mxu0 0.0
      %2906 = vmatpush.msra.mxu0 %v2880
      %2907 = vmatmul.f32.gmra.mxu0 %v1911
      %v2908 = vpop.f32.mrf.mxu0
      %v2909 = vadd.f32 0.0, %v2908
      %2910 = vmatmul.f32.gmra.mxu0 %v1913
      %v2911 = vpop.f32.mrf.mxu0
      %v2912 = vadd.f32 0.0, %v2911
      %2913 = vmatmul.f32.gmra.mxu0 %v1915
      %v2914 = vpop.f32.mrf.mxu0
      %v2915 = vadd.f32 0.0, %v2914
      %2916 = vmatmul.f32.gmra.mxu0 %v1917
      %v2917 = vpop.f32.mrf.mxu0
      %v2918 = vadd.f32 0.0, %v2917
      %2919 = vmatmul.f32.gmra.mxu0 %v1919
      %v2920 = vpop.f32.mrf.mxu0
      %v2921 = vadd.f32 0.0, %v2920
      %2922 = vmatmul.f32.gmra.mxu0 %v1921
      %v2923 = vpop.f32.mrf.mxu0
      %v2924 = vadd.f32 0.0, %v2923
      %2925 = vmatmul.f32.gmra.mxu0 %v1923
      %v2926 = vpop.f32.mrf.mxu0
      %v2927 = vadd.f32 0.0, %v2926
      %2928 = vmatmul.f32.gmra.mxu0 %v1925
      %v2929 = vpop.f32.mrf.mxu0
      %v2930 = vadd.f32 0.0, %v2929
      %2931 = vmatmul.f32.gmra.mxu0 %v1927
      %v2932 = vpop.f32.mrf.mxu0
      %v2933 = vadd.f32 0.0, %v2932
      %2934 = vmatmul.f32.gmra.mxu0 %v1929
      %v2935 = vpop.f32.mrf.mxu0
      %v2936 = vadd.f32 0.0, %v2935
      %2937 = vmatmul.f32.gmra.mxu0 %v1931
      %v2938 = vpop.f32.mrf.mxu0
      %v2939 = vadd.f32 0.0, %v2938
      %2940 = vmatmul.f32.gmra.mxu0 %v1933
      %v2941 = vpop.f32.mrf.mxu0
      %v2942 = vadd.f32 0.0, %v2941
      %2943 = vmatmul.f32.gmra.mxu0 %v1935
      %v2944 = vpop.f32.mrf.mxu0
      %v2945 = vadd.f32 0.0, %v2944
      %2946 = vmatmul.f32.gmra.mxu0 %v1937
      %v2947 = vpop.f32.mrf.mxu0
      %v2948 = vadd.f32 0.0, %v2947
      %2949 = vmatmul.f32.gmra.mxu0 %v1939
      %v2950 = vpop.f32.mrf.mxu0
      %v2951 = vadd.f32 0.0, %v2950
      %2952 = vmatmul.f32.gmra.mxu0 %v1941
      %v2953 = vpop.f32.mrf.mxu0
      %v2954 = vadd.f32 0.0, %v2953
      %2955 = vmatmul.f32.gmra.mxu0 %v1943
      %v2956 = vpop.f32.mrf.mxu0
      %v2957 = vadd.f32 0.0, %v2956
      %2958 = vmatmul.f32.gmra.mxu0 %v1945
      %v2959 = vpop.f32.mrf.mxu0
      %v2960 = vadd.f32 0.0, %v2959
      %2961 = vmatmul.f32.gmra.mxu0 %v1947
      %v2962 = vpop.f32.mrf.mxu0
      %v2963 = vadd.f32 0.0, %v2962
      %2964 = vmatmul.f32.gmra.mxu0 %v2514
      %v2965 = vpop.f32.mrf.mxu0
      %v2966 = vadd.f32 0.0, %v2965
      %2967 = vmatmul.f32.gmra.mxu0 %v2516
      %v2968 = vpop.f32.mrf.mxu0
      %v2969 = vadd.f32 0.0, %v2968
      %2970 = vmatmul.f32.gmra.mxu0 %v2885
      %v2971 = vpop.f32.mrf.mxu0
      %v2972 = vadd.f32 0.0, %v2971
      %2973 = vmatmul.f32.gmra.mxu0 %v2887
      %v2974 = vpop.f32.mrf.mxu0
      %v2975 = vadd.f32 0.0, %v2974
      %2976 = vmatmul.f32.gmra.mxu0 %v2889
      %v2977 = vpop.f32.mrf.mxu0
      %v2978 = vadd.f32 0.0, %v2977
      %2979 = vdwg.mxu0
      %v2980 = vadd.f32 %v2855, %v2909
      %v2981 = vadd.f32 %v2856, %v2912
      %v2982 = vadd.f32 %v2857, %v2915
      %v2983 = vadd.f32 %v2858, %v2918
      %v2984 = vadd.f32 %v2859, %v2921
      %v2985 = vadd.f32 %v2860, %v2924
      %v2986 = vadd.f32 %v2861, %v2927
      %v2987 = vadd.f32 %v2862, %v2930
      %v2988 = vadd.f32 %v2863, %v2933
      %v2989 = vadd.f32 %v2864, %v2936
      %v2990 = vadd.f32 %v2865, %v2939
      %v2991 = vadd.f32 %v2866, %v2942
      %v2992 = vadd.f32 %v2867, %v2945
      %v2993 = vadd.f32 %v2868, %v2948
      %v2994 = vadd.f32 %v2869, %v2951
      %v2995 = vadd.f32 %v2870, %v2954
      %v2996 = vadd.f32 %v2871, %v2957
      %v2997 = vadd.f32 %v2872, %v2960
      %v2998 = vadd.f32 %v2873, %v2963
      %v2999 = vadd.f32 %v2874, %v2966
      %v3000 = vadd.f32 %v2875, %v2969
      %v3001 = vadd.f32 %v2876, %v2972
      %v3002 = vadd.f32 %v2877, %v2975
      %v3003 = vadd.f32 %v2878, %v2978
      %s3004 = scalar_lea.vmem %s3, 64
      %v3005 = vld [vmem:[%s3004] sm:$0xff]
      %v3006 = vrot.slane %v1826, 2
      %v3007 = vsel %vm668, %v2637, %v3006
      %v3008 = vrot.slane %v1827, 2
      %v3009 = vsel %vm668, %v3006, %v3008
      %v3010 = vsel %vm1902, %v3007, 0
      %v3012 = vsel %vm1902, %v3009, 0
      %v3014 = vsel %vm1902, %v3008, 0
      %3016 = vmatpush.msra.mxu0 0.0
      %3017 = vmatpush.msra.mxu0 0.0
      %3018 = vmatpush.msra.mxu0 0.0
      %3019 = vmatpush.msra.mxu0 0.0
      %3020 = vmatpush.msra.mxu0 0.0
      %3021 = vmatpush.msra.mxu0 0.0
      %3022 = vmatpush.msra.mxu0 0.0
      %3023 = vmatpush.msra.mxu0 0.0
      %3024 = vmatpush.msra.mxu0 0.0
      %3025 = vmatpush.msra.mxu0 0.0
      %3026 = vmatpush.msra.mxu0 0.0
      %3027 = vmatpush.msra.mxu0 0.0
      %3028 = vmatpush.msra.mxu0 0.0
      %3029 = vmatpush.msra.mxu0 0.0
      %3030 = vmatpush.msra.mxu0 0.0
      %3031 = vmatpush.msra.mxu0 %v3005
      %3032 = vmatmul.f32.gmra.mxu0 %v2234
      %v3033 = vpop.f32.mrf.mxu0
      %v3034 = vadd.f32 0.0, %v3033
      %3035 = vmatmul.f32.gmra.mxu0 %v2236
      %v3036 = vpop.f32.mrf.mxu0
      %v3037 = vadd.f32 0.0, %v3036
      %3038 = vmatmul.f32.gmra.mxu0 %v2238
      %v3039 = vpop.f32.mrf.mxu0
      %v3040 = vadd.f32 0.0, %v3039
      %3041 = vmatmul.f32.gmra.mxu0 %v2240
      %v3042 = vpop.f32.mrf.mxu0
      %v3043 = vadd.f32 0.0, %v3042
      %3044 = vmatmul.f32.gmra.mxu0 %v2242
      %v3045 = vpop.f32.mrf.mxu0
      %v3046 = vadd.f32 0.0, %v3045
      %3047 = vmatmul.f32.gmra.mxu0 %v2244
      %v3048 = vpop.f32.mrf.mxu0
      %v3049 = vadd.f32 0.0, %v3048
      %3050 = vmatmul.f32.gmra.mxu0 %v2246
      %v3051 = vpop.f32.mrf.mxu0
      %v3052 = vadd.f32 0.0, %v3051
      %3053 = vmatmul.f32.gmra.mxu0 %v2248
      %v3054 = vpop.f32.mrf.mxu0
      %v3055 = vadd.f32 0.0, %v3054
      %3056 = vmatmul.f32.gmra.mxu0 %v2250
      %v3057 = vpop.f32.mrf.mxu0
      %v3058 = vadd.f32 0.0, %v3057
      %3059 = vmatmul.f32.gmra.mxu0 %v2252
      %v3060 = vpop.f32.mrf.mxu0
      %v3061 = vadd.f32 0.0, %v3060
      %3062 = vmatmul.f32.gmra.mxu0 %v2254
      %v3063 = vpop.f32.mrf.mxu0
      %v3064 = vadd.f32 0.0, %v3063
      %3065 = vmatmul.f32.gmra.mxu0 %v2256
      %v3066 = vpop.f32.mrf.mxu0
      %v3067 = vadd.f32 0.0, %v3066
      %3068 = vmatmul.f32.gmra.mxu0 %v2258
      %v3069 = vpop.f32.mrf.mxu0
      %v3070 = vadd.f32 0.0, %v3069
      %3071 = vmatmul.f32.gmra.mxu0 %v2260
      %v3072 = vpop.f32.mrf.mxu0
      %v3073 = vadd.f32 0.0, %v3072
      %3074 = vmatmul.f32.gmra.mxu0 %v2262
      %v3075 = vpop.f32.mrf.mxu0
      %v3076 = vadd.f32 0.0, %v3075
      %3077 = vmatmul.f32.gmra.mxu0 %v2264
      %v3078 = vpop.f32.mrf.mxu0
      %v3079 = vadd.f32 0.0, %v3078
      %3080 = vmatmul.f32.gmra.mxu0 %v2266
      %v3081 = vpop.f32.mrf.mxu0
      %v3082 = vadd.f32 0.0, %v3081
      %3083 = vmatmul.f32.gmra.mxu0 %v2268
      %v3084 = vpop.f32.mrf.mxu0
      %v3085 = vadd.f32 0.0, %v3084
      %3086 = vmatmul.f32.gmra.mxu0 %v2270
      %v3087 = vpop.f32.mrf.mxu0
      %v3088 = vadd.f32 0.0, %v3087
      %3089 = vmatmul.f32.gmra.mxu0 %v2639
      %v3090 = vpop.f32.mrf.mxu0
      %v3091 = vadd.f32 0.0, %v3090
      %3092 = vmatmul.f32.gmra.mxu0 %v2641
      %v3093 = vpop.f32.mrf.mxu0
      %v3094 = vadd.f32 0.0, %v3093
      %3095 = vmatmul.f32.gmra.mxu0 %v3010
      %v3096 = vpop.f32.mrf.mxu0
      %v3097 = vadd.f32 0.0, %v3096
      %3098 = vmatmul.f32.gmra.mxu0 %v3012
      %v3099 = vpop.f32.mrf.mxu0
      %v3100 = vadd.f32 0.0, %v3099
      %3101 = vmatmul.f32.gmra.mxu0 %v3014
      %v3102 = vpop.f32.mrf.mxu0
      %v3103 = vadd.f32 0.0, %v3102
      %3104 = vdwg.mxu0
      %v3105 = vadd.f32 %v2980, %v3034
      %v3106 = vadd.f32 %v2981, %v3037
      %v3107 = vadd.f32 %v2982, %v3040
      %v3108 = vadd.f32 %v2983, %v3043
      %v3109 = vadd.f32 %v2984, %v3046
      %v3110 = vadd.f32 %v2985, %v3049
      %v3111 = vadd.f32 %v2986, %v3052
      %v3112 = vadd.f32 %v2987, %v3055
      %v3113 = vadd.f32 %v2988, %v3058
      %v3114 = vadd.f32 %v2989, %v3061
      %v3115 = vadd.f32 %v2990, %v3064
      %v3116 = vadd.f32 %v2991, %v3067
      %v3117 = vadd.f32 %v2992, %v3070
      %v3118 = vadd.f32 %v2993, %v3073
      %v3119 = vadd.f32 %v2994, %v3076
      %v3120 = vadd.f32 %v2995, %v3079
      %v3121 = vadd.f32 %v2996, %v3082
      %v3122 = vadd.f32 %v2997, %v3085
      %v3123 = vadd.f32 %v2998, %v3088
      %v3124 = vadd.f32 %v2999, %v3091
      %v3125 = vadd.f32 %v3000, %v3094
      %v3126 = vadd.f32 %v3001, %v3097
      %v3127 = vadd.f32 %v3002, %v3100
      %v3128 = vadd.f32 %v3003, %v3103
      %v3129 = vld [vmem:[%s4] sm:$0x1]
      %v3131 = vperm.slane %v3129, 0
      %v3133 = vadd.f32 %v3105, %v3131
      %v3134 = vadd.f32 %v3106, %v3131
      %v3135 = vadd.f32 %v3107, %v3131
      %v3136 = vadd.f32 %v3108, %v3131
      %v3137 = vadd.f32 %v3109, %v3131
      %v3138 = vadd.f32 %v3110, %v3131
      %v3139 = vadd.f32 %v3111, %v3131
      %v3140 = vadd.f32 %v3112, %v3131
      %v3141 = vadd.f32 %v3113, %v3131
      %v3142 = vadd.f32 %v3114, %v3131
      %v3143 = vadd.f32 %v3115, %v3131
      %v3144 = vadd.f32 %v3116, %v3131
      %v3145 = vadd.f32 %v3117, %v3131
      %v3146 = vadd.f32 %v3118, %v3131
      %v3147 = vadd.f32 %v3119, %v3131
      %v3148 = vadd.f32 %v3120, %v3131
      %v3149 = vadd.f32 %v3121, %v3131
      %v3150 = vadd.f32 %v3122, %v3131
      %v3151 = vadd.f32 %v3123, %v3131
      %v3152 = vadd.f32 %v3124, %v3131
      %v3153 = vadd.f32 %v3125, %v3131
      %v3154 = vadd.f32 %v3126, %v3131
      %v3155 = vadd.f32 %v3127, %v3131
      %v3156 = vadd.f32 %v3128, %v3131
      %v3157 = vmax.f32 %v3133, 0.0
      %v3158 = vmax.f32 %v3134, 0.0
      %v3159 = vmax.f32 %v3135, 0.0
      %v3160 = vmax.f32 %v3136, 0.0
      %v3161 = vmax.f32 %v3137, 0.0
      %v3162 = vmax.f32 %v3138, 0.0
      %v3163 = vmax.f32 %v3139, 0.0
      %v3164 = vmax.f32 %v3140, 0.0
      %v3165 = vmax.f32 %v3141, 0.0
      %v3166 = vmax.f32 %v3142, 0.0
      %v3167 = vmax.f32 %v3143, 0.0
      %v3168 = vmax.f32 %v3144, 0.0
      %v3169 = vmax.f32 %v3145, 0.0
      %v3170 = vmax.f32 %v3146, 0.0
      %v3171 = vmax.f32 %v3147, 0.0
      %v3172 = vmax.f32 %v3148, 0.0
      %v3173 = vmax.f32 %v3149, 0.0
      %v3174 = vmax.f32 %v3150, 0.0
      %v3175 = vmax.f32 %v3151, 0.0
      %v3176 = vmax.f32 %v3152, 0.0
      %v3177 = vmax.f32 %v3153, 0.0
      %v3178 = vmax.f32 %v3154, 0.0
      %v3179 = vmax.f32 %v3155, 0.0
      %v3180 = vmax.f32 %v3156, 0.0
      %3181 = vst [vmem:[%s224] sm:$0xff] %v3157
      %3182 = vst [vmem:[%s224 + $0x8] sm:$0xff] %v3158
      %3183 = vst [vmem:[%s224 + $0x10] sm:$0xff] %v3159
      %3184 = vst [vmem:[%s224 + $0x18] sm:$0xff] %v3160
      %3185 = vst [vmem:[%s224 + $0x20] sm:$0xff] %v3161
      %3186 = vst [vmem:[%s224 + $0x28] sm:$0xff] %v3162
      %3187 = vst [vmem:[%s224 + $0x30] sm:$0xff] %v3163
      %3188 = vst [vmem:[%s224 + $0x38] sm:$0xff] %v3164
      %3189 = vst [vmem:[%s224 + $0x40] sm:$0xff] %v3165
      %3190 = vst [vmem:[%s224 + $0x48] sm:$0xff] %v3166
      %3191 = vst [vmem:[%s224 + $0x50] sm:$0xff] %v3167
      %3192 = vst [vmem:[%s224 + $0x58] sm:$0xff] %v3168
      %3193 = vst [vmem:[%s224 + $0x60] sm:$0xff] %v3169
      %3194 = vst [vmem:[%s224 + $0x68] sm:$0xff] %v3170
      %3195 = vst [vmem:[%s224 + $0x70] sm:$0xff] %v3171
      %3196 = vst [vmem:[%s224 + $0x78] sm:$0xff] %v3172
      %3197 = vst [vmem:[%s224 + $0x80] sm:$0xff] %v3173
      %3198 = vst [vmem:[%s224 + $0x88] sm:$0xff] %v3174
      %3199 = vst [vmem:[%s224 + $0x90] sm:$0xff] %v3175
      %3200 = vst [vmem:[%s224 + $0x98] sm:$0xff] %v3176
      %3201 = vst [vmem:[%s224 + $0xa0] sm:$0xff] %v3177
      %3202 = vst [vmem:[%s224 + $0xa8] sm:$0xff] %v3178
      %3203 = vst [vmem:[%s224 + $0xb0] sm:$0xff] %v3179
      %3204 = vst [vmem:[%s224 + $0xb8] sm:$0xf] %v3180
      %p3205 = scmp.lt.s32.totalorder %s16, 1
      %s3206 = scalar_select %p3205, %s16, 1
      %s3207 = smul.addr %s3206, 24
      %s3208 = smul.addr %s3207, 8
      %s3209 = scalar_lea.vmem %s5, %s3208
      // Predicated region
      $region41: #{tpu_custom_call.1} parent=39 // pred_check
        %p3210 = pneg %p144
      $region42: #{tpu_custom_call.1} parent=39 // pred_check_branch
        %3212 = sbr.rel (%p3210) target = $region44
      $region43: #{tpu_custom_call.1} parent=39 // pred_region
        _
      $region44: #{tpu_custom_call.1} parent=39 // pred_fallthru
        _
    $region40: #{tpu_custom_call.1} parent=5 // pred_fallthru
      _
    %p3213 = scmp.le.s32.totalorder 2, %s11
    // Predicated region
    $region45: #{tpu_custom_call.1} parent=5 // pred_check
      %p3214 = pneg %p3213
    $region46: #{tpu_custom_call.1} parent=5 // pred_check_branch
      %3216 = sbr.rel (%p3214) target = $region48
    $region47: #{tpu_custom_call.1} parent=5 // pred_region
      %s3217 = ssub.s32 %s11, 2
      // Predicated region
      $region49: #{tpu_custom_call.1} parent=47 // pred_check
        %p3218 = pneg %p150
      $region50: #{tpu_custom_call.1} parent=47 // pred_check_branch
        %3220 = sbr.rel (%p3218) target = $region52
      $region51: #{tpu_custom_call.1} parent=47 // pred_region
        %p3221 = scmp.lt.s32.totalorder %s17, 1
        %s3222 = scalar_select %p3221, %s17, 1
        %s3223 = smul.addr %s3222, 24
        %s3224 = smul.addr %s3223, 8
        %s3225 = scalar_lea.vmem %s5, %s3224
      $region52: #{tpu_custom_call.1} parent=47 // pred_fallthru
        _
    $region48: #{tpu_custom_call.1} parent=5 // pred_fallthru
      _
  $region6: #{tpu_custom_call.1} parent=0 // loop_footer
    %s15 = sadd.s32 1, %s11
  $region7: #{tpu_custom_call.1} parent=0 // loop_footer_branch
    %10 = sbr.rel target = $region3
  $region8: #{tpu_custom_call.1} parent=0 // loop_exit
    _

</llo_original>
